<compile_context>
chip_gen: v6e
topology: v6e:2x2x1
jax: 0.10.0
libtpu: 0.0.40
codegen_flags: <defaults>
</compile_context>

<pallas_src>
import jax
import jax.numpy as jnp
from jax.experimental import pallas as pl
from jax.experimental.pallas import tpu as pltpu


def _round_up(x: int, m: int) -> int:
    return (x + m - 1) // m * m


# ---------------------------------------------------------------------------
# Kernel
# ---------------------------------------------------------------------------
def _make_kernel(D: int, E: int, r: int, TAIL: int):
    """Fused q/k/v dense + TMoE kernel for one (tile_m, D) token tile."""

    def kernel(x_ref, wbig_ref, bias_ref, ball_ref, o_ref):
        # bf16 MXU operands, f32 accumulation.
        x = x_ref[...].astype(jnp.bfloat16)                       # (tm, D)

        # One wide MXU pass: dense q/k/v + per-branch [h | logits | 0] groups.
        big = jnp.dot(x, wbig_ref[...],
                      preferred_element_type=jnp.float32)         # (tm, 3D+3*TAIL)

        for b in range(3):                                        # static unroll q,k,v
            # Lane-aligned per-branch tail group (offset is a multiple of 128).
            grp = big[:, 3 * D + b * TAIL: 3 * D + (b + 1) * TAIL]  # (tm, TAIL)

            # Routing softmax (exact max-subtract, approx reciprocal -> EUP).
            logits = grp[:, r:r + E]                              # (tm, E)
            logits = logits - jnp.max(logits, axis=-1, keepdims=True)
            ew = jnp.exp(logits)
            inv = pl.reciprocal(jnp.sum(ew, axis=-1, keepdims=True), approx=True)
            gate = ew * inv                                       # (tm, E)

            # h @ [B_0^T | ... | B_{E-1}^T] in one tiny matmul.  LHS is the
            # whole aligned group; ball rows >= r are zero so the logit / pad
            # columns contribute nothing.  `scaling` already folded into ball.
            hB = jnp.dot(grp.astype(jnp.bfloat16), ball_ref[b],
                         preferred_element_type=jnp.float32)      # (tm, E*D)

            # Gate-weighted combine on aligned full-width slices.
            corr = gate[:, 0:1] * hB[:, 0:D]
            for i in range(1, E):
                corr = corr + gate[:, i:i + 1] * hB[:, i * D:(i + 1) * D]

            dense = big[:, b * D:(b + 1) * D] + \
                bias_ref[:, b * D:(b + 1) * D].astype(jnp.float32)
            o_ref[:, b * D:(b + 1) * D] = (dense + corr).astype(o_ref.dtype)

    return kernel


# ---------------------------------------------------------------------------
# One-time parameter packing (hoisted out of the forward hot path)
# ---------------------------------------------------------------------------
def pack_params(params, *, scaling: float, weight_dtype=jnp.bfloat16):
    """Pre-transpose / concat / cast weights once. Returns kernel operands."""
    branches = ("q", "k", "v")
    D = params["q"]["w_lin"].shape[0]
    E, _, r = params["q"]["b_experts"].shape
    TAIL = max(128, _round_up(r + E, 128))        # lane-aligned per-branch group

    # W_big^T = [Wq^T | Wk^T | Wv^T | Gq | Gk | Gv],  G_b = [A_b^T | R_b^T | 0]
    cols = [jnp.transpose(params[b]["w_lin"]) for b in branches]   # (D, D) each
    for b in branches:
        a_t = jnp.transpose(params[b]["a_comp"])                   # (D, r)
        r_t = jnp.transpose(params[b]["w_route"])                  # (D, E)
        pad = jnp.zeros((D, TAIL - r - E), a_t.dtype)
        cols.append(jnp.concatenate([a_t, r_t, pad], axis=1))      # (D, TAIL)
    w_big = jnp.concatenate(cols, axis=1).astype(weight_dtype)     # (D, 3D+3*TAIL)

    bias = jnp.concatenate(
        [params[b]["b_lin"] for b in branches]).reshape(1, 3 * D).astype(weight_dtype)

    # Per-branch expert stack: (TAIL, E*D); rows [0, r) hold
    # scaling * [B_0^T | ... | B_{E-1}^T], rows >= r are zero.
    balls = []
    for b in branches:
        bcat = jnp.concatenate(
            [scaling * jnp.transpose(params[b]["b_experts"][i])    # (r, D)
             for i in range(E)], axis=1)                           # (r, E*D)
        balls.append(jnp.zeros((TAIL, E * D), bcat.dtype).at[:r].set(bcat))
    ball = jnp.stack(balls, axis=0).astype(weight_dtype)           # (3, TAIL, E*D)

    return {"w_big": w_big, "bias": bias, "ball": ball, "dims": (D, E, r, TAIL)}


def _const_spec(shape, index_map):
    """Grid-invariant operand: single-buffered to halve resident VMEM."""
    try:
        return pl.BlockSpec(shape, index_map, pipeline_mode=pl.Buffered(1))
    except (TypeError, AttributeError):   # older jax without pipeline_mode
        return pl.BlockSpec(shape, index_map)


# ---------------------------------------------------------------------------
# Forward wrapper
# ---------------------------------------------------------------------------
def tmoe_qkv_forward(x, packed, *, tile_m: int = 512):
    """x: (B, N, D) -> (B, N, 3*D), branches concatenated as (q, k, v)."""
    B, N, D_in = x.shape
    D, E, r, TAIL = packed["dims"]
    assert D_in == D
    Wfull = packed["w_big"].shape[1]              # 3*D + 3*TAIL

    M = B * N
    x2 = x.reshape(M, D)

    # Ensure >= 2 grid steps when possible so both v7x TensorCores get work.
    tm = tile_m
    if pl.cdiv(M, tm) < 2 and M > 8:
        tm = max(8, _round_up(pl.cdiv(M, 2), 8))
    n_tiles = pl.cdiv(M, tm)                      # partial last block masked by Pallas

    kernel = _make_kernel(D, E, r, TAIL)

    # Working-set estimate -> explicit scoped-VMEM limit (with headroom).
    itemsize = jnp.dtype(x.dtype).itemsize
    w_bytes = (packed["w_big"].nbytes + packed["ball"].nbytes + packed["bias"].nbytes)
    io_bytes = 2 * tm * D * itemsize + 2 * tm * 3 * D * itemsize
    tmp_bytes = tm * (Wfull + E * D + 2 * D) * 4
    vmem_limit = int(min(max(2 * (w_bytes + io_bytes + tmp_bytes), 24 << 20), 44 << 20))

    cost = pl.CostEstimate(
        flops=2 * M * D * Wfull + 3 * 2 * M * TAIL * (E * D),
        transcendentals=3 * M * E,
        bytes_accessed=x2.nbytes + M * 3 * D * itemsize + w_bytes,
    )

    out = pl.pallas_call(
        kernel,
        out_shape=jax.ShapeDtypeStruct((M, 3 * D), x.dtype),
        grid_spec=pltpu.PrefetchScalarGridSpec(
            num_scalar_prefetch=0,
            grid=(n_tiles,),
            in_specs=[
                pl.BlockSpec((tm, D), lambda i: (i, 0)),            # x tile (streamed)
                _const_spec((D, Wfull), lambda i: (0, 0)),          # packed weights
                _const_spec((1, 3 * D), lambda i: (0, 0)),          # concat bias
                _const_spec((3, TAIL, E * D), lambda i: (0, 0, 0)),  # expert stacks
            ],
            out_specs=pl.BlockSpec((tm, 3 * D), lambda i: (i, 0)),  # lane-dense (M,3D)
        ),
        compiler_params=pltpu.CompilerParams(
            dimension_semantics=("parallel",),
            vmem_limit_bytes=vmem_limit),
        cost_estimate=cost,
    )(x2, packed["w_big"], packed["bias"], packed["ball"])

    return out.reshape(B, N, 3 * D)


# ---------------------------------------------------------------------------
# Plain-JAX reference (mirrors the PyTorch forward) + synthetic init
# ---------------------------------------------------------------------------
def _reference_forward(x, params, *, scaling):
    B, N, D = x.shape
    x2 = x.reshape(B * N, D)
    outs = []
    for branch in ("q", "k", "v"):
        p = params[branch]
        y = x2 @ p["w_lin"].T + p["b_lin"][None, :]
        route_w = jax.nn.softmax(x2 @ p["w_route"].T, axis=-1)
        h = x2 @ p["a_comp"].T
        E = p["b_experts"].shape[0]
        for i in range(E):
            y = y + scaling * route_w[:, i:i + 1] * (h @ p["b_experts"][i].T)
        outs.append(y)
    return jnp.concatenate(outs, axis=-1).reshape(B, N, 3 * D)


def _init_params(key, dim, r, expert_nums, dtype=jnp.float32):
    """Deterministic synthetic init (trunc_normal ~ normal std=0.02 here)."""
    params = {}
    for branch in ("q", "k", "v"):
        key, k1, k2, k3, k4, k5 = jax.random.split(key, 6)
        params[branch] = {
            "w_lin": jax.random.normal(k1, (dim, dim), dtype) * 0.02,       # (out,in)
            "b_lin": jax.random.normal(k2, (dim,), dtype) * 0.02,
            "w_route": jax.random.normal(k3, (expert_nums, dim), dtype) * 0.02,  # (E,in)
            "a_comp": jax.random.normal(k4, (r, dim), dtype) * 0.02,        # (r,in)
            "b_experts": jax.random.normal(k5, (expert_nums, dim, r), dtype) * 0.02,
        }
    return params


if __name__ == "__main__":
    # Small shapes consistent with the module; N chosen so the last token tile
    # is partial (exercises Pallas partial-block masking) and the grid has 2
    # steps (both v7x TensorCores busy).
    B, N, D = 2, 197, 128
    r, alpha, expert_nums = 4, 8.0, 4
    scaling = alpha / r          # rs_expert=False default

    key = jax.random.PRNGKey(0)
    key, kx = jax.random.split(key)
    x = jax.random.normal(kx, (B, N, D), jnp.float32)
    params = _init_params(key, D, r, expert_nums)

    packed = pack_params(params, scaling=scaling)   # one-time bf16 weight repack
    out = tmoe_qkv_forward(x, packed, tile_m=512)
    out = jax.block_until_ready(out)

    ref = _reference_forward(x, params, scaling=scaling)
    assert out.shape == (B, N, 3 * D)
    # bf16 weights/operands + approx reciprocal in the routing softmax
    # -> relaxed tolerance vs the f32 reference.
    err = float(jnp.max(jnp.abs(out - ref)))
    assert jnp.allclose(out, ref, atol=2e-2, rtol=2e-2), err

    print("KERNEL_OK")
</pallas_src>

<mosaic_0001>
module attributes {stable_mosaic.version = 11 : i64} {
  func.func @kernel(%arg0: i32, %arg1: memref<200x128xf32, #tpu.memory_space<vmem>>, %arg2: memref<128x768xbf16, #tpu.memory_space<vmem>>, %arg3: memref<1x384xbf16, #tpu.memory_space<vmem>>, %arg4: memref<3x128x512xbf16, #tpu.memory_space<vmem>>, %arg5: memref<200x384xf32, #tpu.memory_space<vmem>>) attributes {dimension_semantics = [#tpu.dimension_semantics<parallel>], iteration_bounds = array<i64: 2>, scalar_prefetch = 0 : i64, scratch_operands = 0 : i64, tpu.core_type = #tpu.core_type<tc>, window_params = [{transform_indices = @transform_0, window_bounds = array<i64: 200, 128>}, {pipeline_mode = #tpu.pipeline_mode<synchronous>, transform_indices = @transform_1, window_bounds = array<i64: 128, 768>}, {pipeline_mode = #tpu.pipeline_mode<synchronous>, transform_indices = @transform_2, window_bounds = array<i64: 1, 384>}, {pipeline_mode = #tpu.pipeline_mode<synchronous>, transform_indices = @transform_3, window_bounds = array<i64: 3, 128, 512>}, {transform_indices = @transform_4, window_bounds = array<i64: 200, 384>}]} {
    %c0 = arith.constant 0 : index
    %c0_0 = arith.constant 0 : index
    %0 = vector.load %arg1[%c0, %c0_0] : memref<200x128xf32, #tpu.memory_space<vmem>>, vector<200x128xf32>
    %1 = arith.truncf %0 : vector<200x128xf32> to vector<200x128xbf16>
    %c0_1 = arith.constant 0 : index
    %c0_2 = arith.constant 0 : index
    %2 = vector.load %arg2[%c0_1, %c0_2] : memref<128x768xbf16, #tpu.memory_space<vmem>>, vector<128x768xbf16>
    %cst = arith.constant dense<0.000000e+00> : vector<200x768xf32>
    %3 = tpu.matmul %1, %2, %cst {dimension_numbers = #tpu.dot_dimension_numbers<[1], [0], [0], [1], [0, 0, 1, 1], [], []>} : vector<200x128xbf16>, vector<128x768xbf16>, vector<200x768xf32> -> vector<200x768xf32>
    %4 = vector.extract_strided_slice %3 {offsets = [0, 384], sizes = [200, 128], strides = [1, 1]} : vector<200x768xf32> to vector<200x128xf32>
    %5 = vector.extract_strided_slice %4 {offsets = [0, 4], sizes = [200, 4], strides = [1, 1]} : vector<200x128xf32> to vector<200x4xf32>
    %cst_3 = arith.constant dense<0xFF800000> : vector<200xf32>
    %6 = vector.multi_reduction <maximumf>, %5, %cst_3 [1] : vector<200x4xf32> to vector<200xf32>
    %7 = vector.shape_cast %6 : vector<200xf32> to vector<200x1xf32>
    %8 = vector.broadcast %7 : vector<200x1xf32> to vector<200x4xf32>
    %9 = arith.subf %5, %8 : vector<200x4xf32>
    %10 = math.exp %9 : vector<200x4xf32>
    %cst_4 = arith.constant dense<0.000000e+00> : vector<200xf32>
    %11 = vector.multi_reduction <add>, %10, %cst_4 [1] : vector<200x4xf32> to vector<200xf32>
    %12 = vector.shape_cast %11 : vector<200xf32> to vector<200x1xf32>
    %13 = tpu.reciprocal %12 {approx = true} : vector<200x1xf32> -> vector<200x1xf32>
    %14 = vector.broadcast %13 : vector<200x1xf32> to vector<200x4xf32>
    %15 = arith.mulf %10, %14 : vector<200x4xf32>
    %16 = arith.truncf %4 : vector<200x128xf32> to vector<200x128xbf16>
    %c0_5 = arith.constant 0 : index
    %c0_6 = arith.constant 0 : index
    %c0_7 = arith.constant 0 : index
    %17 = vector.load %arg4[%c0_5, %c0_6, %c0_7] : memref<3x128x512xbf16, #tpu.memory_space<vmem>>, vector<1x128x512xbf16>
    %18 = vector.shape_cast %17 : vector<1x128x512xbf16> to vector<128x512xbf16>
    %cst_8 = arith.constant dense<0.000000e+00> : vector<200x512xf32>
    %19 = tpu.matmul %16, %18, %cst_8 {dimension_numbers = #tpu.dot_dimension_numbers<[1], [0], [0], [1], [0, 0, 1, 1], [], []>} : vector<200x128xbf16>, vector<128x512xbf16>, vector<200x512xf32> -> vector<200x512xf32>
    %20 = vector.extract_strided_slice %15 {offsets = [0, 0], sizes = [200, 1], strides = [1, 1]} : vector<200x4xf32> to vector<200x1xf32>
    %21 = vector.extract_strided_slice %19 {offsets = [0, 0], sizes = [200, 128], strides = [1, 1]} : vector<200x512xf32> to vector<200x128xf32>
    %22 = vector.broadcast %20 : vector<200x1xf32> to vector<200x128xf32>
    %23 = arith.mulf %22, %21 : vector<200x128xf32>
    %24 = vector.extract_strided_slice %15 {offsets = [0, 1], sizes = [200, 1], strides = [1, 1]} : vector<200x4xf32> to vector<200x1xf32>
    %25 = vector.extract_strided_slice %19 {offsets = [0, 128], sizes = [200, 128], strides = [1, 1]} : vector<200x512xf32> to vector<200x128xf32>
    %26 = vector.broadcast %24 : vector<200x1xf32> to vector<200x128xf32>
    %27 = arith.mulf %26, %25 : vector<200x128xf32>
    %28 = arith.addf %23, %27 : vector<200x128xf32>
    %29 = vector.extract_strided_slice %15 {offsets = [0, 2], sizes = [200, 1], strides = [1, 1]} : vector<200x4xf32> to vector<200x1xf32>
    %30 = vector.extract_strided_slice %19 {offsets = [0, 256], sizes = [200, 128], strides = [1, 1]} : vector<200x512xf32> to vector<200x128xf32>
    %31 = vector.broadcast %29 : vector<200x1xf32> to vector<200x128xf32>
    %32 = arith.mulf %31, %30 : vector<200x128xf32>
    %33 = arith.addf %28, %32 : vector<200x128xf32>
    %34 = vector.extract_strided_slice %15 {offsets = [0, 3], sizes = [200, 1], strides = [1, 1]} : vector<200x4xf32> to vector<200x1xf32>
    %35 = vector.extract_strided_slice %19 {offsets = [0, 384], sizes = [200, 128], strides = [1, 1]} : vector<200x512xf32> to vector<200x128xf32>
    %36 = vector.broadcast %34 : vector<200x1xf32> to vector<200x128xf32>
    %37 = arith.mulf %36, %35 : vector<200x128xf32>
    %38 = arith.addf %33, %37 : vector<200x128xf32>
    %39 = vector.extract_strided_slice %3 {offsets = [0, 0], sizes = [200, 128], strides = [1, 1]} : vector<200x768xf32> to vector<200x128xf32>
    %c0_9 = arith.constant 0 : index
    %c0_10 = arith.constant 0 : index
    %40 = vector.load %arg3[%c0_9, %c0_10] : memref<1x384xbf16, #tpu.memory_space<vmem>>, vector<1x128xbf16>
    %41 = arith.extf %40 : vector<1x128xbf16> to vector<1x128xf32>
    %42 = vector.broadcast %41 : vector<1x128xf32> to vector<200x128xf32>
    %43 = arith.addf %39, %42 : vector<200x128xf32>
    %44 = arith.addf %43, %38 : vector<200x128xf32>
    %c0_11 = arith.constant 0 : index
    %c0_12 = arith.constant 0 : index
    %45 = vector.load %arg5[%c0_11, %c0_12] : memref<200x384xf32, #tpu.memory_space<vmem>>, vector<200x128xf32>
    tpu.vector_store %arg5[%c0_11, %c0_12], %44 {strides = array<i32>} : memref<200x384xf32, #tpu.memory_space<vmem>>, vector<200x128xf32>,
    %46 = vector.extract_strided_slice %3 {offsets = [0, 512], sizes = [200, 128], strides = [1, 1]} : vector<200x768xf32> to vector<200x128xf32>
    %47 = vector.extract_strided_slice %46 {offsets = [0, 4], sizes = [200, 4], strides = [1, 1]} : vector<200x128xf32> to vector<200x4xf32>
    %cst_13 = arith.constant dense<0xFF800000> : vector<200xf32>
    %48 = vector.multi_reduction <maximumf>, %47, %cst_13 [1] : vector<200x4xf32> to vector<200xf32>
    %49 = vector.shape_cast %48 : vector<200xf32> to vector<200x1xf32>
    %50 = vector.broadcast %49 : vector<200x1xf32> to vector<200x4xf32>
    %51 = arith.subf %47, %50 : vector<200x4xf32>
    %52 = math.exp %51 : vector<200x4xf32>
    %cst_14 = arith.constant dense<0.000000e+00> : vector<200xf32>
    %53 = vector.multi_reduction <add>, %52, %cst_14 [1] : vector<200x4xf32> to vector<200xf32>
    %54 = vector.shape_cast %53 : vector<200xf32> to vector<200x1xf32>
    %55 = tpu.reciprocal %54 {approx = true} : vector<200x1xf32> -> vector<200x1xf32>
    %56 = vector.broadcast %55 : vector<200x1xf32> to vector<200x4xf32>
    %57 = arith.mulf %52, %56 : vector<200x4xf32>
    %58 = arith.truncf %46 : vector<200x128xf32> to vector<200x128xbf16>
    %c1 = arith.constant 1 : index
    %c0_15 = arith.constant 0 : index
    %c0_16 = arith.constant 0 : index
    %59 = vector.load %arg4[%c1, %c0_15, %c0_16] : memref<3x128x512xbf16, #tpu.memory_space<vmem>>, vector<1x128x512xbf16>
    %60 = vector.shape_cast %59 : vector<1x128x512xbf16> to vector<128x512xbf16>
    %cst_17 = arith.constant dense<0.000000e+00> : vector<200x512xf32>
    %61 = tpu.matmul %58, %60, %cst_17 {dimension_numbers = #tpu.dot_dimension_numbers<[1], [0], [0], [1], [0, 0, 1, 1], [], []>} : vector<200x128xbf16>, vector<128x512xbf16>, vector<200x512xf32> -> vector<200x512xf32>
    %62 = vector.extract_strided_slice %57 {offsets = [0, 0], sizes = [200, 1], strides = [1, 1]} : vector<200x4xf32> to vector<200x1xf32>
    %63 = vector.extract_strided_slice %61 {offsets = [0, 0], sizes = [200, 128], strides = [1, 1]} : vector<200x512xf32> to vector<200x128xf32>
    %64 = vector.broadcast %62 : vector<200x1xf32> to vector<200x128xf32>
    %65 = arith.mulf %64, %63 : vector<200x128xf32>
    %66 = vector.extract_strided_slice %57 {offsets = [0, 1], sizes = [200, 1], strides = [1, 1]} : vector<200x4xf32> to vector<200x1xf32>
    %67 = vector.extract_strided_slice %61 {offsets = [0, 128], sizes = [200, 128], strides = [1, 1]} : vector<200x512xf32> to vector<200x128xf32>
    %68 = vector.broadcast %66 : vector<200x1xf32> to vector<200x128xf32>
    %69 = arith.mulf %68, %67 : vector<200x128xf32>
    %70 = arith.addf %65, %69 : vector<200x128xf32>
    %71 = vector.extract_strided_slice %57 {offsets = [0, 2], sizes = [200, 1], strides = [1, 1]} : vector<200x4xf32> to vector<200x1xf32>
    %72 = vector.extract_strided_slice %61 {offsets = [0, 256], sizes = [200, 128], strides = [1, 1]} : vector<200x512xf32> to vector<200x128xf32>
    %73 = vector.broadcast %71 : vector<200x1xf32> to vector<200x128xf32>
    %74 = arith.mulf %73, %72 : vector<200x128xf32>
    %75 = arith.addf %70, %74 : vector<200x128xf32>
    %76 = vector.extract_strided_slice %57 {offsets = [0, 3], sizes = [200, 1], strides = [1, 1]} : vector<200x4xf32> to vector<200x1xf32>
    %77 = vector.extract_strided_slice %61 {offsets = [0, 384], sizes = [200, 128], strides = [1, 1]} : vector<200x512xf32> to vector<200x128xf32>
    %78 = vector.broadcast %76 : vector<200x1xf32> to vector<200x128xf32>
    %79 = arith.mulf %78, %77 : vector<200x128xf32>
    %80 = arith.addf %75, %79 : vector<200x128xf32>
    %81 = vector.extract_strided_slice %3 {offsets = [0, 128], sizes = [200, 128], strides = [1, 1]} : vector<200x768xf32> to vector<200x128xf32>
    %c0_18 = arith.constant 0 : index
    %c128 = arith.constant 128 : index
    %82 = vector.load %arg3[%c0_18, %c128] : memref<1x384xbf16, #tpu.memory_space<vmem>>, vector<1x128xbf16>
    %83 = arith.extf %82 : vector<1x128xbf16> to vector<1x128xf32>
    %84 = vector.broadcast %83 : vector<1x128xf32> to vector<200x128xf32>
    %85 = arith.addf %81, %84 : vector<200x128xf32>
    %86 = arith.addf %85, %80 : vector<200x128xf32>
    %c0_19 = arith.constant 0 : index
    %c128_20 = arith.constant 128 : index
    %87 = vector.load %arg5[%c0_19, %c128_20] : memref<200x384xf32, #tpu.memory_space<vmem>>, vector<200x128xf32>
    tpu.vector_store %arg5[%c0_19, %c128_20], %86 {strides = array<i32>} : memref<200x384xf32, #tpu.memory_space<vmem>>, vector<200x128xf32>,
    %88 = vector.extract_strided_slice %3 {offsets = [0, 640], sizes = [200, 128], strides = [1, 1]} : vector<200x768xf32> to vector<200x128xf32>
    %89 = vector.extract_strided_slice %88 {offsets = [0, 4], sizes = [200, 4], strides = [1, 1]} : vector<200x128xf32> to vector<200x4xf32>
    %cst_21 = arith.constant dense<0xFF800000> : vector<200xf32>
    %90 = vector.multi_reduction <maximumf>, %89, %cst_21 [1] : vector<200x4xf32> to vector<200xf32>
    %91 = vector.shape_cast %90 : vector<200xf32> to vector<200x1xf32>
    %92 = vector.broadcast %91 : vector<200x1xf32> to vector<200x4xf32>
    %93 = arith.subf %89, %92 : vector<200x4xf32>
    %94 = math.exp %93 : vector<200x4xf32>
    %cst_22 = arith.constant dense<0.000000e+00> : vector<200xf32>
    %95 = vector.multi_reduction <add>, %94, %cst_22 [1] : vector<200x4xf32> to vector<200xf32>
    %96 = vector.shape_cast %95 : vector<200xf32> to vector<200x1xf32>
    %97 = tpu.reciprocal %96 {approx = true} : vector<200x1xf32> -> vector<200x1xf32>
    %98 = vector.broadcast %97 : vector<200x1xf32> to vector<200x4xf32>
    %99 = arith.mulf %94, %98 : vector<200x4xf32>
    %100 = arith.truncf %88 : vector<200x128xf32> to vector<200x128xbf16>
    %c2 = arith.constant 2 : index
    %c0_23 = arith.constant 0 : index
    %c0_24 = arith.constant 0 : index
    %101 = vector.load %arg4[%c2, %c0_23, %c0_24] : memref<3x128x512xbf16, #tpu.memory_space<vmem>>, vector<1x128x512xbf16>
    %102 = vector.shape_cast %101 : vector<1x128x512xbf16> to vector<128x512xbf16>
    %cst_25 = arith.constant dense<0.000000e+00> : vector<200x512xf32>
    %103 = tpu.matmul %100, %102, %cst_25 {dimension_numbers = #tpu.dot_dimension_numbers<[1], [0], [0], [1], [0, 0, 1, 1], [], []>} : vector<200x128xbf16>, vector<128x512xbf16>, vector<200x512xf32> -> vector<200x512xf32>
    %104 = vector.extract_strided_slice %99 {offsets = [0, 0], sizes = [200, 1], strides = [1, 1]} : vector<200x4xf32> to vector<200x1xf32>
    %105 = vector.extract_strided_slice %103 {offsets = [0, 0], sizes = [200, 128], strides = [1, 1]} : vector<200x512xf32> to vector<200x128xf32>
    %106 = vector.broadcast %104 : vector<200x1xf32> to vector<200x128xf32>
    %107 = arith.mulf %106, %105 : vector<200x128xf32>
    %108 = vector.extract_strided_slice %99 {offsets = [0, 1], sizes = [200, 1], strides = [1, 1]} : vector<200x4xf32> to vector<200x1xf32>
    %109 = vector.extract_strided_slice %103 {offsets = [0, 128], sizes = [200, 128], strides = [1, 1]} : vector<200x512xf32> to vector<200x128xf32>
    %110 = vector.broadcast %108 : vector<200x1xf32> to vector<200x128xf32>
    %111 = arith.mulf %110, %109 : vector<200x128xf32>
    %112 = arith.addf %107, %111 : vector<200x128xf32>
    %113 = vector.extract_strided_slice %99 {offsets = [0, 2], sizes = [200, 1], strides = [1, 1]} : vector<200x4xf32> to vector<200x1xf32>
    %114 = vector.extract_strided_slice %103 {offsets = [0, 256], sizes = [200, 128], strides = [1, 1]} : vector<200x512xf32> to vector<200x128xf32>
    %115 = vector.broadcast %113 : vector<200x1xf32> to vector<200x128xf32>
    %116 = arith.mulf %115, %114 : vector<200x128xf32>
    %117 = arith.addf %112, %116 : vector<200x128xf32>
    %118 = vector.extract_strided_slice %99 {offsets = [0, 3], sizes = [200, 1], strides = [1, 1]} : vector<200x4xf32> to vector<200x1xf32>
    %119 = vector.extract_strided_slice %103 {offsets = [0, 384], sizes = [200, 128], strides = [1, 1]} : vector<200x512xf32> to vector<200x128xf32>
    %120 = vector.broadcast %118 : vector<200x1xf32> to vector<200x128xf32>
    %121 = arith.mulf %120, %119 : vector<200x128xf32>
    %122 = arith.addf %117, %121 : vector<200x128xf32>
    %123 = vector.extract_strided_slice %3 {offsets = [0, 256], sizes = [200, 128], strides = [1, 1]} : vector<200x768xf32> to vector<200x128xf32>
    %c0_26 = arith.constant 0 : index
    %c256 = arith.constant 256 : index
    %124 = vector.load %arg3[%c0_26, %c256] : memref<1x384xbf16, #tpu.memory_space<vmem>>, vector<1x128xbf16>
    %125 = arith.extf %124 : vector<1x128xbf16> to vector<1x128xf32>
    %126 = vector.broadcast %125 : vector<1x128xf32> to vector<200x128xf32>
    %127 = arith.addf %123, %126 : vector<200x128xf32>
    %128 = arith.addf %127, %122 : vector<200x128xf32>
    %c0_27 = arith.constant 0 : index
    %c256_28 = arith.constant 256 : index
    %129 = vector.load %arg5[%c0_27, %c256_28] : memref<200x384xf32, #tpu.memory_space<vmem>>, vector<200x128xf32>
    tpu.vector_store %arg5[%c0_27, %c256_28], %128 {strides = array<i32>} : memref<200x384xf32, #tpu.memory_space<vmem>>, vector<200x128xf32>,
    return
  }
  func.func @transform_0(%arg0: i32) -> (i32, i32) {
    %c0_i32 = arith.constant 0 : i32
    %c0_i32_0 = arith.constant 0 : i32
    return %arg0, %c0_i32 : i32, i32
  }
  func.func @transform_1(%arg0: i32) -> (i32, i32) {
    %c0_i32 = arith.constant 0 : i32
    %c0_i32_0 = arith.constant 0 : i32
    %c0_i32_1 = arith.constant 0 : i32
    return %c0_i32, %c0_i32_0 : i32, i32
  }
  func.func @transform_2(%arg0: i32) -> (i32, i32) {
    %c0_i32 = arith.constant 0 : i32
    %c0_i32_0 = arith.constant 0 : i32
    %c0_i32_1 = arith.constant 0 : i32
    return %c0_i32, %c0_i32_0 : i32, i32
  }
  func.func @transform_3(%arg0: i32) -> (i32, i32, i32) {
    %c0_i32 = arith.constant 0 : i32
    %c0_i32_0 = arith.constant 0 : i32
    %c0_i32_1 = arith.constant 0 : i32
    %c0_i32_2 = arith.constant 0 : i32
    return %c0_i32, %c0_i32_0, %c0_i32_1 : i32, i32, i32
  }
  func.func @transform_4(%arg0: i32) -> (i32, i32) {
    %c0_i32 = arith.constant 0 : i32
    %c0_i32_0 = arith.constant 0 : i32
    return %arg0, %c0_i32 : i32, i32
  }
}

</mosaic_0001>

<llo_original>
// kernel: tpu_custom_call.1
$region0: #{tpu_custom_call.1}
  #allocation0 [shape = 'u32[]', space=smem, size = 0x4, offset = 0x4, fixed_abs, tag = 'smem constant byte address 0x4 - core index']
  #allocation1 [shape = 'u32[144,128]{1,0:T(1,128)}', space=vmem, size = 0x12000, scoped, tag = 'internal scratch']
  %s0 = inlined_call_operand.hbm [shape: f32[394,128], index: 0, kind: input, shape index: {}]
  %s1 = inlined_call_operand.hbm [shape: bf16[128,768], index: 1, kind: input, shape index: {}]
  %s2 = inlined_call_operand.vmem [shape: bf16[1,384], index: 2, kind: input, shape index: {}]
  %s3 = inlined_call_operand.hbm [shape: bf16[3,128,512], index: 3, kind: input, shape index: {}]
  %s4 = inlined_call_operand.hbm [shape: f32[394,384], index: 4, kind: output, shape index: {}]
  %s5 = sld [smem:[#allocation0]]
  $region61: #{tpu_custom_call.1} parent=0
    _
  %s7 = ssub.s32 1, %s5
  %s8 = scalar_select 0, %s7, %s5
  $region1: #{tpu_custom_call.1} parent=0
    #allocation2 [shape = 'u8[204800]{0}', space=vmem, size = 0x32000, scoped, tag = 'input window, operand 0']
    #allocation3 [shape = 's32[2]{0}', space=sflag, size = 0x8, scoped, tag = 'scoped memory for tpu_custom_call.1']
    #allocation4 [shape = 's32[2]{0}', space=sflag, size = 0x8, scoped, tag = 'scoped memory for tpu_custom_call.1']
    #allocation5 [shape = 'u8[196608]{0}', space=vmem, size = 0x30000, scoped, tag = 'input window, operand 1, single buffered']
    #allocation6 [shape = 's32[1]{0}', space=sflag, size = 0x4, scoped, tag = 'scoped memory for tpu_custom_call.1']
    #allocation7 [shape = 'u8[393216]{0}', space=vmem, size = 0x60000, scoped, tag = 'input window, operand 3, single buffered']
    #allocation8 [shape = 'u8[614400]{0}', space=vmem, size = 0x96000, scoped, tag = 'output window, operand 0']
    %9 = vsyncpa [#allocation3], 0
    %s10 = scalar_lea.sflag [#allocation3], 1
    %11 = vsyncpa %s10, 0
    %12 = vsyncpa [#allocation6], 0
    %13 = vsyncpa [#allocation4], 0
    %s14 = scalar_lea.sflag [#allocation4], 1
    %15 = vsyncpa %s14, 0
    loop: start=0, step=1, limit=4
    $region2: #{tpu_custom_call.1} parent=1 // loop_pre_header
      _
    $region3: #{tpu_custom_call.1} parent=1 // loop_header
      %s17 = sphi 0, %s21
      %p18 = scmp.ge.s32.totalorder %s17, 4
      %s27 = sphi 0, %s29
      %s30 = sphi 0, %s27
      %s31 = sphi 0, %s30
      %s47 = sphi 0, %s31
      %s51 = sphi 0, %s51
      %s53 = sphi 0, %s51
      %s54 = sphi 0, %s53
      %s68 = sphi 0, %s54
      %s72 = sphi 0, %s72
      %s74 = sphi 0, %s72
      %s75 = sphi 0, %s74
      %s89 = sphi 0, %s75
      %s93 = sphi 0, %s93
      %s95 = sphi 0, %s93
      %s96 = sphi 0, %s95
      %s110 = sphi 0, %s96
      %s116 = sphi 0, %s118
      %s119 = sphi 0, %s116
      %s120 = sphi 0, %s119
      %s136 = sphi 0, %s120
    $region4: #{tpu_custom_call.1} parent=1 // loop_header_branch
      %20 = sbr.rel (%p18) target = $region8
    $region5: #{tpu_custom_call.1} parent=1 // loop_body
      %s22 = ssub.s32 %s17, 1
      %s23 = ssub.s32 %s17, 2
      %s24 = sadd.s32 %s17, 1
      %s25 = ssub.s32 %s17, %s24
      %p26 = scmp.eq.s32.totalorder %s25, 0
      %s28 = sadd.s32 %s27, 1
      %s29 = scalar_select %p26, %s27, %s28
      %p32 = pneg %p26
      %p33 = scmp.eq.s32.totalorder %s17, 1
      %p34 = por %p32, %p33
      %p35 = scmp.ne.s32.totalorder %s27, %s30
      %p36 = scmp.eq.s32.totalorder %s17, 0
      %p37 = por %p35, %p36
      %p38 = scmp.ne.s32.totalorder %s27, %s30
      %p39 = scmp.eq.s32.totalorder %s22, 1
      %p40 = por %p38, %p39
      %p41 = scmp.ne.s32.totalorder %s30, %s31
      %p42 = scmp.eq.s32.totalorder %s22, 0
      %p43 = por %p41, %p42
      %p44 = scmp.ne.s32.totalorder %s30, %s31
      %p45 = scmp.eq.s32.totalorder %s23, 1
      %p46 = por %p44, %p45
      %p48 = scmp.ne.s32.totalorder %s31, %s47
      %p49 = scmp.eq.s32.totalorder %s23, 0
      %p50 = por %p48, %p49
      %s52 = sadd.s32 %s51, 1
      %p55 = scmp.eq.s32.totalorder %s17, 1
      %p56 = scmp.ne.s32.totalorder %s51, %s53
      %p57 = scmp.eq.s32.totalorder %s17, 0
      %p58 = por %p56, %p57
      %p59 = scmp.ne.s32.totalorder %s51, %s53
      %p60 = scmp.eq.s32.totalorder %s22, 1
      %p61 = por %p59, %p60
      %p62 = scmp.ne.s32.totalorder %s53, %s54
      %p63 = scmp.eq.s32.totalorder %s22, 0
      %p64 = por %p62, %p63
      %p65 = scmp.ne.s32.totalorder %s53, %s54
      %p66 = scmp.eq.s32.totalorder %s23, 1
      %p67 = por %p65, %p66
      %p69 = scmp.ne.s32.totalorder %s54, %s68
      %p70 = scmp.eq.s32.totalorder %s23, 0
      %p71 = por %p69, %p70
      %s73 = sadd.s32 %s72, 1
      %p76 = scmp.eq.s32.totalorder %s17, 1
      %p77 = scmp.ne.s32.totalorder %s72, %s74
      %p78 = scmp.eq.s32.totalorder %s17, 0
      %p79 = por %p77, %p78
      %p80 = scmp.ne.s32.totalorder %s72, %s74
      %p81 = scmp.eq.s32.totalorder %s22, 1
      %p82 = por %p80, %p81
      %p83 = scmp.ne.s32.totalorder %s74, %s75
      %p84 = scmp.eq.s32.totalorder %s22, 0
      %p85 = por %p83, %p84
      %p86 = scmp.ne.s32.totalorder %s74, %s75
      %p87 = scmp.eq.s32.totalorder %s23, 1
      %p88 = por %p86, %p87
      %p90 = scmp.ne.s32.totalorder %s75, %s89
      %p91 = scmp.eq.s32.totalorder %s23, 0
      %p92 = por %p90, %p91
      %s94 = sadd.s32 %s93, 1
      %p97 = scmp.eq.s32.totalorder %s17, 1
      %p98 = scmp.ne.s32.totalorder %s93, %s95
      %p99 = scmp.eq.s32.totalorder %s17, 0
      %p100 = por %p98, %p99
      %p101 = scmp.ne.s32.totalorder %s93, %s95
      %p102 = scmp.eq.s32.totalorder %s22, 1
      %p103 = por %p101, %p102
      %p104 = scmp.ne.s32.totalorder %s95, %s96
      %p105 = scmp.eq.s32.totalorder %s22, 0
      %p106 = por %p104, %p105
      %p107 = scmp.ne.s32.totalorder %s95, %s96
      %p108 = scmp.eq.s32.totalorder %s23, 1
      %p109 = por %p107, %p108
      %p111 = scmp.ne.s32.totalorder %s96, %s110
      %p112 = scmp.eq.s32.totalorder %s23, 0
      %p113 = por %p111, %p112
      %s114 = ssub.s32 %s17, %s24
      %p115 = scmp.eq.s32.totalorder %s114, 0
      %s117 = sadd.s32 %s116, 1
      %s118 = scalar_select %p115, %s116, %s117
      %p121 = pneg %p115
      %p122 = scmp.eq.s32.totalorder %s17, 1
      %p123 = por %p121, %p122
      %p124 = scmp.ne.s32.totalorder %s116, %s119
      %p125 = scmp.eq.s32.totalorder %s17, 0
      %p126 = por %p124, %p125
      %p127 = scmp.ne.s32.totalorder %s116, %s119
      %p128 = scmp.eq.s32.totalorder %s22, 1
      %p129 = por %p127, %p128
      %p130 = scmp.ne.s32.totalorder %s119, %s120
      %p131 = scmp.eq.s32.totalorder %s22, 0
      %p132 = por %p130, %p131
      %p133 = scmp.ne.s32.totalorder %s119, %s120
      %p134 = scmp.eq.s32.totalorder %s23, 1
      %p135 = por %p133, %p134
      %p137 = scmp.ne.s32.totalorder %s120, %s136
      %p138 = scmp.eq.s32.totalorder %s23, 0
      %p139 = por %p137, %p138
      %p140 = scmp.le.s32.totalorder 1, %s17
      %p141 = scmp.lt.s32.totalorder %s17, 3
      %p142 = pnand %p140, %p141
      %p143 = pneg %p142
      // Predicated region
      $region9: #{tpu_custom_call.1} parent=5 // pred_check
        _
      $region10: #{tpu_custom_call.1} parent=5 // pred_check_branch
        %145 = sbr.rel (%p142) target = $region12
      $region11: #{tpu_custom_call.1} parent=5 // pred_region
        %s146 = ssub.s32 %s17, 1
        // Predicated region
        $region13: #{tpu_custom_call.1} parent=11 // pred_check
          %p147 = pneg %p64
        $region14: #{tpu_custom_call.1} parent=11 // pred_check_branch
          %149 = sbr.rel (%p147) target = $region16
        $region15: #{tpu_custom_call.1} parent=11 // pred_region
          %s151 = ssub.s32 6144, 6144
          %152 = vsyncadd [#allocation6], %s151
          %s153 = sshll.u32 [#allocation5], 4
          %s154 = int_to_ptr.vmem [resolvable:$true] %s153
          %159 = dma.hbm_to_vmem [thread:$0]  %s1, 6144, %s154, [#allocation6], 384, 384, 24
        $region16: #{tpu_custom_call.1} parent=11 // pred_fallthru
          _
        // Predicated region
        $region17: #{tpu_custom_call.1} parent=11 // pred_check
          %p160 = pneg %p85
        $region18: #{tpu_custom_call.1} parent=11 // pred_check_branch
          %162 = sbr.rel (%p160) target = $region20
        $region19: #{tpu_custom_call.1} parent=11 // pred_region
          _
        $region20: #{tpu_custom_call.1} parent=11 // pred_fallthru
          _
        // Predicated region
        $region21: #{tpu_custom_call.1} parent=11 // pred_check
          %p163 = pneg %p106
        $region22: #{tpu_custom_call.1} parent=11 // pred_check_branch
          %165 = sbr.rel (%p163) target = $region24
        $region23: #{tpu_custom_call.1} parent=11 // pred_region
          %s167 = ssub.s32 12288, 12288
          %168 = vsyncadd [#allocation6], %s167
          %s169 = sshll.u32 [#allocation7], 4
          %s170 = int_to_ptr.vmem [resolvable:$true] %s169
          %175 = dma.hbm_to_vmem [thread:$0]  %s3, 12288, %s170, [#allocation6], 256, 256, 16
        $region24: #{tpu_custom_call.1} parent=11 // pred_fallthru
          _
      $region12: #{tpu_custom_call.1} parent=5 // pred_fallthru
        _
      %p176 = scmp.lt.s32.totalorder %s17, 2
      // Predicated region
      $region25: #{tpu_custom_call.1} parent=5 // pred_check
        %p177 = pneg %p176
      $region26: #{tpu_custom_call.1} parent=5 // pred_check_branch
        %179 = sbr.rel (%p177) target = $region28
      $region27: #{tpu_custom_call.1} parent=5 // pred_region
        // Predicated region
        $region29: #{tpu_custom_call.1} parent=27 // pred_check
          %p180 = pneg %p37
        $region30: #{tpu_custom_call.1} parent=27 // pred_check_branch
          %182 = sbr.rel (%p180) target = $region32
        $region31: #{tpu_custom_call.1} parent=27 // pred_region
          %s183 = sand.u32 %s27, 1
          %s184 = scalar_lea.sflag [#allocation3], %s183
          %s185 = sand.u32 %s27, 1
          %s186 = smul.addr %s185, 200
          %s187 = scalar_lea.vmem [#allocation2], %s186
          %s188 = smul.u32 25, %s17
          %s190 = ssub.s32 3200, 3200
          %191 = vsyncadd %s184, %s190
          %s192 = smul.addr %s188, 128
          %s193 = scalar_lea.hbm %s0, %s192
          %s194 = sshll.u32 %s187, 4
          %s195 = int_to_ptr.vmem [resolvable:$true] %s194
          %200 = dma.hbm_to_vmem [thread:$0]  %s193, 3200, %s195, %s184, 128, 128, 8
        $region32: #{tpu_custom_call.1} parent=27 // pred_fallthru
          _
      $region28: #{tpu_custom_call.1} parent=5 // pred_fallthru
        _
      %p201 = scmp.le.s32.totalorder 1, %s17
      %p202 = scmp.lt.s32.totalorder %s17, 3
      %p203 = pnand %p201, %p202
      %p204 = pneg %p203
      // Predicated region
      $region33: #{tpu_custom_call.1} parent=5 // pred_check
        _
      $region34: #{tpu_custom_call.1} parent=5 // pred_check_branch
        %206 = sbr.rel (%p203) target = $region36
      $region35: #{tpu_custom_call.1} parent=5 // pred_region
        %s207 = ssub.s32 %s17, 1
        %s208 = sand.u32 %s30, 1
        %s209 = scalar_lea.sflag [#allocation3], %s208
        %s210 = sand.u32 %s30, 1
        %s211 = smul.addr %s210, 200
        %s212 = scalar_lea.vmem [#allocation2], %s211
        // Predicated region
        $region37: #{tpu_custom_call.1} parent=35 // pred_check
          %p213 = pneg %p43
        $region38: #{tpu_custom_call.1} parent=35 // pred_check_branch
          %215 = sbr.rel (%p213) target = $region40
        $region39: #{tpu_custom_call.1} parent=35 // pred_region
          %216 = dma.done %s209, 3200
        $region40: #{tpu_custom_call.1} parent=35 // pred_fallthru
          _
        // Predicated region
        $region41: #{tpu_custom_call.1} parent=35 // pred_check
          %p217 = pneg %p64
        $region42: #{tpu_custom_call.1} parent=35 // pred_check_branch
          %219 = sbr.rel (%p217) target = $region44
        $region43: #{tpu_custom_call.1} parent=35 // pred_region
          %220 = dma.done [#allocation6], 6144
        $region44: #{tpu_custom_call.1} parent=35 // pred_fallthru
          _
        // Predicated region
        $region45: #{tpu_custom_call.1} parent=35 // pred_check
          %p221 = pneg %p106
        $region46: #{tpu_custom_call.1} parent=35 // pred_check_branch
          %223 = sbr.rel (%p221) target = $region48
        $region47: #{tpu_custom_call.1} parent=35 // pred_region
          %224 = dma.done [#allocation6], 12288
        $region48: #{tpu_custom_call.1} parent=35 // pred_fallthru
          _
        %s225 = sand.u32 %s30, 1
        %s226 = scalar_lea.sflag [#allocation3], %s225
        %s227 = sand.u32 %s30, 1
        %s228 = smul.addr %s227, 200
        %s229 = scalar_lea.vmem [#allocation2], %s228
        %p230 = pneg %p43
        %p231 = pneg %p40
        %p232 = pneg %p64
        %p233 = pneg %p61
        %p234 = pneg %p85
        %p235 = pneg %p82
        %p236 = pneg %p106
        %p237 = pneg %p103
        %p238 = pneg %p132
        %p239 = pneg %p129
        %s240 = sand.u32 %s119, 1
        %s241 = scalar_lea.sflag [#allocation4], %s240
        %s242 = sand.u32 %s119, 1
        %s243 = smul.addr %s242, 600
        %s244 = scalar_lea.vmem [#allocation8], %s243
        %s245 = smul.u32 25, %s22
        %s246 = smul.u32 25, %s22
        %v248 = vld [vmem:[%s212] sm:$0xff]
        %v249 = vld [vmem:[%s212 + $0x8] sm:$0xff]
        %v250 = vld [vmem:[%s212 + $0x10] sm:$0xff]
        %v251 = vld [vmem:[%s212 + $0x18] sm:$0xff]
        %v252 = vld [vmem:[%s212 + $0x20] sm:$0xff]
        %v253 = vld [vmem:[%s212 + $0x28] sm:$0xff]
        %v254 = vld [vmem:[%s212 + $0x30] sm:$0xff]
        %v255 = vld [vmem:[%s212 + $0x38] sm:$0xff]
        %v256 = vld [vmem:[%s212 + $0x40] sm:$0xff]
        %v257 = vld [vmem:[%s212 + $0x48] sm:$0xff]
        %v258 = vld [vmem:[%s212 + $0x50] sm:$0xff]
        %v259 = vld [vmem:[%s212 + $0x58] sm:$0xff]
        %v260 = vld [vmem:[%s212 + $0x60] sm:$0xff]
        %v261 = vld [vmem:[%s212 + $0x68] sm:$0xff]
        %v262 = vld [vmem:[%s212 + $0x70] sm:$0xff]
        %v263 = vld [vmem:[%s212 + $0x78] sm:$0xff]
        %v264 = vld [vmem:[%s212 + $0x80] sm:$0xff]
        %v265 = vld [vmem:[%s212 + $0x88] sm:$0xff]
        %v266 = vld [vmem:[%s212 + $0x90] sm:$0xff]
        %v267 = vld [vmem:[%s212 + $0x98] sm:$0xff]
        %v268 = vld [vmem:[%s212 + $0xa0] sm:$0xff]
        %v269 = vld [vmem:[%s212 + $0xa8] sm:$0xff]
        %v270 = vld [vmem:[%s212 + $0xb0] sm:$0xff]
        %v271 = vld [vmem:[%s212 + $0xb8] sm:$0xff]
        %v272 = vld [vmem:[%s212 + $0xc0] sm:$0xff]
        %v273 = vpack.c.bf16 %v249, %v248
        %v274 = vpack.c.bf16 %v251, %v250
        %v275 = vpack.c.bf16 %v253, %v252
        %v276 = vpack.c.bf16 %v255, %v254
        %v277 = vpack.c.bf16 %v257, %v256
        %v278 = vpack.c.bf16 %v259, %v258
        %v279 = vpack.c.bf16 %v261, %v260
        %v280 = vpack.c.bf16 %v263, %v262
        %v281 = vpack.c.bf16 %v265, %v264
        %v282 = vpack.c.bf16 %v267, %v266
        %v283 = vpack.c.bf16 %v269, %v268
        %v284 = vpack.c.bf16 %v271, %v270
        %v285 = vpack.c.bf16 %v272, %v272
        %v286 = vld [vmem:[#allocation5] sm:$0xff]
        %v287 = vld [vmem:[#allocation5 + $0x8] sm:$0xff]
        %v288 = vld [vmem:[#allocation5 + $0x10] sm:$0xff]
        %v289 = vld [vmem:[#allocation5 + $0x18] sm:$0xff]
        %v290 = vld [vmem:[#allocation5 + $0x20] sm:$0xff]
        %v291 = vld [vmem:[#allocation5 + $0x28] sm:$0xff]
        %v292 = vld [vmem:[#allocation5 + $0x30] sm:$0xff]
        %v293 = vld [vmem:[#allocation5 + $0x38] sm:$0xff]
        %v294 = vld [vmem:[#allocation5 + $0x40] sm:$0xff]
        %v295 = vld [vmem:[#allocation5 + $0x48] sm:$0xff]
        %v296 = vld [vmem:[#allocation5 + $0x50] sm:$0xff]
        %v297 = vld [vmem:[#allocation5 + $0x58] sm:$0xff]
        %v298 = vld [vmem:[#allocation5 + $0x60] sm:$0xff]
        %v299 = vld [vmem:[#allocation5 + $0x68] sm:$0xff]
        %v300 = vld [vmem:[#allocation5 + $0x70] sm:$0xff]
        %v301 = vld [vmem:[#allocation5 + $0x78] sm:$0xff]
        %v302 = vld [vmem:[#allocation5 + $0x80] sm:$0xff]
        %v303 = vld [vmem:[#allocation5 + $0x88] sm:$0xff]
        %v304 = vld [vmem:[#allocation5 + $0x90] sm:$0xff]
        %v305 = vld [vmem:[#allocation5 + $0x98] sm:$0xff]
        %v306 = vld [vmem:[#allocation5 + $0xa0] sm:$0xff]
        %v307 = vld [vmem:[#allocation5 + $0xa8] sm:$0xff]
        %v308 = vld [vmem:[#allocation5 + $0xb0] sm:$0xff]
        %v309 = vld [vmem:[#allocation5 + $0xb8] sm:$0xff]
        %v310 = vld [vmem:[#allocation5 + $0xc0] sm:$0xff]
        %v311 = vld [vmem:[#allocation5 + $0xc8] sm:$0xff]
        %v312 = vld [vmem:[#allocation5 + $0xd0] sm:$0xff]
        %v313 = vld [vmem:[#allocation5 + $0xd8] sm:$0xff]
        %v314 = vld [vmem:[#allocation5 + $0xe0] sm:$0xff]
        %v315 = vld [vmem:[#allocation5 + $0xe8] sm:$0xff]
        %v316 = vld [vmem:[#allocation5 + $0xf0] sm:$0xff]
        %v317 = vld [vmem:[#allocation5 + $0xf8] sm:$0xff]
        %v318 = vld [vmem:[#allocation5 + $0x100] sm:$0xff]
        %v319 = vld [vmem:[#allocation5 + $0x108] sm:$0xff]
        %v320 = vld [vmem:[#allocation5 + $0x110] sm:$0xff]
        %v321 = vld [vmem:[#allocation5 + $0x118] sm:$0xff]
        %v322 = vld [vmem:[#allocation5 + $0x120] sm:$0xff]
        %v323 = vld [vmem:[#allocation5 + $0x128] sm:$0xff]
        %v324 = vld [vmem:[#allocation5 + $0x130] sm:$0xff]
        %v325 = vld [vmem:[#allocation5 + $0x138] sm:$0xff]
        %v326 = vld [vmem:[#allocation5 + $0x140] sm:$0xff]
        %v327 = vld [vmem:[#allocation5 + $0x148] sm:$0xff]
        %v328 = vld [vmem:[#allocation5 + $0x150] sm:$0xff]
        %v329 = vld [vmem:[#allocation5 + $0x158] sm:$0xff]
        %v330 = vld [vmem:[#allocation5 + $0x160] sm:$0xff]
        %v331 = vld [vmem:[#allocation5 + $0x168] sm:$0xff]
        %v332 = vld [vmem:[#allocation5 + $0x170] sm:$0xff]
        %v333 = vld [vmem:[#allocation5 + $0x178] sm:$0xff]
        %v382 = vunpack.c.l.b16 %v286
        %v383 = vunpack.c.h.b16 %v286
        %v384 = vunpack.c.l.b16 %v287
        %v385 = vunpack.c.h.b16 %v287
        %v386 = vunpack.c.l.b16 %v288
        %v387 = vunpack.c.h.b16 %v288
        %v388 = vunpack.c.l.b16 %v289
        %v389 = vunpack.c.h.b16 %v289
        %v390 = vunpack.c.l.b16 %v290
        %v391 = vunpack.c.h.b16 %v290
        %v392 = vunpack.c.l.b16 %v291
        %v393 = vunpack.c.h.b16 %v291
        %v394 = vunpack.c.l.b16 %v292
        %v395 = vunpack.c.h.b16 %v292
        %v396 = vunpack.c.l.b16 %v293
        %v397 = vunpack.c.h.b16 %v293
        %v398 = vunpack.c.l.b16 %v294
        %v399 = vunpack.c.h.b16 %v294
        %v400 = vunpack.c.l.b16 %v295
        %v401 = vunpack.c.h.b16 %v295
        %v402 = vunpack.c.l.b16 %v296
        %v403 = vunpack.c.h.b16 %v296
        %v404 = vunpack.c.l.b16 %v297
        %v405 = vunpack.c.h.b16 %v297
        %v406 = vunpack.c.l.b16 %v298
        %v407 = vunpack.c.h.b16 %v298
        %v408 = vunpack.c.l.b16 %v299
        %v409 = vunpack.c.h.b16 %v299
        %v410 = vunpack.c.l.b16 %v300
        %v411 = vunpack.c.h.b16 %v300
        %v412 = vunpack.c.l.b16 %v301
        %v413 = vunpack.c.h.b16 %v301
        %v414 = vunpack.c.l.b16 %v302
        %v415 = vunpack.c.h.b16 %v302
        %v416 = vunpack.c.l.b16 %v303
        %v417 = vunpack.c.h.b16 %v303
        %v418 = vunpack.c.l.b16 %v304
        %v419 = vunpack.c.h.b16 %v304
        %v420 = vunpack.c.l.b16 %v305
        %v421 = vunpack.c.h.b16 %v305
        %v422 = vunpack.c.l.b16 %v306
        %v423 = vunpack.c.h.b16 %v306
        %v424 = vunpack.c.l.b16 %v307
        %v425 = vunpack.c.h.b16 %v307
        %v426 = vunpack.c.l.b16 %v308
        %v427 = vunpack.c.h.b16 %v308
        %v428 = vunpack.c.l.b16 %v309
        %v429 = vunpack.c.h.b16 %v309
        %v430 = vunpack.c.l.b16 %v310
        %v431 = vunpack.c.h.b16 %v310
        %v432 = vunpack.c.l.b16 %v311
        %v433 = vunpack.c.h.b16 %v311
        %v434 = vunpack.c.l.b16 %v312
        %v435 = vunpack.c.h.b16 %v312
        %v436 = vunpack.c.l.b16 %v313
        %v437 = vunpack.c.h.b16 %v313
        %v438 = vunpack.c.l.b16 %v314
        %v439 = vunpack.c.h.b16 %v314
        %v440 = vunpack.c.l.b16 %v315
        %v441 = vunpack.c.h.b16 %v315
        %v442 = vunpack.c.l.b16 %v316
        %v443 = vunpack.c.h.b16 %v316
        %v444 = vunpack.c.l.b16 %v317
        %v445 = vunpack.c.h.b16 %v317
        %v446 = vunpack.c.l.b16 %v318
        %v447 = vunpack.c.h.b16 %v318
        %v448 = vunpack.c.l.b16 %v319
        %v449 = vunpack.c.h.b16 %v319
        %v450 = vunpack.c.l.b16 %v320
        %v451 = vunpack.c.h.b16 %v320
        %v452 = vunpack.c.l.b16 %v321
        %v453 = vunpack.c.h.b16 %v321
        %v454 = vunpack.c.l.b16 %v322
        %v455 = vunpack.c.h.b16 %v322
        %v456 = vunpack.c.l.b16 %v323
        %v457 = vunpack.c.h.b16 %v323
        %v458 = vunpack.c.l.b16 %v324
        %v459 = vunpack.c.h.b16 %v324
        %v460 = vunpack.c.l.b16 %v325
        %v461 = vunpack.c.h.b16 %v325
        %v462 = vunpack.c.l.b16 %v326
        %v463 = vunpack.c.h.b16 %v326
        %v464 = vunpack.c.l.b16 %v327
        %v465 = vunpack.c.h.b16 %v327
        %v466 = vunpack.c.l.b16 %v328
        %v467 = vunpack.c.h.b16 %v328
        %v468 = vunpack.c.l.b16 %v329
        %v469 = vunpack.c.h.b16 %v329
        %v470 = vunpack.c.l.b16 %v330
        %v471 = vunpack.c.h.b16 %v330
        %v472 = vunpack.c.l.b16 %v331
        %v473 = vunpack.c.h.b16 %v331
        %v474 = vunpack.c.l.b16 %v332
        %v475 = vunpack.c.h.b16 %v332
        %v476 = vunpack.c.l.b16 %v333
        %v477 = vunpack.c.h.b16 %v333
        %v478 = vpack.c.b16 %v388, %v382
        %v479 = vpack.c.b16 %v389, %v383
        %v480 = vpack.c.b16 %v390, %v384
        %v481 = vpack.c.b16 %v391, %v385
        %v482 = vpack.c.b16 %v392, %v386
        %v483 = vpack.c.b16 %v393, %v387
        %v484 = vpack.c.b16 %v400, %v394
        %v485 = vpack.c.b16 %v401, %v395
        %v486 = vpack.c.b16 %v402, %v396
        %v487 = vpack.c.b16 %v403, %v397
        %v488 = vpack.c.b16 %v404, %v398
        %v489 = vpack.c.b16 %v405, %v399
        %v490 = vpack.c.b16 %v412, %v406
        %v491 = vpack.c.b16 %v413, %v407
        %v492 = vpack.c.b16 %v414, %v408
        %v493 = vpack.c.b16 %v415, %v409
        %v494 = vpack.c.b16 %v416, %v410
        %v495 = vpack.c.b16 %v417, %v411
        %v496 = vpack.c.b16 %v424, %v418
        %v497 = vpack.c.b16 %v425, %v419
        %v498 = vpack.c.b16 %v426, %v420
        %v499 = vpack.c.b16 %v427, %v421
        %v500 = vpack.c.b16 %v428, %v422
        %v501 = vpack.c.b16 %v429, %v423
        %v502 = vpack.c.b16 %v436, %v430
        %v503 = vpack.c.b16 %v437, %v431
        %v504 = vpack.c.b16 %v438, %v432
        %v505 = vpack.c.b16 %v439, %v433
        %v506 = vpack.c.b16 %v440, %v434
        %v507 = vpack.c.b16 %v441, %v435
        %v508 = vpack.c.b16 %v448, %v442
        %v509 = vpack.c.b16 %v449, %v443
        %v510 = vpack.c.b16 %v450, %v444
        %v511 = vpack.c.b16 %v451, %v445
        %v512 = vpack.c.b16 %v452, %v446
        %v513 = vpack.c.b16 %v453, %v447
        %v514 = vpack.c.b16 %v460, %v454
        %v515 = vpack.c.b16 %v461, %v455
        %v516 = vpack.c.b16 %v462, %v456
        %v517 = vpack.c.b16 %v463, %v457
        %v518 = vpack.c.b16 %v464, %v458
        %v519 = vpack.c.b16 %v465, %v459
        %v520 = vpack.c.b16 %v472, %v466
        %v521 = vpack.c.b16 %v473, %v467
        %v522 = vpack.c.b16 %v474, %v468
        %v523 = vpack.c.b16 %v475, %v469
        %v524 = vpack.c.b16 %v476, %v470
        %v525 = vpack.c.b16 %v477, %v471
        %574 = vmatprep.subr.bf16.mxu0 %v521
        %575 = vmatpush1.bf16.msra.mxu0 %v520
        %576 = vmatprep.subr.bf16.mxu0 %v515
        %577 = vmatpush1.bf16.msra.mxu0 %v514
        %578 = vmatprep.subr.bf16.mxu0 %v509
        %579 = vmatpush1.bf16.msra.mxu0 %v508
        %580 = vmatprep.subr.bf16.mxu0 %v503
        %581 = vmatpush1.bf16.msra.mxu0 %v502
        %582 = vmatprep.subr.bf16.mxu0 %v497
        %583 = vmatpush1.bf16.msra.mxu0 %v496
        %584 = vmatprep.subr.bf16.mxu0 %v491
        %585 = vmatpush1.bf16.msra.mxu0 %v490
        %586 = vmatprep.subr.bf16.mxu0 %v485
        %587 = vmatpush1.bf16.msra.mxu0 %v484
        %588 = vmatprep.subr.bf16.mxu0 %v479
        %589 = vmatpush1.bf16.msra.mxu0 %v478
        %590 = vmatprep.subr.bf16.mxu0 0
        %591 = vmatpush2.bf16.msra.mxu0 0
        %592 = vmatprep.subr.bf16.mxu0 0
        %593 = vmatpush2.bf16.msra.mxu0 0
        %594 = vmatprep.subr.bf16.mxu0 0
        %595 = vmatpush2.bf16.msra.mxu0 0
        %596 = vmatprep.subr.bf16.mxu0 0
        %597 = vmatpush2.bf16.msra.mxu0 0
        %598 = vmatprep.subr.bf16.mxu0 0
        %599 = vmatpush2.bf16.msra.mxu0 0
        %600 = vmatprep.subr.bf16.mxu0 0
        %601 = vmatpush2.bf16.msra.mxu0 0
        %602 = vmatprep.subr.bf16.mxu0 0
        %603 = vmatpush2.bf16.msra.mxu0 0
        %604 = vmatprep.subr.bf16.mxu0 0
        %605 = vmatpush2.bf16.msra.mxu0 0
        %606 = vmatprep.mubr.bf16.mxu0 0
        %607 = vmatmul.mubr.bf16.gmra.mxu0 %v273
        %v608 = vpop.f32.mrf.mxu0
        %v609 = vadd.f32 0.0, %v608
        %v610 = vpop.f32.mrf.mxu0
        %v611 = vadd.f32 0.0, %v610
        %v612 = vpop.f32.mrf.mxu0
        %v613 = vadd.f32 0.0, %v612
        %v614 = vpop.f32.mrf.mxu0
        %v615 = vadd.f32 0.0, %v614
        %616 = vmatprep.mubr.bf16.mxu0 0
        %617 = vmatmul.mubr.bf16.gmra.mxu0 %v274
        %v618 = vpop.f32.mrf.mxu0
        %v619 = vadd.f32 0.0, %v618
        %v620 = vpop.f32.mrf.mxu0
        %v621 = vadd.f32 0.0, %v620
        %v622 = vpop.f32.mrf.mxu0
        %v623 = vadd.f32 0.0, %v622
        %v624 = vpop.f32.mrf.mxu0
        %v625 = vadd.f32 0.0, %v624
        %626 = vmatprep.mubr.bf16.mxu0 0
        %627 = vmatmul.mubr.bf16.gmra.mxu0 %v275
        %v628 = vpop.f32.mrf.mxu0
        %v629 = vadd.f32 0.0, %v628
        %v630 = vpop.f32.mrf.mxu0
        %v631 = vadd.f32 0.0, %v630
        %v632 = vpop.f32.mrf.mxu0
        %v633 = vadd.f32 0.0, %v632
        %v634 = vpop.f32.mrf.mxu0
        %v635 = vadd.f32 0.0, %v634
        %636 = vmatprep.mubr.bf16.mxu0 0
        %637 = vmatmul.mubr.bf16.gmra.mxu0 %v276
        %v638 = vpop.f32.mrf.mxu0
        %v639 = vadd.f32 0.0, %v638
        %v640 = vpop.f32.mrf.mxu0
        %v641 = vadd.f32 0.0, %v640
        %v642 = vpop.f32.mrf.mxu0
        %v643 = vadd.f32 0.0, %v642
        %v644 = vpop.f32.mrf.mxu0
        %v645 = vadd.f32 0.0, %v644
        %646 = vmatprep.mubr.bf16.mxu0 0
        %647 = vmatmul.mubr.bf16.gmra.mxu0 %v277
        %v648 = vpop.f32.mrf.mxu0
        %v649 = vadd.f32 0.0, %v648
        %v650 = vpop.f32.mrf.mxu0
        %v651 = vadd.f32 0.0, %v650
        %v652 = vpop.f32.mrf.mxu0
        %v653 = vadd.f32 0.0, %v652
        %v654 = vpop.f32.mrf.mxu0
        %v655 = vadd.f32 0.0, %v654
        %656 = vmatprep.mubr.bf16.mxu0 0
        %657 = vmatmul.mubr.bf16.gmra.mxu0 %v278
        %v658 = vpop.f32.mrf.mxu0
        %v659 = vadd.f32 0.0, %v658
        %v660 = vpop.f32.mrf.mxu0
        %v661 = vadd.f32 0.0, %v660
        %v662 = vpop.f32.mrf.mxu0
        %v663 = vadd.f32 0.0, %v662
        %v664 = vpop.f32.mrf.mxu0
        %v665 = vadd.f32 0.0, %v664
        %666 = vmatprep.mubr.bf16.mxu0 0
        %667 = vmatmul.mubr.bf16.gmra.mxu0 %v279
        %v668 = vpop.f32.mrf.mxu0
        %v669 = vadd.f32 0.0, %v668
        %v670 = vpop.f32.mrf.mxu0
        %v671 = vadd.f32 0.0, %v670
        %v672 = vpop.f32.mrf.mxu0
        %v673 = vadd.f32 0.0, %v672
        %v674 = vpop.f32.mrf.mxu0
        %v675 = vadd.f32 0.0, %v674
        %676 = vmatprep.mubr.bf16.mxu0 0
        %677 = vmatmul.mubr.bf16.gmra.mxu0 %v280
        %v678 = vpop.f32.mrf.mxu0
        %v679 = vadd.f32 0.0, %v678
        %v680 = vpop.f32.mrf.mxu0
        %v681 = vadd.f32 0.0, %v680
        %v682 = vpop.f32.mrf.mxu0
        %v683 = vadd.f32 0.0, %v682
        %v684 = vpop.f32.mrf.mxu0
        %v685 = vadd.f32 0.0, %v684
        %686 = vmatprep.mubr.bf16.mxu0 0
        %687 = vmatmul.mubr.bf16.gmra.mxu0 %v281
        %v688 = vpop.f32.mrf.mxu0
        %v689 = vadd.f32 0.0, %v688
        %v690 = vpop.f32.mrf.mxu0
        %v691 = vadd.f32 0.0, %v690
        %v692 = vpop.f32.mrf.mxu0
        %v693 = vadd.f32 0.0, %v692
        %v694 = vpop.f32.mrf.mxu0
        %v695 = vadd.f32 0.0, %v694
        %696 = vmatprep.mubr.bf16.mxu0 0
        %697 = vmatmul.mubr.bf16.gmra.mxu0 %v282
        %v698 = vpop.f32.mrf.mxu0
        %v699 = vadd.f32 0.0, %v698
        %v700 = vpop.f32.mrf.mxu0
        %v701 = vadd.f32 0.0, %v700
        %v702 = vpop.f32.mrf.mxu0
        %v703 = vadd.f32 0.0, %v702
        %v704 = vpop.f32.mrf.mxu0
        %v705 = vadd.f32 0.0, %v704
        %706 = vmatprep.mubr.bf16.mxu0 0
        %707 = vmatmul.mubr.bf16.gmra.mxu0 %v283
        %v708 = vpop.f32.mrf.mxu0
        %v709 = vadd.f32 0.0, %v708
        %v710 = vpop.f32.mrf.mxu0
        %v711 = vadd.f32 0.0, %v710
        %v712 = vpop.f32.mrf.mxu0
        %v713 = vadd.f32 0.0, %v712
        %v714 = vpop.f32.mrf.mxu0
        %v715 = vadd.f32 0.0, %v714
        %716 = vmatprep.mubr.bf16.mxu0 0
        %717 = vmatmul.mubr.bf16.gmra.mxu0 %v284
        %v718 = vpop.f32.mrf.mxu0
        %v719 = vadd.f32 0.0, %v718
        %v720 = vpop.f32.mrf.mxu0
        %v721 = vadd.f32 0.0, %v720
        %v722 = vpop.f32.mrf.mxu0
        %v723 = vadd.f32 0.0, %v722
        %v724 = vpop.f32.mrf.mxu0
        %v725 = vadd.f32 0.0, %v724
        %726 = vmatprep.mubr.bf16.mxu0 0
        %727 = vmatmul.mubr.bf16.gmra.mxu0 %v285
        %v728 = vpop.f32.mrf.mxu0
        %v729 = vadd.f32 0.0, %v728
        %v730 = vpop.f32.mrf.mxu0
        %v731 = vadd.f32 0.0, %v730
        %v732 = vpop.f32.mrf.mxu0
        %v733 = vpop.f32.mrf.mxu0
        %734 = vdwg.mxu0
        %735 = vmatprep.subr.bf16.mxu0 %v523
        %736 = vmatpush1.bf16.msra.mxu0 %v522
        %737 = vmatprep.subr.bf16.mxu0 %v517
        %738 = vmatpush1.bf16.msra.mxu0 %v516
        %739 = vmatprep.subr.bf16.mxu0 %v511
        %740 = vmatpush1.bf16.msra.mxu0 %v510
        %741 = vmatprep.subr.bf16.mxu0 %v505
        %742 = vmatpush1.bf16.msra.mxu0 %v504
        %743 = vmatprep.subr.bf16.mxu0 %v499
        %744 = vmatpush1.bf16.msra.mxu0 %v498
        %745 = vmatprep.subr.bf16.mxu0 %v493
        %746 = vmatpush1.bf16.msra.mxu0 %v492
        %747 = vmatprep.subr.bf16.mxu0 %v487
        %748 = vmatpush1.bf16.msra.mxu0 %v486
        %749 = vmatprep.subr.bf16.mxu0 %v481
        %750 = vmatpush1.bf16.msra.mxu0 %v480
        %751 = vmatprep.subr.bf16.mxu0 0
        %752 = vmatpush2.bf16.msra.mxu0 0
        %753 = vmatprep.subr.bf16.mxu0 0
        %754 = vmatpush2.bf16.msra.mxu0 0
        %755 = vmatprep.subr.bf16.mxu0 0
        %756 = vmatpush2.bf16.msra.mxu0 0
        %757 = vmatprep.subr.bf16.mxu0 0
        %758 = vmatpush2.bf16.msra.mxu0 0
        %759 = vmatprep.subr.bf16.mxu0 0
        %760 = vmatpush2.bf16.msra.mxu0 0
        %761 = vmatprep.subr.bf16.mxu0 0
        %762 = vmatpush2.bf16.msra.mxu0 0
        %763 = vmatprep.subr.bf16.mxu0 0
        %764 = vmatpush2.bf16.msra.mxu0 0
        %765 = vmatprep.subr.bf16.mxu0 0
        %766 = vmatpush2.bf16.msra.mxu0 0
        %767 = vmatprep.mubr.bf16.mxu0 0
        %768 = vmatmul.mubr.bf16.gmra.mxu0 %v273
        %v769 = vpop.f32.mrf.mxu0
        %v770 = vadd.f32 0.0, %v769
        %v771 = vpop.f32.mrf.mxu0
        %v772 = vadd.f32 0.0, %v771
        %v773 = vpop.f32.mrf.mxu0
        %v774 = vadd.f32 0.0, %v773
        %v775 = vpop.f32.mrf.mxu0
        %v776 = vadd.f32 0.0, %v775
        %777 = vmatprep.mubr.bf16.mxu0 0
        %778 = vmatmul.mubr.bf16.gmra.mxu0 %v274
        %v779 = vpop.f32.mrf.mxu0
        %v780 = vadd.f32 0.0, %v779
        %v781 = vpop.f32.mrf.mxu0
        %v782 = vadd.f32 0.0, %v781
        %v783 = vpop.f32.mrf.mxu0
        %v784 = vadd.f32 0.0, %v783
        %v785 = vpop.f32.mrf.mxu0
        %v786 = vadd.f32 0.0, %v785
        %787 = vmatprep.mubr.bf16.mxu0 0
        %788 = vmatmul.mubr.bf16.gmra.mxu0 %v275
        %v789 = vpop.f32.mrf.mxu0
        %v790 = vadd.f32 0.0, %v789
        %v791 = vpop.f32.mrf.mxu0
        %v792 = vadd.f32 0.0, %v791
        %v793 = vpop.f32.mrf.mxu0
        %v794 = vadd.f32 0.0, %v793
        %v795 = vpop.f32.mrf.mxu0
        %v796 = vadd.f32 0.0, %v795
        %797 = vmatprep.mubr.bf16.mxu0 0
        %798 = vmatmul.mubr.bf16.gmra.mxu0 %v276
        %v799 = vpop.f32.mrf.mxu0
        %v800 = vadd.f32 0.0, %v799
        %v801 = vpop.f32.mrf.mxu0
        %v802 = vadd.f32 0.0, %v801
        %v803 = vpop.f32.mrf.mxu0
        %v804 = vadd.f32 0.0, %v803
        %v805 = vpop.f32.mrf.mxu0
        %v806 = vadd.f32 0.0, %v805
        %807 = vmatprep.mubr.bf16.mxu0 0
        %808 = vmatmul.mubr.bf16.gmra.mxu0 %v277
        %v809 = vpop.f32.mrf.mxu0
        %v810 = vadd.f32 0.0, %v809
        %v811 = vpop.f32.mrf.mxu0
        %v812 = vadd.f32 0.0, %v811
        %v813 = vpop.f32.mrf.mxu0
        %v814 = vadd.f32 0.0, %v813
        %v815 = vpop.f32.mrf.mxu0
        %v816 = vadd.f32 0.0, %v815
        %817 = vmatprep.mubr.bf16.mxu0 0
        %818 = vmatmul.mubr.bf16.gmra.mxu0 %v278
        %v819 = vpop.f32.mrf.mxu0
        %v820 = vadd.f32 0.0, %v819
        %v821 = vpop.f32.mrf.mxu0
        %v822 = vadd.f32 0.0, %v821
        %v823 = vpop.f32.mrf.mxu0
        %v824 = vadd.f32 0.0, %v823
        %v825 = vpop.f32.mrf.mxu0
        %v826 = vadd.f32 0.0, %v825
        %827 = vmatprep.mubr.bf16.mxu0 0
        %828 = vmatmul.mubr.bf16.gmra.mxu0 %v279
        %v829 = vpop.f32.mrf.mxu0
        %v830 = vadd.f32 0.0, %v829
        %v831 = vpop.f32.mrf.mxu0
        %v832 = vadd.f32 0.0, %v831
        %v833 = vpop.f32.mrf.mxu0
        %v834 = vadd.f32 0.0, %v833
        %v835 = vpop.f32.mrf.mxu0
        %v836 = vadd.f32 0.0, %v835
        %837 = vmatprep.mubr.bf16.mxu0 0
        %838 = vmatmul.mubr.bf16.gmra.mxu0 %v280
        %v839 = vpop.f32.mrf.mxu0
        %v840 = vadd.f32 0.0, %v839
        %v841 = vpop.f32.mrf.mxu0
        %v842 = vadd.f32 0.0, %v841
        %v843 = vpop.f32.mrf.mxu0
        %v844 = vadd.f32 0.0, %v843
        %v845 = vpop.f32.mrf.mxu0
        %v846 = vadd.f32 0.0, %v845
        %847 = vmatprep.mubr.bf16.mxu0 0
        %848 = vmatmul.mubr.bf16.gmra.mxu0 %v281
        %v849 = vpop.f32.mrf.mxu0
        %v850 = vadd.f32 0.0, %v849
        %v851 = vpop.f32.mrf.mxu0
        %v852 = vadd.f32 0.0, %v851
        %v853 = vpop.f32.mrf.mxu0
        %v854 = vadd.f32 0.0, %v853
        %v855 = vpop.f32.mrf.mxu0
        %v856 = vadd.f32 0.0, %v855
        %857 = vmatprep.mubr.bf16.mxu0 0
        %858 = vmatmul.mubr.bf16.gmra.mxu0 %v282
        %v859 = vpop.f32.mrf.mxu0
        %v860 = vadd.f32 0.0, %v859
        %v861 = vpop.f32.mrf.mxu0
        %v862 = vadd.f32 0.0, %v861
        %v863 = vpop.f32.mrf.mxu0
        %v864 = vadd.f32 0.0, %v863
        %v865 = vpop.f32.mrf.mxu0
        %v866 = vadd.f32 0.0, %v865
        %867 = vmatprep.mubr.bf16.mxu0 0
        %868 = vmatmul.mubr.bf16.gmra.mxu0 %v283
        %v869 = vpop.f32.mrf.mxu0
        %v870 = vadd.f32 0.0, %v869
        %v871 = vpop.f32.mrf.mxu0
        %v872 = vadd.f32 0.0, %v871
        %v873 = vpop.f32.mrf.mxu0
        %v874 = vadd.f32 0.0, %v873
        %v875 = vpop.f32.mrf.mxu0
        %v876 = vadd.f32 0.0, %v875
        %877 = vmatprep.mubr.bf16.mxu0 0
        %878 = vmatmul.mubr.bf16.gmra.mxu0 %v284
        %v879 = vpop.f32.mrf.mxu0
        %v880 = vadd.f32 0.0, %v879
        %v881 = vpop.f32.mrf.mxu0
        %v882 = vadd.f32 0.0, %v881
        %v883 = vpop.f32.mrf.mxu0
        %v884 = vadd.f32 0.0, %v883
        %v885 = vpop.f32.mrf.mxu0
        %v886 = vadd.f32 0.0, %v885
        %887 = vmatprep.mubr.bf16.mxu0 0
        %888 = vmatmul.mubr.bf16.gmra.mxu0 %v285
        %v889 = vpop.f32.mrf.mxu0
        %v890 = vadd.f32 0.0, %v889
        %v891 = vpop.f32.mrf.mxu0
        %v892 = vadd.f32 0.0, %v891
        %v893 = vpop.f32.mrf.mxu0
        %v894 = vpop.f32.mrf.mxu0
        %895 = vdwg.mxu0
        %896 = vmatprep.subr.bf16.mxu0 %v525
        %897 = vmatpush1.bf16.msra.mxu0 %v524
        %898 = vmatprep.subr.bf16.mxu0 %v519
        %899 = vmatpush1.bf16.msra.mxu0 %v518
        %900 = vmatprep.subr.bf16.mxu0 %v513
        %901 = vmatpush1.bf16.msra.mxu0 %v512
        %902 = vmatprep.subr.bf16.mxu0 %v507
        %903 = vmatpush1.bf16.msra.mxu0 %v506
        %904 = vmatprep.subr.bf16.mxu0 %v501
        %905 = vmatpush1.bf16.msra.mxu0 %v500
        %906 = vmatprep.subr.bf16.mxu0 %v495
        %907 = vmatpush1.bf16.msra.mxu0 %v494
        %908 = vmatprep.subr.bf16.mxu0 %v489
        %909 = vmatpush1.bf16.msra.mxu0 %v488
        %910 = vmatprep.subr.bf16.mxu0 %v483
        %911 = vmatpush1.bf16.msra.mxu0 %v482
        %912 = vmatprep.subr.bf16.mxu0 0
        %913 = vmatpush2.bf16.msra.mxu0 0
        %914 = vmatprep.subr.bf16.mxu0 0
        %915 = vmatpush2.bf16.msra.mxu0 0
        %916 = vmatprep.subr.bf16.mxu0 0
        %917 = vmatpush2.bf16.msra.mxu0 0
        %918 = vmatprep.subr.bf16.mxu0 0
        %919 = vmatpush2.bf16.msra.mxu0 0
        %920 = vmatprep.subr.bf16.mxu0 0
        %921 = vmatpush2.bf16.msra.mxu0 0
        %922 = vmatprep.subr.bf16.mxu0 0
        %923 = vmatpush2.bf16.msra.mxu0 0
        %924 = vmatprep.subr.bf16.mxu0 0
        %925 = vmatpush2.bf16.msra.mxu0 0
        %926 = vmatprep.subr.bf16.mxu0 0
        %927 = vmatpush2.bf16.msra.mxu0 0
        %928 = vmatprep.mubr.bf16.mxu0 0
        %929 = vmatmul.mubr.bf16.gmra.mxu0 %v273
        %v930 = vpop.f32.mrf.mxu0
        %v931 = vadd.f32 0.0, %v930
        %v932 = vpop.f32.mrf.mxu0
        %v933 = vadd.f32 0.0, %v932
        %v934 = vpop.f32.mrf.mxu0
        %v935 = vadd.f32 0.0, %v934
        %v936 = vpop.f32.mrf.mxu0
        %v937 = vadd.f32 0.0, %v936
        %938 = vmatprep.mubr.bf16.mxu0 0
        %939 = vmatmul.mubr.bf16.gmra.mxu0 %v274
        %v940 = vpop.f32.mrf.mxu0
        %v941 = vadd.f32 0.0, %v940
        %v942 = vpop.f32.mrf.mxu0
        %v943 = vadd.f32 0.0, %v942
        %v944 = vpop.f32.mrf.mxu0
        %v945 = vadd.f32 0.0, %v944
        %v946 = vpop.f32.mrf.mxu0
        %v947 = vadd.f32 0.0, %v946
        %948 = vmatprep.mubr.bf16.mxu0 0
        %949 = vmatmul.mubr.bf16.gmra.mxu0 %v275
        %v950 = vpop.f32.mrf.mxu0
        %v951 = vadd.f32 0.0, %v950
        %v952 = vpop.f32.mrf.mxu0
        %v953 = vadd.f32 0.0, %v952
        %v954 = vpop.f32.mrf.mxu0
        %v955 = vadd.f32 0.0, %v954
        %v956 = vpop.f32.mrf.mxu0
        %v957 = vadd.f32 0.0, %v956
        %958 = vmatprep.mubr.bf16.mxu0 0
        %959 = vmatmul.mubr.bf16.gmra.mxu0 %v276
        %v960 = vpop.f32.mrf.mxu0
        %v961 = vadd.f32 0.0, %v960
        %v962 = vpop.f32.mrf.mxu0
        %v963 = vadd.f32 0.0, %v962
        %v964 = vpop.f32.mrf.mxu0
        %v965 = vadd.f32 0.0, %v964
        %v966 = vpop.f32.mrf.mxu0
        %v967 = vadd.f32 0.0, %v966
        %968 = vmatprep.mubr.bf16.mxu0 0
        %969 = vmatmul.mubr.bf16.gmra.mxu0 %v277
        %v970 = vpop.f32.mrf.mxu0
        %v971 = vadd.f32 0.0, %v970
        %v972 = vpop.f32.mrf.mxu0
        %v973 = vadd.f32 0.0, %v972
        %v974 = vpop.f32.mrf.mxu0
        %v975 = vadd.f32 0.0, %v974
        %v976 = vpop.f32.mrf.mxu0
        %v977 = vadd.f32 0.0, %v976
        %978 = vmatprep.mubr.bf16.mxu0 0
        %979 = vmatmul.mubr.bf16.gmra.mxu0 %v278
        %v980 = vpop.f32.mrf.mxu0
        %v981 = vadd.f32 0.0, %v980
        %v982 = vpop.f32.mrf.mxu0
        %v983 = vadd.f32 0.0, %v982
        %v984 = vpop.f32.mrf.mxu0
        %v985 = vadd.f32 0.0, %v984
        %v986 = vpop.f32.mrf.mxu0
        %v987 = vadd.f32 0.0, %v986
        %988 = vmatprep.mubr.bf16.mxu0 0
        %989 = vmatmul.mubr.bf16.gmra.mxu0 %v279
        %v990 = vpop.f32.mrf.mxu0
        %v991 = vadd.f32 0.0, %v990
        %v992 = vpop.f32.mrf.mxu0
        %v993 = vadd.f32 0.0, %v992
        %v994 = vpop.f32.mrf.mxu0
        %v995 = vadd.f32 0.0, %v994
        %v996 = vpop.f32.mrf.mxu0
        %v997 = vadd.f32 0.0, %v996
        %998 = vmatprep.mubr.bf16.mxu0 0
        %999 = vmatmul.mubr.bf16.gmra.mxu0 %v280
        %v1000 = vpop.f32.mrf.mxu0
        %v1001 = vadd.f32 0.0, %v1000
        %v1002 = vpop.f32.mrf.mxu0
        %v1003 = vadd.f32 0.0, %v1002
        %v1004 = vpop.f32.mrf.mxu0
        %v1005 = vadd.f32 0.0, %v1004
        %v1006 = vpop.f32.mrf.mxu0
        %v1007 = vadd.f32 0.0, %v1006
        %1008 = vmatprep.mubr.bf16.mxu0 0
        %1009 = vmatmul.mubr.bf16.gmra.mxu0 %v281
        %v1010 = vpop.f32.mrf.mxu0
        %v1011 = vadd.f32 0.0, %v1010
        %v1012 = vpop.f32.mrf.mxu0
        %v1013 = vadd.f32 0.0, %v1012
        %v1014 = vpop.f32.mrf.mxu0
        %v1015 = vadd.f32 0.0, %v1014
        %v1016 = vpop.f32.mrf.mxu0
        %v1017 = vadd.f32 0.0, %v1016
        %1018 = vmatprep.mubr.bf16.mxu0 0
        %1019 = vmatmul.mubr.bf16.gmra.mxu0 %v282
        %v1020 = vpop.f32.mrf.mxu0
        %v1021 = vadd.f32 0.0, %v1020
        %v1022 = vpop.f32.mrf.mxu0
        %v1023 = vadd.f32 0.0, %v1022
        %v1024 = vpop.f32.mrf.mxu0
        %v1025 = vadd.f32 0.0, %v1024
        %v1026 = vpop.f32.mrf.mxu0
        %v1027 = vadd.f32 0.0, %v1026
        %1028 = vmatprep.mubr.bf16.mxu0 0
        %1029 = vmatmul.mubr.bf16.gmra.mxu0 %v283
        %v1030 = vpop.f32.mrf.mxu0
        %v1031 = vadd.f32 0.0, %v1030
        %v1032 = vpop.f32.mrf.mxu0
        %v1033 = vadd.f32 0.0, %v1032
        %v1034 = vpop.f32.mrf.mxu0
        %v1035 = vadd.f32 0.0, %v1034
        %v1036 = vpop.f32.mrf.mxu0
        %v1037 = vadd.f32 0.0, %v1036
        %1038 = vmatprep.mubr.bf16.mxu0 0
        %1039 = vmatmul.mubr.bf16.gmra.mxu0 %v284
        %v1040 = vpop.f32.mrf.mxu0
        %v1041 = vadd.f32 0.0, %v1040
        %v1042 = vpop.f32.mrf.mxu0
        %v1043 = vadd.f32 0.0, %v1042
        %v1044 = vpop.f32.mrf.mxu0
        %v1045 = vadd.f32 0.0, %v1044
        %v1046 = vpop.f32.mrf.mxu0
        %v1047 = vadd.f32 0.0, %v1046
        %1048 = vmatprep.mubr.bf16.mxu0 0
        %1049 = vmatmul.mubr.bf16.gmra.mxu0 %v285
        %v1050 = vpop.f32.mrf.mxu0
        %v1051 = vadd.f32 0.0, %v1050
        %v1052 = vpop.f32.mrf.mxu0
        %v1053 = vadd.f32 0.0, %v1052
        %v1054 = vpop.f32.mrf.mxu0
        %v1055 = vpop.f32.mrf.mxu0
        %1056 = vdwg.mxu0
        %vm1057 = vcmask 64544
        %v1058 = vsel %vm1057, %v772, -inf
        %1059 = vmax.xlane.f32.xlu0 %v1058
        %v1060 = vpop.xlane.xlu0 %1059
        %v1061 = vsel %vm1057, %v776, -inf
        %1062 = vmax.xlane.f32.xlu0 %v1061
        %v1063 = vpop.xlane.xlu0 %1062
        %v1064 = vsel %vm1057, %v782, -inf
        %1065 = vmax.xlane.f32.xlu0 %v1064
        %v1066 = vpop.xlane.xlu0 %1065
        %v1067 = vsel %vm1057, %v786, -inf
        %1068 = vmax.xlane.f32.xlu0 %v1067
        %v1069 = vpop.xlane.xlu0 %1068
        %v1070 = vsel %vm1057, %v792, -inf
        %1071 = vmax.xlane.f32.xlu0 %v1070
        %v1072 = vpop.xlane.xlu0 %1071
        %v1073 = vsel %vm1057, %v796, -inf
        %1074 = vmax.xlane.f32.xlu0 %v1073
        %v1075 = vpop.xlane.xlu0 %1074
        %v1076 = vsel %vm1057, %v802, -inf
        %1077 = vmax.xlane.f32.xlu0 %v1076
        %v1078 = vpop.xlane.xlu0 %1077
        %v1079 = vsel %vm1057, %v806, -inf
        %1080 = vmax.xlane.f32.xlu0 %v1079
        %v1081 = vpop.xlane.xlu0 %1080
        %v1082 = vsel %vm1057, %v812, -inf
        %1083 = vmax.xlane.f32.xlu0 %v1082
        %v1084 = vpop.xlane.xlu0 %1083
        %v1085 = vsel %vm1057, %v816, -inf
        %1086 = vmax.xlane.f32.xlu0 %v1085
        %v1087 = vpop.xlane.xlu0 %1086
        %v1088 = vsel %vm1057, %v822, -inf
        %1089 = vmax.xlane.f32.xlu0 %v1088
        %v1090 = vpop.xlane.xlu0 %1089
        %v1091 = vsel %vm1057, %v826, -inf
        %1092 = vmax.xlane.f32.xlu0 %v1091
        %v1093 = vpop.xlane.xlu0 %1092
        %v1094 = vsel %vm1057, %v832, -inf
        %1095 = vmax.xlane.f32.xlu0 %v1094
        %v1096 = vpop.xlane.xlu0 %1095
        %v1097 = vsel %vm1057, %v836, -inf
        %1098 = vmax.xlane.f32.xlu0 %v1097
        %v1099 = vpop.xlane.xlu0 %1098
        %v1100 = vsel %vm1057, %v842, -inf
        %1101 = vmax.xlane.f32.xlu0 %v1100
        %v1102 = vpop.xlane.xlu0 %1101
        %v1103 = vsel %vm1057, %v846, -inf
        %1104 = vmax.xlane.f32.xlu0 %v1103
        %v1105 = vpop.xlane.xlu0 %1104
        %v1106 = vsel %vm1057, %v852, -inf
        %1107 = vmax.xlane.f32.xlu0 %v1106
        %v1108 = vpop.xlane.xlu0 %1107
        %v1109 = vsel %vm1057, %v856, -inf
        %1110 = vmax.xlane.f32.xlu0 %v1109
        %v1111 = vpop.xlane.xlu0 %1110
        %v1112 = vsel %vm1057, %v862, -inf
        %1113 = vmax.xlane.f32.xlu0 %v1112
        %v1114 = vpop.xlane.xlu0 %1113
        %v1115 = vsel %vm1057, %v866, -inf
        %1116 = vmax.xlane.f32.xlu0 %v1115
        %v1117 = vpop.xlane.xlu0 %1116
        %v1118 = vsel %vm1057, %v872, -inf
        %1119 = vmax.xlane.f32.xlu0 %v1118
        %v1120 = vpop.xlane.xlu0 %1119
        %v1121 = vsel %vm1057, %v876, -inf
        %1122 = vmax.xlane.f32.xlu0 %v1121
        %v1123 = vpop.xlane.xlu0 %1122
        %v1124 = vsel %vm1057, %v882, -inf
        %1125 = vmax.xlane.f32.xlu0 %v1124
        %v1126 = vpop.xlane.xlu0 %1125
        %v1127 = vsel %vm1057, %v886, -inf
        %1128 = vmax.xlane.f32.xlu0 %v1127
        %v1129 = vpop.xlane.xlu0 %1128
        %v1130 = vsel %vm1057, %v892, -inf
        %1131 = vmax.xlane.f32.xlu0 %v1130
        %v1132 = vpop.xlane.xlu0 %1131
        %v1133 = vsub.f32 %v772, %v1060
        %v1134 = vsub.f32 %v776, %v1063
        %v1135 = vsub.f32 %v782, %v1066
        %v1136 = vsub.f32 %v786, %v1069
        %v1137 = vsub.f32 %v792, %v1072
        %v1138 = vsub.f32 %v796, %v1075
        %v1139 = vsub.f32 %v802, %v1078
        %v1140 = vsub.f32 %v806, %v1081
        %v1141 = vsub.f32 %v812, %v1084
        %v1142 = vsub.f32 %v816, %v1087
        %v1143 = vsub.f32 %v822, %v1090
        %v1144 = vsub.f32 %v826, %v1093
        %v1145 = vsub.f32 %v832, %v1096
        %v1146 = vsub.f32 %v836, %v1099
        %v1147 = vsub.f32 %v842, %v1102
        %v1148 = vsub.f32 %v846, %v1105
        %v1149 = vsub.f32 %v852, %v1108
        %v1150 = vsub.f32 %v856, %v1111
        %v1151 = vsub.f32 %v862, %v1114
        %v1152 = vsub.f32 %v866, %v1117
        %v1153 = vsub.f32 %v872, %v1120
        %v1154 = vsub.f32 %v876, %v1123
        %v1155 = vsub.f32 %v882, %v1126
        %v1156 = vsub.f32 %v886, %v1129
        %v1157 = vsub.f32 %v892, %v1132
        %v1158 = vmul.f32 %v1133, 1.442695
        %v1159 = vpow.pop %v1158
        %v1160 = vmul.f32 %v1134, 1.442695
        %v1161 = vpow.pop %v1160
        %v1162 = vmul.f32 %v1135, 1.442695
        %v1163 = vpow.pop %v1162
        %v1164 = vmul.f32 %v1136, 1.442695
        %v1165 = vpow.pop %v1164
        %v1166 = vmul.f32 %v1137, 1.442695
        %v1167 = vpow.pop %v1166
        %v1168 = vmul.f32 %v1138, 1.442695
        %v1169 = vpow.pop %v1168
        %v1170 = vmul.f32 %v1139, 1.442695
        %v1171 = vpow.pop %v1170
        %v1172 = vmul.f32 %v1140, 1.442695
        %v1173 = vpow.pop %v1172
        %v1174 = vmul.f32 %v1141, 1.442695
        %v1175 = vpow.pop %v1174
        %v1176 = vmul.f32 %v1142, 1.442695
        %v1177 = vpow.pop %v1176
        %v1178 = vmul.f32 %v1143, 1.442695
        %v1179 = vpow.pop %v1178
        %v1180 = vmul.f32 %v1144, 1.442695
        %v1181 = vpow.pop %v1180
        %v1182 = vmul.f32 %v1145, 1.442695
        %v1183 = vpow.pop %v1182
        %v1184 = vmul.f32 %v1146, 1.442695
        %v1185 = vpow.pop %v1184
        %v1186 = vmul.f32 %v1147, 1.442695
        %v1187 = vpow.pop %v1186
        %v1188 = vmul.f32 %v1148, 1.442695
        %v1189 = vpow.pop %v1188
        %v1190 = vmul.f32 %v1149, 1.442695
        %v1191 = vpow.pop %v1190
        %v1192 = vmul.f32 %v1150, 1.442695
        %v1193 = vpow.pop %v1192
        %v1194 = vmul.f32 %v1151, 1.442695
        %v1195 = vpow.pop %v1194
        %v1196 = vmul.f32 %v1152, 1.442695
        %v1197 = vpow.pop %v1196
        %v1198 = vmul.f32 %v1153, 1.442695
        %v1199 = vpow.pop %v1198
        %v1200 = vmul.f32 %v1154, 1.442695
        %v1201 = vpow.pop %v1200
        %v1202 = vmul.f32 %v1155, 1.442695
        %v1203 = vpow.pop %v1202
        %v1204 = vmul.f32 %v1156, 1.442695
        %v1205 = vpow.pop %v1204
        %v1206 = vmul.f32 %v1157, 1.442695
        %v1207 = vpow.pop %v1206
        %1233 = vrot.lane.b32.xlu0 %v1159, 124
        %v1234 = vpop.permute.xlu0 %1233
        %1235 = vrot.lane.b32.xlu0 %v1161, 124
        %v1236 = vpop.permute.xlu0 %1235
        %1237 = vrot.lane.b32.xlu0 %v1163, 124
        %v1238 = vpop.permute.xlu0 %1237
        %1239 = vrot.lane.b32.xlu0 %v1165, 124
        %v1240 = vpop.permute.xlu0 %1239
        %1241 = vrot.lane.b32.xlu0 %v1167, 124
        %v1242 = vpop.permute.xlu0 %1241
        %1243 = vrot.lane.b32.xlu0 %v1169, 124
        %v1244 = vpop.permute.xlu0 %1243
        %1245 = vrot.lane.b32.xlu0 %v1171, 124
        %v1246 = vpop.permute.xlu0 %1245
        %1247 = vrot.lane.b32.xlu0 %v1173, 124
        %v1248 = vpop.permute.xlu0 %1247
        %1249 = vrot.lane.b32.xlu0 %v1175, 124
        %v1250 = vpop.permute.xlu0 %1249
        %1251 = vrot.lane.b32.xlu0 %v1177, 124
        %v1252 = vpop.permute.xlu0 %1251
        %1253 = vrot.lane.b32.xlu0 %v1179, 124
        %v1254 = vpop.permute.xlu0 %1253
        %1255 = vrot.lane.b32.xlu0 %v1181, 124
        %v1256 = vpop.permute.xlu0 %1255
        %1257 = vrot.lane.b32.xlu0 %v1183, 124
        %v1258 = vpop.permute.xlu0 %1257
        %1259 = vrot.lane.b32.xlu0 %v1185, 124
        %v1260 = vpop.permute.xlu0 %1259
        %1261 = vrot.lane.b32.xlu0 %v1187, 124
        %v1262 = vpop.permute.xlu0 %1261
        %1263 = vrot.lane.b32.xlu0 %v1189, 124
        %v1264 = vpop.permute.xlu0 %1263
        %1265 = vrot.lane.b32.xlu0 %v1191, 124
        %v1266 = vpop.permute.xlu0 %1265
        %1267 = vrot.lane.b32.xlu0 %v1193, 124
        %v1268 = vpop.permute.xlu0 %1267
        %1269 = vrot.lane.b32.xlu0 %v1195, 124
        %v1270 = vpop.permute.xlu0 %1269
        %1271 = vrot.lane.b32.xlu0 %v1197, 124
        %v1272 = vpop.permute.xlu0 %1271
        %1273 = vrot.lane.b32.xlu0 %v1199, 124
        %v1274 = vpop.permute.xlu0 %1273
        %1275 = vrot.lane.b32.xlu0 %v1201, 124
        %v1276 = vpop.permute.xlu0 %1275
        %1277 = vrot.lane.b32.xlu0 %v1203, 124
        %v1278 = vpop.permute.xlu0 %1277
        %1279 = vrot.lane.b32.xlu0 %v1205, 124
        %v1280 = vpop.permute.xlu0 %1279
        %1281 = vrot.lane.b32.xlu0 %v1207, 124
        %v1282 = vpop.permute.xlu0 %1281
        %vm1308 = vcmask 31744
        %v1309 = vsel %vm1308, %v1234, 0.0
        %1310 = vadd.xlane.f32.xlu0 %v1309
        %v1311 = vpop.xlane.xlu0 %1310
        %v1312 = vsel %vm1308, %v1236, 0.0
        %1313 = vadd.xlane.f32.xlu0 %v1312
        %v1314 = vpop.xlane.xlu0 %1313
        %v1315 = vsel %vm1308, %v1238, 0.0
        %1316 = vadd.xlane.f32.xlu0 %v1315
        %v1317 = vpop.xlane.xlu0 %1316
        %v1318 = vsel %vm1308, %v1240, 0.0
        %1319 = vadd.xlane.f32.xlu0 %v1318
        %v1320 = vpop.xlane.xlu0 %1319
        %v1321 = vsel %vm1308, %v1242, 0.0
        %1322 = vadd.xlane.f32.xlu0 %v1321
        %v1323 = vpop.xlane.xlu0 %1322
        %v1324 = vsel %vm1308, %v1244, 0.0
        %1325 = vadd.xlane.f32.xlu0 %v1324
        %v1326 = vpop.xlane.xlu0 %1325
        %v1327 = vsel %vm1308, %v1246, 0.0
        %1328 = vadd.xlane.f32.xlu0 %v1327
        %v1329 = vpop.xlane.xlu0 %1328
        %v1330 = vsel %vm1308, %v1248, 0.0
        %1331 = vadd.xlane.f32.xlu0 %v1330
        %v1332 = vpop.xlane.xlu0 %1331
        %v1333 = vsel %vm1308, %v1250, 0.0
        %1334 = vadd.xlane.f32.xlu0 %v1333
        %v1335 = vpop.xlane.xlu0 %1334
        %v1336 = vsel %vm1308, %v1252, 0.0
        %1337 = vadd.xlane.f32.xlu0 %v1336
        %v1338 = vpop.xlane.xlu0 %1337
        %v1339 = vsel %vm1308, %v1254, 0.0
        %1340 = vadd.xlane.f32.xlu0 %v1339
        %v1341 = vpop.xlane.xlu0 %1340
        %v1342 = vsel %vm1308, %v1256, 0.0
        %1343 = vadd.xlane.f32.xlu0 %v1342
        %v1344 = vpop.xlane.xlu0 %1343
        %v1345 = vsel %vm1308, %v1258, 0.0
        %1346 = vadd.xlane.f32.xlu0 %v1345
        %v1347 = vpop.xlane.xlu0 %1346
        %v1348 = vsel %vm1308, %v1260, 0.0
        %1349 = vadd.xlane.f32.xlu0 %v1348
        %v1350 = vpop.xlane.xlu0 %1349
        %v1351 = vsel %vm1308, %v1262, 0.0
        %1352 = vadd.xlane.f32.xlu0 %v1351
        %v1353 = vpop.xlane.xlu0 %1352
        %v1354 = vsel %vm1308, %v1264, 0.0
        %1355 = vadd.xlane.f32.xlu0 %v1354
        %v1356 = vpop.xlane.xlu0 %1355
        %v1357 = vsel %vm1308, %v1266, 0.0
        %1358 = vadd.xlane.f32.xlu0 %v1357
        %v1359 = vpop.xlane.xlu0 %1358
        %v1360 = vsel %vm1308, %v1268, 0.0
        %1361 = vadd.xlane.f32.xlu0 %v1360
        %v1362 = vpop.xlane.xlu0 %1361
        %v1363 = vsel %vm1308, %v1270, 0.0
        %1364 = vadd.xlane.f32.xlu0 %v1363
        %v1365 = vpop.xlane.xlu0 %1364
        %v1366 = vsel %vm1308, %v1272, 0.0
        %1367 = vadd.xlane.f32.xlu0 %v1366
        %v1368 = vpop.xlane.xlu0 %1367
        %v1369 = vsel %vm1308, %v1274, 0.0
        %1370 = vadd.xlane.f32.xlu0 %v1369
        %v1371 = vpop.xlane.xlu0 %1370
        %v1372 = vsel %vm1308, %v1276, 0.0
        %1373 = vadd.xlane.f32.xlu0 %v1372
        %v1374 = vpop.xlane.xlu0 %1373
        %v1375 = vsel %vm1308, %v1278, 0.0
        %1376 = vadd.xlane.f32.xlu0 %v1375
        %v1377 = vpop.xlane.xlu0 %1376
        %v1378 = vsel %vm1308, %v1280, 0.0
        %1379 = vadd.xlane.f32.xlu0 %v1378
        %v1380 = vpop.xlane.xlu0 %1379
        %v1381 = vsel %vm1308, %v1282, 0.0
        %1382 = vadd.xlane.f32.xlu0 %v1381
        %v1383 = vpop.xlane.xlu0 %1382
        %v1384 = vrcp.pop %v1311
        %v1385 = vrcp.pop %v1314
        %v1386 = vrcp.pop %v1317
        %v1387 = vrcp.pop %v1320
        %v1388 = vrcp.pop %v1323
        %v1389 = vrcp.pop %v1326
        %v1390 = vrcp.pop %v1329
        %v1391 = vrcp.pop %v1332
        %v1392 = vrcp.pop %v1335
        %v1393 = vrcp.pop %v1338
        %v1394 = vrcp.pop %v1341
        %v1395 = vrcp.pop %v1344
        %v1396 = vrcp.pop %v1347
        %v1397 = vrcp.pop %v1350
        %v1398 = vrcp.pop %v1353
        %v1399 = vrcp.pop %v1356
        %v1400 = vrcp.pop %v1359
        %v1401 = vrcp.pop %v1362
        %v1402 = vrcp.pop %v1365
        %v1403 = vrcp.pop %v1368
        %v1404 = vrcp.pop %v1371
        %v1405 = vrcp.pop %v1374
        %v1406 = vrcp.pop %v1377
        %v1407 = vrcp.pop %v1380
        %v1408 = vrcp.pop %v1383
        %v1409 = vmul.f32 %v1159, %v1384
        %v1410 = vmul.f32 %v1161, %v1385
        %v1411 = vmul.f32 %v1163, %v1386
        %v1412 = vmul.f32 %v1165, %v1387
        %v1413 = vmul.f32 %v1167, %v1388
        %v1414 = vmul.f32 %v1169, %v1389
        %v1415 = vmul.f32 %v1171, %v1390
        %v1416 = vmul.f32 %v1173, %v1391
        %v1417 = vmul.f32 %v1175, %v1392
        %v1418 = vmul.f32 %v1177, %v1393
        %v1419 = vmul.f32 %v1179, %v1394
        %v1420 = vmul.f32 %v1181, %v1395
        %v1421 = vmul.f32 %v1183, %v1396
        %v1422 = vmul.f32 %v1185, %v1397
        %v1423 = vmul.f32 %v1187, %v1398
        %v1424 = vmul.f32 %v1189, %v1399
        %v1425 = vmul.f32 %v1191, %v1400
        %v1426 = vmul.f32 %v1193, %v1401
        %v1427 = vmul.f32 %v1195, %v1402
        %v1428 = vmul.f32 %v1197, %v1403
        %v1429 = vmul.f32 %v1199, %v1404
        %v1430 = vmul.f32 %v1201, %v1405
        %v1431 = vmul.f32 %v1203, %v1406
        %v1432 = vmul.f32 %v1205, %v1407
        %v1433 = vmul.f32 %v1207, %v1408
        %v1434 = vpack.c.bf16 %v776, %v772
        %v1435 = vpack.c.bf16 %v786, %v782
        %v1436 = vpack.c.bf16 %v796, %v792
        %v1437 = vpack.c.bf16 %v806, %v802
        %v1438 = vpack.c.bf16 %v816, %v812
        %v1439 = vpack.c.bf16 %v826, %v822
        %v1440 = vpack.c.bf16 %v836, %v832
        %v1441 = vpack.c.bf16 %v846, %v842
        %v1442 = vpack.c.bf16 %v856, %v852
        %v1443 = vpack.c.bf16 %v866, %v862
        %v1444 = vpack.c.bf16 %v876, %v872
        %v1445 = vpack.c.bf16 %v886, %v882
        %v1446 = vpack.c.bf16 %v892, %v892
        %v1447 = vld [vmem:[#allocation7] sm:$0xff]
        %v1448 = vld [vmem:[#allocation7 + $0x8] sm:$0xff]
        %v1449 = vld [vmem:[#allocation7 + $0x10] sm:$0xff]
        %v1450 = vld [vmem:[#allocation7 + $0x18] sm:$0xff]
        %v1451 = vld [vmem:[#allocation7 + $0x20] sm:$0xff]
        %v1452 = vld [vmem:[#allocation7 + $0x28] sm:$0xff]
        %v1453 = vld [vmem:[#allocation7 + $0x30] sm:$0xff]
        %v1454 = vld [vmem:[#allocation7 + $0x38] sm:$0xff]
        %v1455 = vld [vmem:[#allocation7 + $0x40] sm:$0xff]
        %v1456 = vld [vmem:[#allocation7 + $0x48] sm:$0xff]
        %v1457 = vld [vmem:[#allocation7 + $0x50] sm:$0xff]
        %v1458 = vld [vmem:[#allocation7 + $0x58] sm:$0xff]
        %v1459 = vld [vmem:[#allocation7 + $0x60] sm:$0xff]
        %v1460 = vld [vmem:[#allocation7 + $0x68] sm:$0xff]
        %v1461 = vld [vmem:[#allocation7 + $0x70] sm:$0xff]
        %v1462 = vld [vmem:[#allocation7 + $0x78] sm:$0xff]
        %v1463 = vld [vmem:[#allocation7 + $0x80] sm:$0xff]
        %v1464 = vld [vmem:[#allocation7 + $0x88] sm:$0xff]
        %v1465 = vld [vmem:[#allocation7 + $0x90] sm:$0xff]
        %v1466 = vld [vmem:[#allocation7 + $0x98] sm:$0xff]
        %v1467 = vld [vmem:[#allocation7 + $0xa0] sm:$0xff]
        %v1468 = vld [vmem:[#allocation7 + $0xa8] sm:$0xff]
        %v1469 = vld [vmem:[#allocation7 + $0xb0] sm:$0xff]
        %v1470 = vld [vmem:[#allocation7 + $0xb8] sm:$0xff]
        %v1471 = vld [vmem:[#allocation7 + $0xc0] sm:$0xff]
        %v1472 = vld [vmem:[#allocation7 + $0xc8] sm:$0xff]
        %v1473 = vld [vmem:[#allocation7 + $0xd0] sm:$0xff]
        %v1474 = vld [vmem:[#allocation7 + $0xd8] sm:$0xff]
        %v1475 = vld [vmem:[#allocation7 + $0xe0] sm:$0xff]
        %v1476 = vld [vmem:[#allocation7 + $0xe8] sm:$0xff]
        %v1477 = vld [vmem:[#allocation7 + $0xf0] sm:$0xff]
        %v1478 = vld [vmem:[#allocation7 + $0xf8] sm:$0xff]
        %v1511 = vunpack.c.l.b16 %v1447
        %v1512 = vunpack.c.h.b16 %v1447
        %v1513 = vunpack.c.l.b16 %v1448
        %v1514 = vunpack.c.h.b16 %v1448
        %v1515 = vunpack.c.l.b16 %v1449
        %v1516 = vunpack.c.h.b16 %v1449
        %v1517 = vunpack.c.l.b16 %v1450
        %v1518 = vunpack.c.h.b16 %v1450
        %v1519 = vunpack.c.l.b16 %v1451
        %v1520 = vunpack.c.h.b16 %v1451
        %v1521 = vunpack.c.l.b16 %v1452
        %v1522 = vunpack.c.h.b16 %v1452
        %v1523 = vunpack.c.l.b16 %v1453
        %v1524 = vunpack.c.h.b16 %v1453
        %v1525 = vunpack.c.l.b16 %v1454
        %v1526 = vunpack.c.h.b16 %v1454
        %v1527 = vunpack.c.l.b16 %v1455
        %v1528 = vunpack.c.h.b16 %v1455
        %v1529 = vunpack.c.l.b16 %v1456
        %v1530 = vunpack.c.h.b16 %v1456
        %v1531 = vunpack.c.l.b16 %v1457
        %v1532 = vunpack.c.h.b16 %v1457
        %v1533 = vunpack.c.l.b16 %v1458
        %v1534 = vunpack.c.h.b16 %v1458
        %v1535 = vunpack.c.l.b16 %v1459
        %v1536 = vunpack.c.h.b16 %v1459
        %v1537 = vunpack.c.l.b16 %v1460
        %v1538 = vunpack.c.h.b16 %v1460
        %v1539 = vunpack.c.l.b16 %v1461
        %v1540 = vunpack.c.h.b16 %v1461
        %v1541 = vunpack.c.l.b16 %v1462
        %v1542 = vunpack.c.h.b16 %v1462
        %v1543 = vunpack.c.l.b16 %v1463
        %v1544 = vunpack.c.h.b16 %v1463
        %v1545 = vunpack.c.l.b16 %v1464
        %v1546 = vunpack.c.h.b16 %v1464
        %v1547 = vunpack.c.l.b16 %v1465
        %v1548 = vunpack.c.h.b16 %v1465
        %v1549 = vunpack.c.l.b16 %v1466
        %v1550 = vunpack.c.h.b16 %v1466
        %v1551 = vunpack.c.l.b16 %v1467
        %v1552 = vunpack.c.h.b16 %v1467
        %v1553 = vunpack.c.l.b16 %v1468
        %v1554 = vunpack.c.h.b16 %v1468
        %v1555 = vunpack.c.l.b16 %v1469
        %v1556 = vunpack.c.h.b16 %v1469
        %v1557 = vunpack.c.l.b16 %v1470
        %v1558 = vunpack.c.h.b16 %v1470
        %v1559 = vunpack.c.l.b16 %v1471
        %v1560 = vunpack.c.h.b16 %v1471
        %v1561 = vunpack.c.l.b16 %v1472
        %v1562 = vunpack.c.h.b16 %v1472
        %v1563 = vunpack.c.l.b16 %v1473
        %v1564 = vunpack.c.h.b16 %v1473
        %v1565 = vunpack.c.l.b16 %v1474
        %v1566 = vunpack.c.h.b16 %v1474
        %v1567 = vunpack.c.l.b16 %v1475
        %v1568 = vunpack.c.h.b16 %v1475
        %v1569 = vunpack.c.l.b16 %v1476
        %v1570 = vunpack.c.h.b16 %v1476
        %v1571 = vunpack.c.l.b16 %v1477
        %v1572 = vunpack.c.h.b16 %v1477
        %v1573 = vunpack.c.l.b16 %v1478
        %v1574 = vunpack.c.h.b16 %v1478
        %v1575 = vpack.c.b16 %v1515, %v1511
        %v1576 = vpack.c.b16 %v1516, %v1512
        %v1577 = vpack.c.b16 %v1517, %v1513
        %v1578 = vpack.c.b16 %v1518, %v1514
        %v1579 = vpack.c.b16 %v1523, %v1519
        %v1580 = vpack.c.b16 %v1524, %v1520
        %v1581 = vpack.c.b16 %v1525, %v1521
        %v1582 = vpack.c.b16 %v1526, %v1522
        %v1583 = vpack.c.b16 %v1531, %v1527
        %v1584 = vpack.c.b16 %v1532, %v1528
        %v1585 = vpack.c.b16 %v1533, %v1529
        %v1586 = vpack.c.b16 %v1534, %v1530
        %v1587 = vpack.c.b16 %v1539, %v1535
        %v1588 = vpack.c.b16 %v1540, %v1536
        %v1589 = vpack.c.b16 %v1541, %v1537
        %v1590 = vpack.c.b16 %v1542, %v1538
        %v1591 = vpack.c.b16 %v1547, %v1543
        %v1592 = vpack.c.b16 %v1548, %v1544
        %v1593 = vpack.c.b16 %v1549, %v1545
        %v1594 = vpack.c.b16 %v1550, %v1546
        %v1595 = vpack.c.b16 %v1555, %v1551
        %v1596 = vpack.c.b16 %v1556, %v1552
        %v1597 = vpack.c.b16 %v1557, %v1553
        %v1598 = vpack.c.b16 %v1558, %v1554
        %v1599 = vpack.c.b16 %v1563, %v1559
        %v1600 = vpack.c.b16 %v1564, %v1560
        %v1601 = vpack.c.b16 %v1565, %v1561
        %v1602 = vpack.c.b16 %v1566, %v1562
        %v1603 = vpack.c.b16 %v1571, %v1567
        %v1604 = vpack.c.b16 %v1572, %v1568
        %v1605 = vpack.c.b16 %v1573, %v1569
        %v1606 = vpack.c.b16 %v1574, %v1570
        %1639 = vmatprep.subr.bf16.mxu0 %v1604
        %1640 = vmatpush1.bf16.msra.mxu0 %v1603
        %1641 = vmatprep.subr.bf16.mxu0 %v1600
        %1642 = vmatpush1.bf16.msra.mxu0 %v1599
        %1643 = vmatprep.subr.bf16.mxu0 %v1596
        %1644 = vmatpush1.bf16.msra.mxu0 %v1595
        %1645 = vmatprep.subr.bf16.mxu0 %v1592
        %1646 = vmatpush1.bf16.msra.mxu0 %v1591
        %1647 = vmatprep.subr.bf16.mxu0 %v1588
        %1648 = vmatpush1.bf16.msra.mxu0 %v1587
        %1649 = vmatprep.subr.bf16.mxu0 %v1584
        %1650 = vmatpush1.bf16.msra.mxu0 %v1583
        %1651 = vmatprep.subr.bf16.mxu0 %v1580
        %1652 = vmatpush1.bf16.msra.mxu0 %v1579
        %1653 = vmatprep.subr.bf16.mxu0 %v1576
        %1654 = vmatpush1.bf16.msra.mxu0 %v1575
        %1655 = vmatprep.subr.bf16.mxu0 0
        %1656 = vmatpush2.bf16.msra.mxu0 0
        %1657 = vmatprep.subr.bf16.mxu0 0
        %1658 = vmatpush2.bf16.msra.mxu0 0
        %1659 = vmatprep.subr.bf16.mxu0 0
        %1660 = vmatpush2.bf16.msra.mxu0 0
        %1661 = vmatprep.subr.bf16.mxu0 0
        %1662 = vmatpush2.bf16.msra.mxu0 0
        %1663 = vmatprep.subr.bf16.mxu0 0
        %1664 = vmatpush2.bf16.msra.mxu0 0
        %1665 = vmatprep.subr.bf16.mxu0 0
        %1666 = vmatpush2.bf16.msra.mxu0 0
        %1667 = vmatprep.subr.bf16.mxu0 0
        %1668 = vmatpush2.bf16.msra.mxu0 0
        %1669 = vmatprep.subr.bf16.mxu0 0
        %1670 = vmatpush2.bf16.msra.mxu0 0
        %1671 = vmatprep.mubr.bf16.mxu0 0
        %1672 = vmatmul.mubr.bf16.gmra.mxu0 %v1434
        %v1673 = vpop.f32.mrf.mxu0
        %v1674 = vadd.f32 0.0, %v1673
        %v1675 = vpop.f32.mrf.mxu0
        %v1676 = vadd.f32 0.0, %v1675
        %v1677 = vpop.f32.mrf.mxu0
        %v1678 = vadd.f32 0.0, %v1677
        %v1679 = vpop.f32.mrf.mxu0
        %v1680 = vadd.f32 0.0, %v1679
        %1681 = vmatprep.mubr.bf16.mxu0 0
        %1682 = vmatmul.mubr.bf16.gmra.mxu0 %v1435
        %v1683 = vpop.f32.mrf.mxu0
        %v1684 = vadd.f32 0.0, %v1683
        %v1685 = vpop.f32.mrf.mxu0
        %v1686 = vadd.f32 0.0, %v1685
        %v1687 = vpop.f32.mrf.mxu0
        %v1688 = vadd.f32 0.0, %v1687
        %v1689 = vpop.f32.mrf.mxu0
        %v1690 = vadd.f32 0.0, %v1689
        %1691 = vmatprep.mubr.bf16.mxu0 0
        %1692 = vmatmul.mubr.bf16.gmra.mxu0 %v1436
        %v1693 = vpop.f32.mrf.mxu0
        %v1694 = vadd.f32 0.0, %v1693
        %v1695 = vpop.f32.mrf.mxu0
        %v1696 = vadd.f32 0.0, %v1695
        %v1697 = vpop.f32.mrf.mxu0
        %v1698 = vadd.f32 0.0, %v1697
        %v1699 = vpop.f32.mrf.mxu0
        %v1700 = vadd.f32 0.0, %v1699
        %1701 = vmatprep.mubr.bf16.mxu0 0
        %1702 = vmatmul.mubr.bf16.gmra.mxu0 %v1437
        %v1703 = vpop.f32.mrf.mxu0
        %v1704 = vadd.f32 0.0, %v1703
        %v1705 = vpop.f32.mrf.mxu0
        %v1706 = vadd.f32 0.0, %v1705
        %v1707 = vpop.f32.mrf.mxu0
        %v1708 = vadd.f32 0.0, %v1707
        %v1709 = vpop.f32.mrf.mxu0
        %v1710 = vadd.f32 0.0, %v1709
        %1711 = vmatprep.mubr.bf16.mxu0 0
        %1712 = vmatmul.mubr.bf16.gmra.mxu0 %v1438
        %v1713 = vpop.f32.mrf.mxu0
        %v1714 = vadd.f32 0.0, %v1713
        %v1715 = vpop.f32.mrf.mxu0
        %v1716 = vadd.f32 0.0, %v1715
        %v1717 = vpop.f32.mrf.mxu0
        %v1718 = vadd.f32 0.0, %v1717
        %v1719 = vpop.f32.mrf.mxu0
        %v1720 = vadd.f32 0.0, %v1719
        %1721 = vmatprep.mubr.bf16.mxu0 0
        %1722 = vmatmul.mubr.bf16.gmra.mxu0 %v1439
        %v1723 = vpop.f32.mrf.mxu0
        %v1724 = vadd.f32 0.0, %v1723
        %v1725 = vpop.f32.mrf.mxu0
        %v1726 = vadd.f32 0.0, %v1725
        %v1727 = vpop.f32.mrf.mxu0
        %v1728 = vadd.f32 0.0, %v1727
        %v1729 = vpop.f32.mrf.mxu0
        %v1730 = vadd.f32 0.0, %v1729
        %1731 = vmatprep.mubr.bf16.mxu0 0
        %1732 = vmatmul.mubr.bf16.gmra.mxu0 %v1440
        %v1733 = vpop.f32.mrf.mxu0
        %v1734 = vadd.f32 0.0, %v1733
        %v1735 = vpop.f32.mrf.mxu0
        %v1736 = vadd.f32 0.0, %v1735
        %v1737 = vpop.f32.mrf.mxu0
        %v1738 = vadd.f32 0.0, %v1737
        %v1739 = vpop.f32.mrf.mxu0
        %v1740 = vadd.f32 0.0, %v1739
        %1741 = vmatprep.mubr.bf16.mxu0 0
        %1742 = vmatmul.mubr.bf16.gmra.mxu0 %v1441
        %v1743 = vpop.f32.mrf.mxu0
        %v1744 = vadd.f32 0.0, %v1743
        %v1745 = vpop.f32.mrf.mxu0
        %v1746 = vadd.f32 0.0, %v1745
        %v1747 = vpop.f32.mrf.mxu0
        %v1748 = vadd.f32 0.0, %v1747
        %v1749 = vpop.f32.mrf.mxu0
        %v1750 = vadd.f32 0.0, %v1749
        %1751 = vmatprep.mubr.bf16.mxu0 0
        %1752 = vmatmul.mubr.bf16.gmra.mxu0 %v1442
        %v1753 = vpop.f32.mrf.mxu0
        %v1754 = vadd.f32 0.0, %v1753
        %v1755 = vpop.f32.mrf.mxu0
        %v1756 = vadd.f32 0.0, %v1755
        %v1757 = vpop.f32.mrf.mxu0
        %v1758 = vadd.f32 0.0, %v1757
        %v1759 = vpop.f32.mrf.mxu0
        %v1760 = vadd.f32 0.0, %v1759
        %1761 = vmatprep.mubr.bf16.mxu0 0
        %1762 = vmatmul.mubr.bf16.gmra.mxu0 %v1443
        %v1763 = vpop.f32.mrf.mxu0
        %v1764 = vadd.f32 0.0, %v1763
        %v1765 = vpop.f32.mrf.mxu0
        %v1766 = vadd.f32 0.0, %v1765
        %v1767 = vpop.f32.mrf.mxu0
        %v1768 = vadd.f32 0.0, %v1767
        %v1769 = vpop.f32.mrf.mxu0
        %v1770 = vadd.f32 0.0, %v1769
        %1771 = vmatprep.mubr.bf16.mxu0 0
        %1772 = vmatmul.mubr.bf16.gmra.mxu0 %v1444
        %v1773 = vpop.f32.mrf.mxu0
        %v1774 = vadd.f32 0.0, %v1773
        %v1775 = vpop.f32.mrf.mxu0
        %v1776 = vadd.f32 0.0, %v1775
        %v1777 = vpop.f32.mrf.mxu0
        %v1778 = vadd.f32 0.0, %v1777
        %v1779 = vpop.f32.mrf.mxu0
        %v1780 = vadd.f32 0.0, %v1779
        %1781 = vmatprep.mubr.bf16.mxu0 0
        %1782 = vmatmul.mubr.bf16.gmra.mxu0 %v1445
        %v1783 = vpop.f32.mrf.mxu0
        %v1784 = vadd.f32 0.0, %v1783
        %v1785 = vpop.f32.mrf.mxu0
        %v1786 = vadd.f32 0.0, %v1785
        %v1787 = vpop.f32.mrf.mxu0
        %v1788 = vadd.f32 0.0, %v1787
        %v1789 = vpop.f32.mrf.mxu0
        %v1790 = vadd.f32 0.0, %v1789
        %1791 = vmatprep.mubr.bf16.mxu0 0
        %1792 = vmatmul.mubr.bf16.gmra.mxu0 %v1446
        %v1793 = vpop.f32.mrf.mxu0
        %v1794 = vadd.f32 0.0, %v1793
        %v1795 = vpop.f32.mrf.mxu0
        %v1796 = vadd.f32 0.0, %v1795
        %v1797 = vpop.f32.mrf.mxu0
        %v1798 = vpop.f32.mrf.mxu0
        %1799 = vdwg.mxu0
        %1800 = vmatprep.subr.bf16.mxu0 %v1606
        %1801 = vmatpush1.bf16.msra.mxu0 %v1605
        %1802 = vmatprep.subr.bf16.mxu0 %v1602
        %1803 = vmatpush1.bf16.msra.mxu0 %v1601
        %1804 = vmatprep.subr.bf16.mxu0 %v1598
        %1805 = vmatpush1.bf16.msra.mxu0 %v1597
        %1806 = vmatprep.subr.bf16.mxu0 %v1594
        %1807 = vmatpush1.bf16.msra.mxu0 %v1593
        %1808 = vmatprep.subr.bf16.mxu0 %v1590
        %1809 = vmatpush1.bf16.msra.mxu0 %v1589
        %1810 = vmatprep.subr.bf16.mxu0 %v1586
        %1811 = vmatpush1.bf16.msra.mxu0 %v1585
        %1812 = vmatprep.subr.bf16.mxu0 %v1582
        %1813 = vmatpush1.bf16.msra.mxu0 %v1581
        %1814 = vmatprep.subr.bf16.mxu0 %v1578
        %1815 = vmatpush1.bf16.msra.mxu0 %v1577
        %1816 = vmatprep.subr.bf16.mxu0 0
        %1817 = vmatpush2.bf16.msra.mxu0 0
        %1818 = vmatprep.subr.bf16.mxu0 0
        %1819 = vmatpush2.bf16.msra.mxu0 0
        %1820 = vmatprep.subr.bf16.mxu0 0
        %1821 = vmatpush2.bf16.msra.mxu0 0
        %1822 = vmatprep.subr.bf16.mxu0 0
        %1823 = vmatpush2.bf16.msra.mxu0 0
        %1824 = vmatprep.subr.bf16.mxu0 0
        %1825 = vmatpush2.bf16.msra.mxu0 0
        %1826 = vmatprep.subr.bf16.mxu0 0
        %1827 = vmatpush2.bf16.msra.mxu0 0
        %1828 = vmatprep.subr.bf16.mxu0 0
        %1829 = vmatpush2.bf16.msra.mxu0 0
        %1830 = vmatprep.subr.bf16.mxu0 0
        %1831 = vmatpush2.bf16.msra.mxu0 0
        %1832 = vmatprep.mubr.bf16.mxu0 0
        %1833 = vmatmul.mubr.bf16.gmra.mxu0 %v1434
        %v1834 = vpop.f32.mrf.mxu0
        %v1835 = vadd.f32 0.0, %v1834
        %v1836 = vpop.f32.mrf.mxu0
        %v1837 = vadd.f32 0.0, %v1836
        %v1838 = vpop.f32.mrf.mxu0
        %v1839 = vadd.f32 0.0, %v1838
        %v1840 = vpop.f32.mrf.mxu0
        %v1841 = vadd.f32 0.0, %v1840
        %1842 = vmatprep.mubr.bf16.mxu0 0
        %1843 = vmatmul.mubr.bf16.gmra.mxu0 %v1435
        %v1844 = vpop.f32.mrf.mxu0
        %v1845 = vadd.f32 0.0, %v1844
        %v1846 = vpop.f32.mrf.mxu0
        %v1847 = vadd.f32 0.0, %v1846
        %v1848 = vpop.f32.mrf.mxu0
        %v1849 = vadd.f32 0.0, %v1848
        %v1850 = vpop.f32.mrf.mxu0
        %v1851 = vadd.f32 0.0, %v1850
        %1852 = vmatprep.mubr.bf16.mxu0 0
        %1853 = vmatmul.mubr.bf16.gmra.mxu0 %v1436
        %v1854 = vpop.f32.mrf.mxu0
        %v1855 = vadd.f32 0.0, %v1854
        %v1856 = vpop.f32.mrf.mxu0
        %v1857 = vadd.f32 0.0, %v1856
        %v1858 = vpop.f32.mrf.mxu0
        %v1859 = vadd.f32 0.0, %v1858
        %v1860 = vpop.f32.mrf.mxu0
        %v1861 = vadd.f32 0.0, %v1860
        %1862 = vmatprep.mubr.bf16.mxu0 0
        %1863 = vmatmul.mubr.bf16.gmra.mxu0 %v1437
        %v1864 = vpop.f32.mrf.mxu0
        %v1865 = vadd.f32 0.0, %v1864
        %v1866 = vpop.f32.mrf.mxu0
        %v1867 = vadd.f32 0.0, %v1866
        %v1868 = vpop.f32.mrf.mxu0
        %v1869 = vadd.f32 0.0, %v1868
        %v1870 = vpop.f32.mrf.mxu0
        %v1871 = vadd.f32 0.0, %v1870
        %1872 = vmatprep.mubr.bf16.mxu0 0
        %1873 = vmatmul.mubr.bf16.gmra.mxu0 %v1438
        %v1874 = vpop.f32.mrf.mxu0
        %v1875 = vadd.f32 0.0, %v1874
        %v1876 = vpop.f32.mrf.mxu0
        %v1877 = vadd.f32 0.0, %v1876
        %v1878 = vpop.f32.mrf.mxu0
        %v1879 = vadd.f32 0.0, %v1878
        %v1880 = vpop.f32.mrf.mxu0
        %v1881 = vadd.f32 0.0, %v1880
        %1882 = vmatprep.mubr.bf16.mxu0 0
        %1883 = vmatmul.mubr.bf16.gmra.mxu0 %v1439
        %v1884 = vpop.f32.mrf.mxu0
        %v1885 = vadd.f32 0.0, %v1884
        %v1886 = vpop.f32.mrf.mxu0
        %v1887 = vadd.f32 0.0, %v1886
        %v1888 = vpop.f32.mrf.mxu0
        %v1889 = vadd.f32 0.0, %v1888
        %v1890 = vpop.f32.mrf.mxu0
        %v1891 = vadd.f32 0.0, %v1890
        %1892 = vmatprep.mubr.bf16.mxu0 0
        %1893 = vmatmul.mubr.bf16.gmra.mxu0 %v1440
        %v1894 = vpop.f32.mrf.mxu0
        %v1895 = vadd.f32 0.0, %v1894
        %v1896 = vpop.f32.mrf.mxu0
        %v1897 = vadd.f32 0.0, %v1896
        %v1898 = vpop.f32.mrf.mxu0
        %v1899 = vadd.f32 0.0, %v1898
        %v1900 = vpop.f32.mrf.mxu0
        %v1901 = vadd.f32 0.0, %v1900
        %1902 = vmatprep.mubr.bf16.mxu0 0
        %1903 = vmatmul.mubr.bf16.gmra.mxu0 %v1441
        %v1904 = vpop.f32.mrf.mxu0
        %v1905 = vadd.f32 0.0, %v1904
        %v1906 = vpop.f32.mrf.mxu0
        %v1907 = vadd.f32 0.0, %v1906
        %v1908 = vpop.f32.mrf.mxu0
        %v1909 = vadd.f32 0.0, %v1908
        %v1910 = vpop.f32.mrf.mxu0
        %v1911 = vadd.f32 0.0, %v1910
        %1912 = vmatprep.mubr.bf16.mxu0 0
        %1913 = vmatmul.mubr.bf16.gmra.mxu0 %v1442
        %v1914 = vpop.f32.mrf.mxu0
        %v1915 = vadd.f32 0.0, %v1914
        %v1916 = vpop.f32.mrf.mxu0
        %v1917 = vadd.f32 0.0, %v1916
        %v1918 = vpop.f32.mrf.mxu0
        %v1919 = vadd.f32 0.0, %v1918
        %v1920 = vpop.f32.mrf.mxu0
        %v1921 = vadd.f32 0.0, %v1920
        %1922 = vmatprep.mubr.bf16.mxu0 0
        %1923 = vmatmul.mubr.bf16.gmra.mxu0 %v1443
        %v1924 = vpop.f32.mrf.mxu0
        %v1925 = vadd.f32 0.0, %v1924
        %v1926 = vpop.f32.mrf.mxu0
        %v1927 = vadd.f32 0.0, %v1926
        %v1928 = vpop.f32.mrf.mxu0
        %v1929 = vadd.f32 0.0, %v1928
        %v1930 = vpop.f32.mrf.mxu0
        %v1931 = vadd.f32 0.0, %v1930
        %1932 = vmatprep.mubr.bf16.mxu0 0
        %1933 = vmatmul.mubr.bf16.gmra.mxu0 %v1444
        %v1934 = vpop.f32.mrf.mxu0
        %v1935 = vadd.f32 0.0, %v1934
        %v1936 = vpop.f32.mrf.mxu0
        %v1937 = vadd.f32 0.0, %v1936
        %v1938 = vpop.f32.mrf.mxu0
        %v1939 = vadd.f32 0.0, %v1938
        %v1940 = vpop.f32.mrf.mxu0
        %v1941 = vadd.f32 0.0, %v1940
        %1942 = vmatprep.mubr.bf16.mxu0 0
        %1943 = vmatmul.mubr.bf16.gmra.mxu0 %v1445
        %v1944 = vpop.f32.mrf.mxu0
        %v1945 = vadd.f32 0.0, %v1944
        %v1946 = vpop.f32.mrf.mxu0
        %v1947 = vadd.f32 0.0, %v1946
        %v1948 = vpop.f32.mrf.mxu0
        %v1949 = vadd.f32 0.0, %v1948
        %v1950 = vpop.f32.mrf.mxu0
        %v1951 = vadd.f32 0.0, %v1950
        %1952 = vmatprep.mubr.bf16.mxu0 0
        %1953 = vmatmul.mubr.bf16.gmra.mxu0 %v1446
        %v1954 = vpop.f32.mrf.mxu0
        %v1955 = vadd.f32 0.0, %v1954
        %v1956 = vpop.f32.mrf.mxu0
        %v1957 = vadd.f32 0.0, %v1956
        %v1958 = vpop.f32.mrf.mxu0
        %v1959 = vpop.f32.mrf.mxu0
        %1960 = vdwg.mxu0
        %1962 = vset.pattern.permute.xlu0 4
        %1963 = vperm.xlu0 %1962, %v1409
        %v1964 = vpop.permute.xlu0 %1963
        %1967 = vset.pattern.permute.xlu0 4
        %1968 = vperm.xlu0 %1967, %v1410
        %v1969 = vpop.permute.xlu0 %1968
        %1972 = vset.pattern.permute.xlu0 4
        %1973 = vperm.xlu0 %1972, %v1411
        %v1974 = vpop.permute.xlu0 %1973
        %1977 = vset.pattern.permute.xlu0 4
        %1978 = vperm.xlu0 %1977, %v1412
        %v1979 = vpop.permute.xlu0 %1978
        %1982 = vset.pattern.permute.xlu0 4
        %1983 = vperm.xlu0 %1982, %v1413
        %v1984 = vpop.permute.xlu0 %1983
        %1987 = vset.pattern.permute.xlu0 4
        %1988 = vperm.xlu0 %1987, %v1414
        %v1989 = vpop.permute.xlu0 %1988
        %1992 = vset.pattern.permute.xlu0 4
        %1993 = vperm.xlu0 %1992, %v1415
        %v1994 = vpop.permute.xlu0 %1993
        %1997 = vset.pattern.permute.xlu0 4
        %1998 = vperm.xlu0 %1997, %v1416
        %v1999 = vpop.permute.xlu0 %1998
        %2002 = vset.pattern.permute.xlu0 4
        %2003 = vperm.xlu0 %2002, %v1417
        %v2004 = vpop.permute.xlu0 %2003
        %2007 = vset.pattern.permute.xlu0 4
        %2008 = vperm.xlu0 %2007, %v1418
        %v2009 = vpop.permute.xlu0 %2008
        %2012 = vset.pattern.permute.xlu0 4
        %2013 = vperm.xlu0 %2012, %v1419
        %v2014 = vpop.permute.xlu0 %2013
        %2017 = vset.pattern.permute.xlu0 4
        %2018 = vperm.xlu0 %2017, %v1420
        %v2019 = vpop.permute.xlu0 %2018
        %2022 = vset.pattern.permute.xlu0 4
        %2023 = vperm.xlu0 %2022, %v1421
        %v2024 = vpop.permute.xlu0 %2023
        %2027 = vset.pattern.permute.xlu0 4
        %2028 = vperm.xlu0 %2027, %v1422
        %v2029 = vpop.permute.xlu0 %2028
        %2032 = vset.pattern.permute.xlu0 4
        %2033 = vperm.xlu0 %2032, %v1423
        %v2034 = vpop.permute.xlu0 %2033
        %2037 = vset.pattern.permute.xlu0 4
        %2038 = vperm.xlu0 %2037, %v1424
        %v2039 = vpop.permute.xlu0 %2038
        %2042 = vset.pattern.permute.xlu0 4
        %2043 = vperm.xlu0 %2042, %v1425
        %v2044 = vpop.permute.xlu0 %2043
        %2047 = vset.pattern.permute.xlu0 4
        %2048 = vperm.xlu0 %2047, %v1426
        %v2049 = vpop.permute.xlu0 %2048
        %2052 = vset.pattern.permute.xlu0 4
        %2053 = vperm.xlu0 %2052, %v1427
        %v2054 = vpop.permute.xlu0 %2053
        %2057 = vset.pattern.permute.xlu0 4
        %2058 = vperm.xlu0 %2057, %v1428
        %v2059 = vpop.permute.xlu0 %2058
        %2062 = vset.pattern.permute.xlu0 4
        %2063 = vperm.xlu0 %2062, %v1429
        %v2064 = vpop.permute.xlu0 %2063
        %2067 = vset.pattern.permute.xlu0 4
        %2068 = vperm.xlu0 %2067, %v1430
        %v2069 = vpop.permute.xlu0 %2068
        %2072 = vset.pattern.permute.xlu0 4
        %2073 = vperm.xlu0 %2072, %v1431
        %v2074 = vpop.permute.xlu0 %2073
        %2077 = vset.pattern.permute.xlu0 4
        %2078 = vperm.xlu0 %2077, %v1432
        %v2079 = vpop.permute.xlu0 %2078
        %2082 = vset.pattern.permute.xlu0 4
        %2083 = vperm.xlu0 %2082, %v1433
        %v2084 = vpop.permute.xlu0 %2083
        %v2086 = vmul.f32 %v1964, %v1674
        %v2087 = vmul.f32 %v1969, %v1678
        %v2088 = vmul.f32 %v1974, %v1684
        %v2089 = vmul.f32 %v1979, %v1688
        %v2090 = vmul.f32 %v1984, %v1694
        %v2091 = vmul.f32 %v1989, %v1698
        %v2092 = vmul.f32 %v1994, %v1704
        %v2093 = vmul.f32 %v1999, %v1708
        %v2094 = vmul.f32 %v2004, %v1714
        %v2095 = vmul.f32 %v2009, %v1718
        %v2096 = vmul.f32 %v2014, %v1724
        %v2097 = vmul.f32 %v2019, %v1728
        %v2098 = vmul.f32 %v2024, %v1734
        %v2099 = vmul.f32 %v2029, %v1738
        %v2100 = vmul.f32 %v2034, %v1744
        %v2101 = vmul.f32 %v2039, %v1748
        %v2102 = vmul.f32 %v2044, %v1754
        %v2103 = vmul.f32 %v2049, %v1758
        %v2104 = vmul.f32 %v2054, %v1764
        %v2105 = vmul.f32 %v2059, %v1768
        %v2106 = vmul.f32 %v2064, %v1774
        %v2107 = vmul.f32 %v2069, %v1778
        %v2108 = vmul.f32 %v2074, %v1784
        %v2109 = vmul.f32 %v2079, %v1788
        %v2110 = vmul.f32 %v2084, %v1794
        %2111 = vset.pattern.permute.xlu0 5
        %2112 = vperm.xlu0 %2111, %v1409
        %v2113 = vpop.permute.xlu0 %2112
        %2115 = vset.pattern.permute.xlu0 5
        %2116 = vperm.xlu0 %2115, %v1410
        %v2117 = vpop.permute.xlu0 %2116
        %2119 = vset.pattern.permute.xlu0 5
        %2120 = vperm.xlu0 %2119, %v1411
        %v2121 = vpop.permute.xlu0 %2120
        %2123 = vset.pattern.permute.xlu0 5
        %2124 = vperm.xlu0 %2123, %v1412
        %v2125 = vpop.permute.xlu0 %2124
        %2127 = vset.pattern.permute.xlu0 5
        %2128 = vperm.xlu0 %2127, %v1413
        %v2129 = vpop.permute.xlu0 %2128
        %2131 = vset.pattern.permute.xlu0 5
        %2132 = vperm.xlu0 %2131, %v1414
        %v2133 = vpop.permute.xlu0 %2132
        %2135 = vset.pattern.permute.xlu0 5
        %2136 = vperm.xlu0 %2135, %v1415
        %v2137 = vpop.permute.xlu0 %2136
        %2139 = vset.pattern.permute.xlu0 5
        %2140 = vperm.xlu0 %2139, %v1416
        %v2141 = vpop.permute.xlu0 %2140
        %2143 = vset.pattern.permute.xlu0 5
        %2144 = vperm.xlu0 %2143, %v1417
        %v2145 = vpop.permute.xlu0 %2144
        %2147 = vset.pattern.permute.xlu0 5
        %2148 = vperm.xlu0 %2147, %v1418
        %v2149 = vpop.permute.xlu0 %2148
        %2151 = vset.pattern.permute.xlu0 5
        %2152 = vperm.xlu0 %2151, %v1419
        %v2153 = vpop.permute.xlu0 %2152
        %2155 = vset.pattern.permute.xlu0 5
        %2156 = vperm.xlu0 %2155, %v1420
        %v2157 = vpop.permute.xlu0 %2156
        %2159 = vset.pattern.permute.xlu0 5
        %2160 = vperm.xlu0 %2159, %v1421
        %v2161 = vpop.permute.xlu0 %2160
        %2163 = vset.pattern.permute.xlu0 5
        %2164 = vperm.xlu0 %2163, %v1422
        %v2165 = vpop.permute.xlu0 %2164
        %2167 = vset.pattern.permute.xlu0 5
        %2168 = vperm.xlu0 %2167, %v1423
        %v2169 = vpop.permute.xlu0 %2168
        %2171 = vset.pattern.permute.xlu0 5
        %2172 = vperm.xlu0 %2171, %v1424
        %v2173 = vpop.permute.xlu0 %2172
        %2175 = vset.pattern.permute.xlu0 5
        %2176 = vperm.xlu0 %2175, %v1425
        %v2177 = vpop.permute.xlu0 %2176
        %2179 = vset.pattern.permute.xlu0 5
        %2180 = vperm.xlu0 %2179, %v1426
        %v2181 = vpop.permute.xlu0 %2180
        %2183 = vset.pattern.permute.xlu0 5
        %2184 = vperm.xlu0 %2183, %v1427
        %v2185 = vpop.permute.xlu0 %2184
        %2187 = vset.pattern.permute.xlu0 5
        %2188 = vperm.xlu0 %2187, %v1428
        %v2189 = vpop.permute.xlu0 %2188
        %2191 = vset.pattern.permute.xlu0 5
        %2192 = vperm.xlu0 %2191, %v1429
        %v2193 = vpop.permute.xlu0 %2192
        %2195 = vset.pattern.permute.xlu0 5
        %2196 = vperm.xlu0 %2195, %v1430
        %v2197 = vpop.permute.xlu0 %2196
        %2199 = vset.pattern.permute.xlu0 5
        %2200 = vperm.xlu0 %2199, %v1431
        %v2201 = vpop.permute.xlu0 %2200
        %2203 = vset.pattern.permute.xlu0 5
        %2204 = vperm.xlu0 %2203, %v1432
        %v2205 = vpop.permute.xlu0 %2204
        %2207 = vset.pattern.permute.xlu0 5
        %2208 = vperm.xlu0 %2207, %v1433
        %v2209 = vpop.permute.xlu0 %2208
        %v2211 = vmul.f32 %v2113, %v1676
        %v2212 = vmul.f32 %v2117, %v1680
        %v2213 = vmul.f32 %v2121, %v1686
        %v2214 = vmul.f32 %v2125, %v1690
        %v2215 = vmul.f32 %v2129, %v1696
        %v2216 = vmul.f32 %v2133, %v1700
        %v2217 = vmul.f32 %v2137, %v1706
        %v2218 = vmul.f32 %v2141, %v1710
        %v2219 = vmul.f32 %v2145, %v1716
        %v2220 = vmul.f32 %v2149, %v1720
        %v2221 = vmul.f32 %v2153, %v1726
        %v2222 = vmul.f32 %v2157, %v1730
        %v2223 = vmul.f32 %v2161, %v1736
        %v2224 = vmul.f32 %v2165, %v1740
        %v2225 = vmul.f32 %v2169, %v1746
        %v2226 = vmul.f32 %v2173, %v1750
        %v2227 = vmul.f32 %v2177, %v1756
        %v2228 = vmul.f32 %v2181, %v1760
        %v2229 = vmul.f32 %v2185, %v1766
        %v2230 = vmul.f32 %v2189, %v1770
        %v2231 = vmul.f32 %v2193, %v1776
        %v2232 = vmul.f32 %v2197, %v1780
        %v2233 = vmul.f32 %v2201, %v1786
        %v2234 = vmul.f32 %v2205, %v1790
        %v2235 = vmul.f32 %v2209, %v1796
        %v2236 = vadd.f32 %v2086, %v2211
        %v2237 = vadd.f32 %v2087, %v2212
        %v2238 = vadd.f32 %v2088, %v2213
        %v2239 = vadd.f32 %v2089, %v2214
        %v2240 = vadd.f32 %v2090, %v2215
        %v2241 = vadd.f32 %v2091, %v2216
        %v2242 = vadd.f32 %v2092, %v2217
        %v2243 = vadd.f32 %v2093, %v2218
        %v2244 = vadd.f32 %v2094, %v2219
        %v2245 = vadd.f32 %v2095, %v2220
        %v2246 = vadd.f32 %v2096, %v2221
        %v2247 = vadd.f32 %v2097, %v2222
        %v2248 = vadd.f32 %v2098, %v2223
        %v2249 = vadd.f32 %v2099, %v2224
        %v2250 = vadd.f32 %v2100, %v2225
        %v2251 = vadd.f32 %v2101, %v2226
        %v2252 = vadd.f32 %v2102, %v2227
        %v2253 = vadd.f32 %v2103, %v2228
        %v2254 = vadd.f32 %v2104, %v2229
        %v2255 = vadd.f32 %v2105, %v2230
        %v2256 = vadd.f32 %v2106, %v2231
        %v2257 = vadd.f32 %v2107, %v2232
        %v2258 = vadd.f32 %v2108, %v2233
        %v2259 = vadd.f32 %v2109, %v2234
        %v2260 = vadd.f32 %v2110, %v2235
        %2261 = vset.pattern.permute.xlu0 6
        %2262 = vperm.xlu0 %2261, %v1409
        %v2263 = vpop.permute.xlu0 %2262
        %2265 = vset.pattern.permute.xlu0 6
        %2266 = vperm.xlu0 %2265, %v1410
        %v2267 = vpop.permute.xlu0 %2266
        %2269 = vset.pattern.permute.xlu0 6
        %2270 = vperm.xlu0 %2269, %v1411
        %v2271 = vpop.permute.xlu0 %2270
        %2273 = vset.pattern.permute.xlu0 6
        %2274 = vperm.xlu0 %2273, %v1412
        %v2275 = vpop.permute.xlu0 %2274
        %2277 = vset.pattern.permute.xlu0 6
        %2278 = vperm.xlu0 %2277, %v1413
        %v2279 = vpop.permute.xlu0 %2278
        %2281 = vset.pattern.permute.xlu0 6
        %2282 = vperm.xlu0 %2281, %v1414
        %v2283 = vpop.permute.xlu0 %2282
        %2285 = vset.pattern.permute.xlu0 6
        %2286 = vperm.xlu0 %2285, %v1415
        %v2287 = vpop.permute.xlu0 %2286
        %2289 = vset.pattern.permute.xlu0 6
        %2290 = vperm.xlu0 %2289, %v1416
        %v2291 = vpop.permute.xlu0 %2290
        %2293 = vset.pattern.permute.xlu0 6
        %2294 = vperm.xlu0 %2293, %v1417
        %v2295 = vpop.permute.xlu0 %2294
        %2297 = vset.pattern.permute.xlu0 6
        %2298 = vperm.xlu0 %2297, %v1418
        %v2299 = vpop.permute.xlu0 %2298
        %2301 = vset.pattern.permute.xlu0 6
        %2302 = vperm.xlu0 %2301, %v1419
        %v2303 = vpop.permute.xlu0 %2302
        %2305 = vset.pattern.permute.xlu0 6
        %2306 = vperm.xlu0 %2305, %v1420
        %v2307 = vpop.permute.xlu0 %2306
        %2309 = vset.pattern.permute.xlu0 6
        %2310 = vperm.xlu0 %2309, %v1421
        %v2311 = vpop.permute.xlu0 %2310
        %2313 = vset.pattern.permute.xlu0 6
        %2314 = vperm.xlu0 %2313, %v1422
        %v2315 = vpop.permute.xlu0 %2314
        %2317 = vset.pattern.permute.xlu0 6
        %2318 = vperm.xlu0 %2317, %v1423
        %v2319 = vpop.permute.xlu0 %2318
        %2321 = vset.pattern.permute.xlu0 6
        %2322 = vperm.xlu0 %2321, %v1424
        %v2323 = vpop.permute.xlu0 %2322
        %2325 = vset.pattern.permute.xlu0 6
        %2326 = vperm.xlu0 %2325, %v1425
        %v2327 = vpop.permute.xlu0 %2326
        %2329 = vset.pattern.permute.xlu0 6
        %2330 = vperm.xlu0 %2329, %v1426
        %v2331 = vpop.permute.xlu0 %2330
        %2333 = vset.pattern.permute.xlu0 6
        %2334 = vperm.xlu0 %2333, %v1427
        %v2335 = vpop.permute.xlu0 %2334
        %2337 = vset.pattern.permute.xlu0 6
        %2338 = vperm.xlu0 %2337, %v1428
        %v2339 = vpop.permute.xlu0 %2338
        %2341 = vset.pattern.permute.xlu0 6
        %2342 = vperm.xlu0 %2341, %v1429
        %v2343 = vpop.permute.xlu0 %2342
        %2345 = vset.pattern.permute.xlu0 6
        %2346 = vperm.xlu0 %2345, %v1430
        %v2347 = vpop.permute.xlu0 %2346
        %2349 = vset.pattern.permute.xlu0 6
        %2350 = vperm.xlu0 %2349, %v1431
        %v2351 = vpop.permute.xlu0 %2350
        %2353 = vset.pattern.permute.xlu0 6
        %2354 = vperm.xlu0 %2353, %v1432
        %v2355 = vpop.permute.xlu0 %2354
        %2357 = vset.pattern.permute.xlu0 6
        %2358 = vperm.xlu0 %2357, %v1433
        %v2359 = vpop.permute.xlu0 %2358
        %v2361 = vmul.f32 %v2263, %v1835
        %v2362 = vmul.f32 %v2267, %v1839
        %v2363 = vmul.f32 %v2271, %v1845
        %v2364 = vmul.f32 %v2275, %v1849
        %v2365 = vmul.f32 %v2279, %v1855
        %v2366 = vmul.f32 %v2283, %v1859
        %v2367 = vmul.f32 %v2287, %v1865
        %v2368 = vmul.f32 %v2291, %v1869
        %v2369 = vmul.f32 %v2295, %v1875
        %v2370 = vmul.f32 %v2299, %v1879
        %v2371 = vmul.f32 %v2303, %v1885
        %v2372 = vmul.f32 %v2307, %v1889
        %v2373 = vmul.f32 %v2311, %v1895
        %v2374 = vmul.f32 %v2315, %v1899
        %v2375 = vmul.f32 %v2319, %v1905
        %v2376 = vmul.f32 %v2323, %v1909
        %v2377 = vmul.f32 %v2327, %v1915
        %v2378 = vmul.f32 %v2331, %v1919
        %v2379 = vmul.f32 %v2335, %v1925
        %v2380 = vmul.f32 %v2339, %v1929
        %v2381 = vmul.f32 %v2343, %v1935
        %v2382 = vmul.f32 %v2347, %v1939
        %v2383 = vmul.f32 %v2351, %v1945
        %v2384 = vmul.f32 %v2355, %v1949
        %v2385 = vmul.f32 %v2359, %v1955
        %v2386 = vadd.f32 %v2236, %v2361
        %v2387 = vadd.f32 %v2237, %v2362
        %v2388 = vadd.f32 %v2238, %v2363
        %v2389 = vadd.f32 %v2239, %v2364
        %v2390 = vadd.f32 %v2240, %v2365
        %v2391 = vadd.f32 %v2241, %v2366
        %v2392 = vadd.f32 %v2242, %v2367
        %v2393 = vadd.f32 %v2243, %v2368
        %v2394 = vadd.f32 %v2244, %v2369
        %v2395 = vadd.f32 %v2245, %v2370
        %v2396 = vadd.f32 %v2246, %v2371
        %v2397 = vadd.f32 %v2247, %v2372
        %v2398 = vadd.f32 %v2248, %v2373
        %v2399 = vadd.f32 %v2249, %v2374
        %v2400 = vadd.f32 %v2250, %v2375
        %v2401 = vadd.f32 %v2251, %v2376
        %v2402 = vadd.f32 %v2252, %v2377
        %v2403 = vadd.f32 %v2253, %v2378
        %v2404 = vadd.f32 %v2254, %v2379
        %v2405 = vadd.f32 %v2255, %v2380
        %v2406 = vadd.f32 %v2256, %v2381
        %v2407 = vadd.f32 %v2257, %v2382
        %v2408 = vadd.f32 %v2258, %v2383
        %v2409 = vadd.f32 %v2259, %v2384
        %v2410 = vadd.f32 %v2260, %v2385
        %2411 = vset.pattern.permute.xlu0 7
        %2412 = vperm.xlu0 %2411, %v1409
        %v2413 = vpop.permute.xlu0 %2412
        %2415 = vset.pattern.permute.xlu0 7
        %2416 = vperm.xlu0 %2415, %v1410
        %v2417 = vpop.permute.xlu0 %2416
        %2419 = vset.pattern.permute.xlu0 7
        %2420 = vperm.xlu0 %2419, %v1411
        %v2421 = vpop.permute.xlu0 %2420
        %2423 = vset.pattern.permute.xlu0 7
        %2424 = vperm.xlu0 %2423, %v1412
        %v2425 = vpop.permute.xlu0 %2424
        %2427 = vset.pattern.permute.xlu0 7
        %2428 = vperm.xlu0 %2427, %v1413
        %v2429 = vpop.permute.xlu0 %2428
        %2431 = vset.pattern.permute.xlu0 7
        %2432 = vperm.xlu0 %2431, %v1414
        %v2433 = vpop.permute.xlu0 %2432
        %2435 = vset.pattern.permute.xlu0 7
        %2436 = vperm.xlu0 %2435, %v1415
        %v2437 = vpop.permute.xlu0 %2436
        %2439 = vset.pattern.permute.xlu0 7
        %2440 = vperm.xlu0 %2439, %v1416
        %v2441 = vpop.permute.xlu0 %2440
        %2443 = vset.pattern.permute.xlu0 7
        %2444 = vperm.xlu0 %2443, %v1417
        %v2445 = vpop.permute.xlu0 %2444
        %2447 = vset.pattern.permute.xlu0 7
        %2448 = vperm.xlu0 %2447, %v1418
        %v2449 = vpop.permute.xlu0 %2448
        %2451 = vset.pattern.permute.xlu0 7
        %2452 = vperm.xlu0 %2451, %v1419
        %v2453 = vpop.permute.xlu0 %2452
        %2455 = vset.pattern.permute.xlu0 7
        %2456 = vperm.xlu0 %2455, %v1420
        %v2457 = vpop.permute.xlu0 %2456
        %2459 = vset.pattern.permute.xlu0 7
        %2460 = vperm.xlu0 %2459, %v1421
        %v2461 = vpop.permute.xlu0 %2460
        %2463 = vset.pattern.permute.xlu0 7
        %2464 = vperm.xlu0 %2463, %v1422
        %v2465 = vpop.permute.xlu0 %2464
        %2467 = vset.pattern.permute.xlu0 7
        %2468 = vperm.xlu0 %2467, %v1423
        %v2469 = vpop.permute.xlu0 %2468
        %2471 = vset.pattern.permute.xlu0 7
        %2472 = vperm.xlu0 %2471, %v1424
        %v2473 = vpop.permute.xlu0 %2472
        %2475 = vset.pattern.permute.xlu0 7
        %2476 = vperm.xlu0 %2475, %v1425
        %v2477 = vpop.permute.xlu0 %2476
        %2479 = vset.pattern.permute.xlu0 7
        %2480 = vperm.xlu0 %2479, %v1426
        %v2481 = vpop.permute.xlu0 %2480
        %2483 = vset.pattern.permute.xlu0 7
        %2484 = vperm.xlu0 %2483, %v1427
        %v2485 = vpop.permute.xlu0 %2484
        %2487 = vset.pattern.permute.xlu0 7
        %2488 = vperm.xlu0 %2487, %v1428
        %v2489 = vpop.permute.xlu0 %2488
        %2491 = vset.pattern.permute.xlu0 7
        %2492 = vperm.xlu0 %2491, %v1429
        %v2493 = vpop.permute.xlu0 %2492
        %2495 = vset.pattern.permute.xlu0 7
        %2496 = vperm.xlu0 %2495, %v1430
        %v2497 = vpop.permute.xlu0 %2496
        %2499 = vset.pattern.permute.xlu0 7
        %2500 = vperm.xlu0 %2499, %v1431
        %v2501 = vpop.permute.xlu0 %2500
        %2503 = vset.pattern.permute.xlu0 7
        %2504 = vperm.xlu0 %2503, %v1432
        %v2505 = vpop.permute.xlu0 %2504
        %2507 = vset.pattern.permute.xlu0 7
        %2508 = vperm.xlu0 %2507, %v1433
        %v2509 = vpop.permute.xlu0 %2508
        %v2511 = vmul.f32 %v2413, %v1837
        %v2512 = vmul.f32 %v2417, %v1841
        %v2513 = vmul.f32 %v2421, %v1847
        %v2514 = vmul.f32 %v2425, %v1851
        %v2515 = vmul.f32 %v2429, %v1857
        %v2516 = vmul.f32 %v2433, %v1861
        %v2517 = vmul.f32 %v2437, %v1867
        %v2518 = vmul.f32 %v2441, %v1871
        %v2519 = vmul.f32 %v2445, %v1877
        %v2520 = vmul.f32 %v2449, %v1881
        %v2521 = vmul.f32 %v2453, %v1887
        %v2522 = vmul.f32 %v2457, %v1891
        %v2523 = vmul.f32 %v2461, %v1897
        %v2524 = vmul.f32 %v2465, %v1901
        %v2525 = vmul.f32 %v2469, %v1907
        %v2526 = vmul.f32 %v2473, %v1911
        %v2527 = vmul.f32 %v2477, %v1917
        %v2528 = vmul.f32 %v2481, %v1921
        %v2529 = vmul.f32 %v2485, %v1927
        %v2530 = vmul.f32 %v2489, %v1931
        %v2531 = vmul.f32 %v2493, %v1937
        %v2532 = vmul.f32 %v2497, %v1941
        %v2533 = vmul.f32 %v2501, %v1947
        %v2534 = vmul.f32 %v2505, %v1951
        %v2535 = vmul.f32 %v2509, %v1957
        %v2536 = vadd.f32 %v2386, %v2511
        %v2537 = vadd.f32 %v2387, %v2512
        %v2538 = vadd.f32 %v2388, %v2513
        %v2539 = vadd.f32 %v2389, %v2514
        %v2540 = vadd.f32 %v2390, %v2515
        %v2541 = vadd.f32 %v2391, %v2516
        %v2542 = vadd.f32 %v2392, %v2517
        %v2543 = vadd.f32 %v2393, %v2518
        %v2544 = vadd.f32 %v2394, %v2519
        %v2545 = vadd.f32 %v2395, %v2520
        %v2546 = vadd.f32 %v2396, %v2521
        %v2547 = vadd.f32 %v2397, %v2522
        %v2548 = vadd.f32 %v2398, %v2523
        %v2549 = vadd.f32 %v2399, %v2524
        %v2550 = vadd.f32 %v2400, %v2525
        %v2551 = vadd.f32 %v2401, %v2526
        %v2552 = vadd.f32 %v2402, %v2527
        %v2553 = vadd.f32 %v2403, %v2528
        %v2554 = vadd.f32 %v2404, %v2529
        %v2555 = vadd.f32 %v2405, %v2530
        %v2556 = vadd.f32 %v2406, %v2531
        %v2557 = vadd.f32 %v2407, %v2532
        %v2558 = vadd.f32 %v2408, %v2533
        %v2559 = vadd.f32 %v2409, %v2534
        %v2560 = vadd.f32 %v2410, %v2535
        %v2561 = vld [vmem:[%s2] sm:$0x1]
        %v2562 = vunpack.c.l.bf16 %v2561
        %v2563 = vlaneseq
        %v2564 = vshrl.u32 %v2563, 7
        %v2565 = vsub.s32 0, %v2564
        %v2566 = vrot.slane %v2562, %v2565
        %v2567 = vadd.f32 %v609, %v2566
        %v2568 = vadd.f32 %v613, %v2566
        %v2569 = vadd.f32 %v619, %v2566
        %v2570 = vadd.f32 %v623, %v2566
        %v2571 = vadd.f32 %v629, %v2566
        %v2572 = vadd.f32 %v633, %v2566
        %v2573 = vadd.f32 %v639, %v2566
        %v2574 = vadd.f32 %v643, %v2566
        %v2575 = vadd.f32 %v649, %v2566
        %v2576 = vadd.f32 %v653, %v2566
        %v2577 = vadd.f32 %v659, %v2566
        %v2578 = vadd.f32 %v663, %v2566
        %v2579 = vadd.f32 %v669, %v2566
        %v2580 = vadd.f32 %v673, %v2566
        %v2581 = vadd.f32 %v679, %v2566
        %v2582 = vadd.f32 %v683, %v2566
        %v2583 = vadd.f32 %v689, %v2566
        %v2584 = vadd.f32 %v693, %v2566
        %v2585 = vadd.f32 %v699, %v2566
        %v2586 = vadd.f32 %v703, %v2566
        %v2587 = vadd.f32 %v709, %v2566
        %v2588 = vadd.f32 %v713, %v2566
        %v2589 = vadd.f32 %v719, %v2566
        %v2590 = vadd.f32 %v723, %v2566
        %v2591 = vadd.f32 %v729, %v2566
        %v2592 = vadd.f32 %v2567, %v2536
        %v2593 = vadd.f32 %v2568, %v2537
        %v2594 = vadd.f32 %v2569, %v2538
        %v2595 = vadd.f32 %v2570, %v2539
        %v2596 = vadd.f32 %v2571, %v2540
        %v2597 = vadd.f32 %v2572, %v2541
        %v2598 = vadd.f32 %v2573, %v2542
        %v2599 = vadd.f32 %v2574, %v2543
        %v2600 = vadd.f32 %v2575, %v2544
        %v2601 = vadd.f32 %v2576, %v2545
        %v2602 = vadd.f32 %v2577, %v2546
        %v2603 = vadd.f32 %v2578, %v2547
        %v2604 = vadd.f32 %v2579, %v2548
        %v2605 = vadd.f32 %v2580, %v2549
        %v2606 = vadd.f32 %v2581, %v2550
        %v2607 = vadd.f32 %v2582, %v2551
        %v2608 = vadd.f32 %v2583, %v2552
        %v2609 = vadd.f32 %v2584, %v2553
        %v2610 = vadd.f32 %v2585, %v2554
        %v2611 = vadd.f32 %v2586, %v2555
        %v2612 = vadd.f32 %v2587, %v2556
        %v2613 = vadd.f32 %v2588, %v2557
        %v2614 = vadd.f32 %v2589, %v2558
        %v2615 = vadd.f32 %v2590, %v2559
        %v2616 = vadd.f32 %v2591, %v2560
        %2617 = vst [vmem:[%s244] sm:$0xff] %v2592
        %2618 = vst [vmem:[%s244 + $0x18] sm:$0xff] %v2593
        %2619 = vst [vmem:[%s244 + $0x30] sm:$0xff] %v2594
        %2620 = vst [vmem:[%s244 + $0x48] sm:$0xff] %v2595
        %2621 = vst [vmem:[%s244 + $0x60] sm:$0xff] %v2596
        %2622 = vst [vmem:[%s244 + $0x78] sm:$0xff] %v2597
        %2623 = vst [vmem:[%s244 + $0x90] sm:$0xff] %v2598
        %2624 = vst [vmem:[%s244 + $0xa8] sm:$0xff] %v2599
        %2625 = vst [vmem:[%s244 + $0xc0] sm:$0xff] %v2600
        %2626 = vst [vmem:[%s244 + $0xd8] sm:$0xff] %v2601
        %2627 = vst [vmem:[%s244 + $0xf0] sm:$0xff] %v2602
        %2628 = vst [vmem:[%s244 + $0x108] sm:$0xff] %v2603
        %2629 = vst [vmem:[%s244 + $0x120] sm:$0xff] %v2604
        %2630 = vst [vmem:[%s244 + $0x138] sm:$0xff] %v2605
        %2631 = vst [vmem:[%s244 + $0x150] sm:$0xff] %v2606
        %2632 = vst [vmem:[%s244 + $0x168] sm:$0xff] %v2607
        %2633 = vst [vmem:[%s244 + $0x180] sm:$0xff] %v2608
        %2634 = vst [vmem:[%s244 + $0x198] sm:$0xff] %v2609
        %2635 = vst [vmem:[%s244 + $0x1b0] sm:$0xff] %v2610
        %2636 = vst [vmem:[%s244 + $0x1c8] sm:$0xff] %v2611
        %2637 = vst [vmem:[%s244 + $0x1e0] sm:$0xff] %v2612
        %2638 = vst [vmem:[%s244 + $0x1f8] sm:$0xff] %v2613
        %2639 = vst [vmem:[%s244 + $0x210] sm:$0xff] %v2614
        %2640 = vst [vmem:[%s244 + $0x228] sm:$0xff] %v2615
        %2641 = vst [vmem:[%s244 + $0x240] sm:$0xff] %v2616
        %v2642 = vsel %vm1057, %v931, -inf
        %2643 = vmax.xlane.f32.xlu0 %v2642
        %v2644 = vpop.xlane.xlu0 %2643
        %v2645 = vsel %vm1057, %v935, -inf
        %2646 = vmax.xlane.f32.xlu0 %v2645
        %v2647 = vpop.xlane.xlu0 %2646
        %v2648 = vsel %vm1057, %v941, -inf
        %2649 = vmax.xlane.f32.xlu0 %v2648
        %v2650 = vpop.xlane.xlu0 %2649
        %v2651 = vsel %vm1057, %v945, -inf
        %2652 = vmax.xlane.f32.xlu0 %v2651
        %v2653 = vpop.xlane.xlu0 %2652
        %v2654 = vsel %vm1057, %v951, -inf
        %2655 = vmax.xlane.f32.xlu0 %v2654
        %v2656 = vpop.xlane.xlu0 %2655
        %v2657 = vsel %vm1057, %v955, -inf
        %2658 = vmax.xlane.f32.xlu0 %v2657
        %v2659 = vpop.xlane.xlu0 %2658
        %v2660 = vsel %vm1057, %v961, -inf
        %2661 = vmax.xlane.f32.xlu0 %v2660
        %v2662 = vpop.xlane.xlu0 %2661
        %v2663 = vsel %vm1057, %v965, -inf
        %2664 = vmax.xlane.f32.xlu0 %v2663
        %v2665 = vpop.xlane.xlu0 %2664
        %v2666 = vsel %vm1057, %v971, -inf
        %2667 = vmax.xlane.f32.xlu0 %v2666
        %v2668 = vpop.xlane.xlu0 %2667
        %v2669 = vsel %vm1057, %v975, -inf
        %2670 = vmax.xlane.f32.xlu0 %v2669
        %v2671 = vpop.xlane.xlu0 %2670
        %v2672 = vsel %vm1057, %v981, -inf
        %2673 = vmax.xlane.f32.xlu0 %v2672
        %v2674 = vpop.xlane.xlu0 %2673
        %v2675 = vsel %vm1057, %v985, -inf
        %2676 = vmax.xlane.f32.xlu0 %v2675
        %v2677 = vpop.xlane.xlu0 %2676
        %v2678 = vsel %vm1057, %v991, -inf
        %2679 = vmax.xlane.f32.xlu0 %v2678
        %v2680 = vpop.xlane.xlu0 %2679
        %v2681 = vsel %vm1057, %v995, -inf
        %2682 = vmax.xlane.f32.xlu0 %v2681
        %v2683 = vpop.xlane.xlu0 %2682
        %v2684 = vsel %vm1057, %v1001, -inf
        %2685 = vmax.xlane.f32.xlu0 %v2684
        %v2686 = vpop.xlane.xlu0 %2685
        %v2687 = vsel %vm1057, %v1005, -inf
        %2688 = vmax.xlane.f32.xlu0 %v2687
        %v2689 = vpop.xlane.xlu0 %2688
        %v2690 = vsel %vm1057, %v1011, -inf
        %2691 = vmax.xlane.f32.xlu0 %v2690
        %v2692 = vpop.xlane.xlu0 %2691
        %v2693 = vsel %vm1057, %v1015, -inf
        %2694 = vmax.xlane.f32.xlu0 %v2693
        %v2695 = vpop.xlane.xlu0 %2694
        %v2696 = vsel %vm1057, %v1021, -inf
        %2697 = vmax.xlane.f32.xlu0 %v2696
        %v2698 = vpop.xlane.xlu0 %2697
        %v2699 = vsel %vm1057, %v1025, -inf
        %2700 = vmax.xlane.f32.xlu0 %v2699
        %v2701 = vpop.xlane.xlu0 %2700
        %v2702 = vsel %vm1057, %v1031, -inf
        %2703 = vmax.xlane.f32.xlu0 %v2702
        %v2704 = vpop.xlane.xlu0 %2703
        %v2705 = vsel %vm1057, %v1035, -inf
        %2706 = vmax.xlane.f32.xlu0 %v2705
        %v2707 = vpop.xlane.xlu0 %2706
        %v2708 = vsel %vm1057, %v1041, -inf
        %2709 = vmax.xlane.f32.xlu0 %v2708
        %v2710 = vpop.xlane.xlu0 %2709
        %v2711 = vsel %vm1057, %v1045, -inf
        %2712 = vmax.xlane.f32.xlu0 %v2711
        %v2713 = vpop.xlane.xlu0 %2712
        %v2714 = vsel %vm1057, %v1051, -inf
        %2715 = vmax.xlane.f32.xlu0 %v2714
        %v2716 = vpop.xlane.xlu0 %2715
        %v2717 = vsub.f32 %v931, %v2644
        %v2718 = vsub.f32 %v935, %v2647
        %v2719 = vsub.f32 %v941, %v2650
        %v2720 = vsub.f32 %v945, %v2653
        %v2721 = vsub.f32 %v951, %v2656
        %v2722 = vsub.f32 %v955, %v2659
        %v2723 = vsub.f32 %v961, %v2662
        %v2724 = vsub.f32 %v965, %v2665
        %v2725 = vsub.f32 %v971, %v2668
        %v2726 = vsub.f32 %v975, %v2671
        %v2727 = vsub.f32 %v981, %v2674
        %v2728 = vsub.f32 %v985, %v2677
        %v2729 = vsub.f32 %v991, %v2680
        %v2730 = vsub.f32 %v995, %v2683
        %v2731 = vsub.f32 %v1001, %v2686
        %v2732 = vsub.f32 %v1005, %v2689
        %v2733 = vsub.f32 %v1011, %v2692
        %v2734 = vsub.f32 %v1015, %v2695
        %v2735 = vsub.f32 %v1021, %v2698
        %v2736 = vsub.f32 %v1025, %v2701
        %v2737 = vsub.f32 %v1031, %v2704
        %v2738 = vsub.f32 %v1035, %v2707
        %v2739 = vsub.f32 %v1041, %v2710
        %v2740 = vsub.f32 %v1045, %v2713
        %v2741 = vsub.f32 %v1051, %v2716
        %v2742 = vmul.f32 %v2717, 1.442695
        %v2743 = vpow.pop %v2742
        %v2744 = vmul.f32 %v2718, 1.442695
        %v2745 = vpow.pop %v2744
        %v2746 = vmul.f32 %v2719, 1.442695
        %v2747 = vpow.pop %v2746
        %v2748 = vmul.f32 %v2720, 1.442695
        %v2749 = vpow.pop %v2748
        %v2750 = vmul.f32 %v2721, 1.442695
        %v2751 = vpow.pop %v2750
        %v2752 = vmul.f32 %v2722, 1.442695
        %v2753 = vpow.pop %v2752
        %v2754 = vmul.f32 %v2723, 1.442695
        %v2755 = vpow.pop %v2754
        %v2756 = vmul.f32 %v2724, 1.442695
        %v2757 = vpow.pop %v2756
        %v2758 = vmul.f32 %v2725, 1.442695
        %v2759 = vpow.pop %v2758
        %v2760 = vmul.f32 %v2726, 1.442695
        %v2761 = vpow.pop %v2760
        %v2762 = vmul.f32 %v2727, 1.442695
        %v2763 = vpow.pop %v2762
        %v2764 = vmul.f32 %v2728, 1.442695
        %v2765 = vpow.pop %v2764
        %v2766 = vmul.f32 %v2729, 1.442695
        %v2767 = vpow.pop %v2766
        %v2768 = vmul.f32 %v2730, 1.442695
        %v2769 = vpow.pop %v2768
        %v2770 = vmul.f32 %v2731, 1.442695
        %v2771 = vpow.pop %v2770
        %v2772 = vmul.f32 %v2732, 1.442695
        %v2773 = vpow.pop %v2772
        %v2774 = vmul.f32 %v2733, 1.442695
        %v2775 = vpow.pop %v2774
        %v2776 = vmul.f32 %v2734, 1.442695
        %v2777 = vpow.pop %v2776
        %v2778 = vmul.f32 %v2735, 1.442695
        %v2779 = vpow.pop %v2778
        %v2780 = vmul.f32 %v2736, 1.442695
        %v2781 = vpow.pop %v2780
        %v2782 = vmul.f32 %v2737, 1.442695
        %v2783 = vpow.pop %v2782
        %v2784 = vmul.f32 %v2738, 1.442695
        %v2785 = vpow.pop %v2784
        %v2786 = vmul.f32 %v2739, 1.442695
        %v2787 = vpow.pop %v2786
        %v2788 = vmul.f32 %v2740, 1.442695
        %v2789 = vpow.pop %v2788
        %v2790 = vmul.f32 %v2741, 1.442695
        %v2791 = vpow.pop %v2790
        %2817 = vrot.lane.b32.xlu0 %v2743, 124
        %v2818 = vpop.permute.xlu0 %2817
        %2819 = vrot.lane.b32.xlu0 %v2745, 124
        %v2820 = vpop.permute.xlu0 %2819
        %2821 = vrot.lane.b32.xlu0 %v2747, 124
        %v2822 = vpop.permute.xlu0 %2821
        %2823 = vrot.lane.b32.xlu0 %v2749, 124
        %v2824 = vpop.permute.xlu0 %2823
        %2825 = vrot.lane.b32.xlu0 %v2751, 124
        %v2826 = vpop.permute.xlu0 %2825
        %2827 = vrot.lane.b32.xlu0 %v2753, 124
        %v2828 = vpop.permute.xlu0 %2827
        %2829 = vrot.lane.b32.xlu0 %v2755, 124
        %v2830 = vpop.permute.xlu0 %2829
        %2831 = vrot.lane.b32.xlu0 %v2757, 124
        %v2832 = vpop.permute.xlu0 %2831
        %2833 = vrot.lane.b32.xlu0 %v2759, 124
        %v2834 = vpop.permute.xlu0 %2833
        %2835 = vrot.lane.b32.xlu0 %v2761, 124
        %v2836 = vpop.permute.xlu0 %2835
        %2837 = vrot.lane.b32.xlu0 %v2763, 124
        %v2838 = vpop.permute.xlu0 %2837
        %2839 = vrot.lane.b32.xlu0 %v2765, 124
        %v2840 = vpop.permute.xlu0 %2839
        %2841 = vrot.lane.b32.xlu0 %v2767, 124
        %v2842 = vpop.permute.xlu0 %2841
        %2843 = vrot.lane.b32.xlu0 %v2769, 124
        %v2844 = vpop.permute.xlu0 %2843
        %2845 = vrot.lane.b32.xlu0 %v2771, 124
        %v2846 = vpop.permute.xlu0 %2845
        %2847 = vrot.lane.b32.xlu0 %v2773, 124
        %v2848 = vpop.permute.xlu0 %2847
        %2849 = vrot.lane.b32.xlu0 %v2775, 124
        %v2850 = vpop.permute.xlu0 %2849
        %2851 = vrot.lane.b32.xlu0 %v2777, 124
        %v2852 = vpop.permute.xlu0 %2851
        %2853 = vrot.lane.b32.xlu0 %v2779, 124
        %v2854 = vpop.permute.xlu0 %2853
        %2855 = vrot.lane.b32.xlu0 %v2781, 124
        %v2856 = vpop.permute.xlu0 %2855
        %2857 = vrot.lane.b32.xlu0 %v2783, 124
        %v2858 = vpop.permute.xlu0 %2857
        %2859 = vrot.lane.b32.xlu0 %v2785, 124
        %v2860 = vpop.permute.xlu0 %2859
        %2861 = vrot.lane.b32.xlu0 %v2787, 124
        %v2862 = vpop.permute.xlu0 %2861
        %2863 = vrot.lane.b32.xlu0 %v2789, 124
        %v2864 = vpop.permute.xlu0 %2863
        %2865 = vrot.lane.b32.xlu0 %v2791, 124
        %v2866 = vpop.permute.xlu0 %2865
        %v2892 = vsel %vm1308, %v2818, 0.0
        %2893 = vadd.xlane.f32.xlu0 %v2892
        %v2894 = vpop.xlane.xlu0 %2893
        %v2895 = vsel %vm1308, %v2820, 0.0
        %2896 = vadd.xlane.f32.xlu0 %v2895
        %v2897 = vpop.xlane.xlu0 %2896
        %v2898 = vsel %vm1308, %v2822, 0.0
        %2899 = vadd.xlane.f32.xlu0 %v2898
        %v2900 = vpop.xlane.xlu0 %2899
        %v2901 = vsel %vm1308, %v2824, 0.0
        %2902 = vadd.xlane.f32.xlu0 %v2901
        %v2903 = vpop.xlane.xlu0 %2902
        %v2904 = vsel %vm1308, %v2826, 0.0
        %2905 = vadd.xlane.f32.xlu0 %v2904
        %v2906 = vpop.xlane.xlu0 %2905
        %v2907 = vsel %vm1308, %v2828, 0.0
        %2908 = vadd.xlane.f32.xlu0 %v2907
        %v2909 = vpop.xlane.xlu0 %2908
        %v2910 = vsel %vm1308, %v2830, 0.0
        %2911 = vadd.xlane.f32.xlu0 %v2910
        %v2912 = vpop.xlane.xlu0 %2911
        %v2913 = vsel %vm1308, %v2832, 0.0
        %2914 = vadd.xlane.f32.xlu0 %v2913
        %v2915 = vpop.xlane.xlu0 %2914
        %v2916 = vsel %vm1308, %v2834, 0.0
        %2917 = vadd.xlane.f32.xlu0 %v2916
        %v2918 = vpop.xlane.xlu0 %2917
        %v2919 = vsel %vm1308, %v2836, 0.0
        %2920 = vadd.xlane.f32.xlu0 %v2919
        %v2921 = vpop.xlane.xlu0 %2920
        %v2922 = vsel %vm1308, %v2838, 0.0
        %2923 = vadd.xlane.f32.xlu0 %v2922
        %v2924 = vpop.xlane.xlu0 %2923
        %v2925 = vsel %vm1308, %v2840, 0.0
        %2926 = vadd.xlane.f32.xlu0 %v2925
        %v2927 = vpop.xlane.xlu0 %2926
        %v2928 = vsel %vm1308, %v2842, 0.0
        %2929 = vadd.xlane.f32.xlu0 %v2928
        %v2930 = vpop.xlane.xlu0 %2929
        %v2931 = vsel %vm1308, %v2844, 0.0
        %2932 = vadd.xlane.f32.xlu0 %v2931
        %v2933 = vpop.xlane.xlu0 %2932
        %v2934 = vsel %vm1308, %v2846, 0.0
        %2935 = vadd.xlane.f32.xlu0 %v2934
        %v2936 = vpop.xlane.xlu0 %2935
        %v2937 = vsel %vm1308, %v2848, 0.0
        %2938 = vadd.xlane.f32.xlu0 %v2937
        %v2939 = vpop.xlane.xlu0 %2938
        %v2940 = vsel %vm1308, %v2850, 0.0
        %2941 = vadd.xlane.f32.xlu0 %v2940
        %v2942 = vpop.xlane.xlu0 %2941
        %v2943 = vsel %vm1308, %v2852, 0.0
        %2944 = vadd.xlane.f32.xlu0 %v2943
        %v2945 = vpop.xlane.xlu0 %2944
        %v2946 = vsel %vm1308, %v2854, 0.0
        %2947 = vadd.xlane.f32.xlu0 %v2946
        %v2948 = vpop.xlane.xlu0 %2947
        %v2949 = vsel %vm1308, %v2856, 0.0
        %2950 = vadd.xlane.f32.xlu0 %v2949
        %v2951 = vpop.xlane.xlu0 %2950
        %v2952 = vsel %vm1308, %v2858, 0.0
        %2953 = vadd.xlane.f32.xlu0 %v2952
        %v2954 = vpop.xlane.xlu0 %2953
        %v2955 = vsel %vm1308, %v2860, 0.0
        %2956 = vadd.xlane.f32.xlu0 %v2955
        %v2957 = vpop.xlane.xlu0 %2956
        %v2958 = vsel %vm1308, %v2862, 0.0
        %2959 = vadd.xlane.f32.xlu0 %v2958
        %v2960 = vpop.xlane.xlu0 %2959
        %v2961 = vsel %vm1308, %v2864, 0.0
        %2962 = vadd.xlane.f32.xlu0 %v2961
        %v2963 = vpop.xlane.xlu0 %2962
        %v2964 = vsel %vm1308, %v2866, 0.0
        %2965 = vadd.xlane.f32.xlu0 %v2964
        %v2966 = vpop.xlane.xlu0 %2965
        %v2967 = vrcp.pop %v2894
        %v2968 = vrcp.pop %v2897
        %v2969 = vrcp.pop %v2900
        %v2970 = vrcp.pop %v2903
        %v2971 = vrcp.pop %v2906
        %v2972 = vrcp.pop %v2909
        %v2973 = vrcp.pop %v2912
        %v2974 = vrcp.pop %v2915
        %v2975 = vrcp.pop %v2918
        %v2976 = vrcp.pop %v2921
        %v2977 = vrcp.pop %v2924
        %v2978 = vrcp.pop %v2927
        %v2979 = vrcp.pop %v2930
        %v2980 = vrcp.pop %v2933
        %v2981 = vrcp.pop %v2936
        %v2982 = vrcp.pop %v2939
        %v2983 = vrcp.pop %v2942
        %v2984 = vrcp.pop %v2945
        %v2985 = vrcp.pop %v2948
        %v2986 = vrcp.pop %v2951
        %v2987 = vrcp.pop %v2954
        %v2988 = vrcp.pop %v2957
        %v2989 = vrcp.pop %v2960
        %v2990 = vrcp.pop %v2963
        %v2991 = vrcp.pop %v2966
        %v2992 = vmul.f32 %v2743, %v2967
        %v2993 = vmul.f32 %v2745, %v2968
        %v2994 = vmul.f32 %v2747, %v2969
        %v2995 = vmul.f32 %v2749, %v2970
        %v2996 = vmul.f32 %v2751, %v2971
        %v2997 = vmul.f32 %v2753, %v2972
        %v2998 = vmul.f32 %v2755, %v2973
        %v2999 = vmul.f32 %v2757, %v2974
        %v3000 = vmul.f32 %v2759, %v2975
        %v3001 = vmul.f32 %v2761, %v2976
        %v3002 = vmul.f32 %v2763, %v2977
        %v3003 = vmul.f32 %v2765, %v2978
        %v3004 = vmul.f32 %v2767, %v2979
        %v3005 = vmul.f32 %v2769, %v2980
        %v3006 = vmul.f32 %v2771, %v2981
        %v3007 = vmul.f32 %v2773, %v2982
        %v3008 = vmul.f32 %v2775, %v2983
        %v3009 = vmul.f32 %v2777, %v2984
        %v3010 = vmul.f32 %v2779, %v2985
        %v3011 = vmul.f32 %v2781, %v2986
        %v3012 = vmul.f32 %v2783, %v2987
        %v3013 = vmul.f32 %v2785, %v2988
        %v3014 = vmul.f32 %v2787, %v2989
        %v3015 = vmul.f32 %v2789, %v2990
        %v3016 = vmul.f32 %v2791, %v2991
        %v3017 = vpack.c.bf16 %v935, %v931
        %v3018 = vpack.c.bf16 %v945, %v941
        %v3019 = vpack.c.bf16 %v955, %v951
        %v3020 = vpack.c.bf16 %v965, %v961
        %v3021 = vpack.c.bf16 %v975, %v971
        %v3022 = vpack.c.bf16 %v985, %v981
        %v3023 = vpack.c.bf16 %v995, %v991
        %v3024 = vpack.c.bf16 %v1005, %v1001
        %v3025 = vpack.c.bf16 %v1015, %v1011
        %v3026 = vpack.c.bf16 %v1025, %v1021
        %v3027 = vpack.c.bf16 %v1035, %v1031
        %v3028 = vpack.c.bf16 %v1045, %v1041
        %v3029 = vpack.c.bf16 %v1051, %v1051
        %s3030 = scalar_lea.vmem [#allocation7], 256
        %v3031 = vld [vmem:[%s3030] sm:$0xff]
        %v3032 = vld [vmem:[%s3030 + $0x8] sm:$0xff]
        %v3033 = vld [vmem:[%s3030 + $0x10] sm:$0xff]
        %v3034 = vld [vmem:[%s3030 + $0x18] sm:$0xff]
        %v3035 = vld [vmem:[%s3030 + $0x20] sm:$0xff]
        %v3036 = vld [vmem:[%s3030 + $0x28] sm:$0xff]
        %v3037 = vld [vmem:[%s3030 + $0x30] sm:$0xff]
        %v3038 = vld [vmem:[%s3030 + $0x38] sm:$0xff]
        %v3039 = vld [vmem:[%s3030 + $0x40] sm:$0xff]
        %v3040 = vld [vmem:[%s3030 + $0x48] sm:$0xff]
        %v3041 = vld [vmem:[%s3030 + $0x50] sm:$0xff]
        %v3042 = vld [vmem:[%s3030 + $0x58] sm:$0xff]
        %v3043 = vld [vmem:[%s3030 + $0x60] sm:$0xff]
        %v3044 = vld [vmem:[%s3030 + $0x68] sm:$0xff]
        %v3045 = vld [vmem:[%s3030 + $0x70] sm:$0xff]
        %v3046 = vld [vmem:[%s3030 + $0x78] sm:$0xff]
        %v3047 = vld [vmem:[%s3030 + $0x80] sm:$0xff]
        %v3048 = vld [vmem:[%s3030 + $0x88] sm:$0xff]
        %v3049 = vld [vmem:[%s3030 + $0x90] sm:$0xff]
        %v3050 = vld [vmem:[%s3030 + $0x98] sm:$0xff]
        %v3051 = vld [vmem:[%s3030 + $0xa0] sm:$0xff]
        %v3052 = vld [vmem:[%s3030 + $0xa8] sm:$0xff]
        %v3053 = vld [vmem:[%s3030 + $0xb0] sm:$0xff]
        %v3054 = vld [vmem:[%s3030 + $0xb8] sm:$0xff]
        %v3055 = vld [vmem:[%s3030 + $0xc0] sm:$0xff]
        %v3056 = vld [vmem:[%s3030 + $0xc8] sm:$0xff]
        %v3057 = vld [vmem:[%s3030 + $0xd0] sm:$0xff]
        %v3058 = vld [vmem:[%s3030 + $0xd8] sm:$0xff]
        %v3059 = vld [vmem:[%s3030 + $0xe0] sm:$0xff]
        %v3060 = vld [vmem:[%s3030 + $0xe8] sm:$0xff]
        %v3061 = vld [vmem:[%s3030 + $0xf0] sm:$0xff]
        %v3062 = vld [vmem:[%s3030 + $0xf8] sm:$0xff]
        %v3095 = vunpack.c.l.b16 %v3031
        %v3096 = vunpack.c.h.b16 %v3031
        %v3097 = vunpack.c.l.b16 %v3032
        %v3098 = vunpack.c.h.b16 %v3032
        %v3099 = vunpack.c.l.b16 %v3033
        %v3100 = vunpack.c.h.b16 %v3033
        %v3101 = vunpack.c.l.b16 %v3034
        %v3102 = vunpack.c.h.b16 %v3034
        %v3103 = vunpack.c.l.b16 %v3035
        %v3104 = vunpack.c.h.b16 %v3035
        %v3105 = vunpack.c.l.b16 %v3036
        %v3106 = vunpack.c.h.b16 %v3036
        %v3107 = vunpack.c.l.b16 %v3037
        %v3108 = vunpack.c.h.b16 %v3037
        %v3109 = vunpack.c.l.b16 %v3038
        %v3110 = vunpack.c.h.b16 %v3038
        %v3111 = vunpack.c.l.b16 %v3039
        %v3112 = vunpack.c.h.b16 %v3039
        %v3113 = vunpack.c.l.b16 %v3040
        %v3114 = vunpack.c.h.b16 %v3040
        %v3115 = vunpack.c.l.b16 %v3041
        %v3116 = vunpack.c.h.b16 %v3041
        %v3117 = vunpack.c.l.b16 %v3042
        %v3118 = vunpack.c.h.b16 %v3042
        %v3119 = vunpack.c.l.b16 %v3043
        %v3120 = vunpack.c.h.b16 %v3043
        %v3121 = vunpack.c.l.b16 %v3044
        %v3122 = vunpack.c.h.b16 %v3044
        %v3123 = vunpack.c.l.b16 %v3045
        %v3124 = vunpack.c.h.b16 %v3045
        %v3125 = vunpack.c.l.b16 %v3046
        %v3126 = vunpack.c.h.b16 %v3046
        %v3127 = vunpack.c.l.b16 %v3047
        %v3128 = vunpack.c.h.b16 %v3047
        %v3129 = vunpack.c.l.b16 %v3048
        %v3130 = vunpack.c.h.b16 %v3048
        %v3131 = vunpack.c.l.b16 %v3049
        %v3132 = vunpack.c.h.b16 %v3049
        %v3133 = vunpack.c.l.b16 %v3050
        %v3134 = vunpack.c.h.b16 %v3050
        %v3135 = vunpack.c.l.b16 %v3051
        %v3136 = vunpack.c.h.b16 %v3051
        %v3137 = vunpack.c.l.b16 %v3052
        %v3138 = vunpack.c.h.b16 %v3052
        %v3139 = vunpack.c.l.b16 %v3053
        %v3140 = vunpack.c.h.b16 %v3053
        %v3141 = vunpack.c.l.b16 %v3054
        %v3142 = vunpack.c.h.b16 %v3054
        %v3143 = vunpack.c.l.b16 %v3055
        %v3144 = vunpack.c.h.b16 %v3055
        %v3145 = vunpack.c.l.b16 %v3056
        %v3146 = vunpack.c.h.b16 %v3056
        %v3147 = vunpack.c.l.b16 %v3057
        %v3148 = vunpack.c.h.b16 %v3057
        %v3149 = vunpack.c.l.b16 %v3058
        %v3150 = vunpack.c.h.b16 %v3058
        %v3151 = vunpack.c.l.b16 %v3059
        %v3152 = vunpack.c.h.b16 %v3059
        %v3153 = vunpack.c.l.b16 %v3060
        %v3154 = vunpack.c.h.b16 %v3060
        %v3155 = vunpack.c.l.b16 %v3061
        %v3156 = vunpack.c.h.b16 %v3061
        %v3157 = vunpack.c.l.b16 %v3062
        %v3158 = vunpack.c.h.b16 %v3062
        %v3159 = vpack.c.b16 %v3099, %v3095
        %v3160 = vpack.c.b16 %v3100, %v3096
        %v3161 = vpack.c.b16 %v3101, %v3097
        %v3162 = vpack.c.b16 %v3102, %v3098
        %v3163 = vpack.c.b16 %v3107, %v3103
        %v3164 = vpack.c.b16 %v3108, %v3104
        %v3165 = vpack.c.b16 %v3109, %v3105
        %v3166 = vpack.c.b16 %v3110, %v3106
        %v3167 = vpack.c.b16 %v3115, %v3111
        %v3168 = vpack.c.b16 %v3116, %v3112
        %v3169 = vpack.c.b16 %v3117, %v3113
        %v3170 = vpack.c.b16 %v3118, %v3114
        %v3171 = vpack.c.b16 %v3123, %v3119
        %v3172 = vpack.c.b16 %v3124, %v3120
        %v3173 = vpack.c.b16 %v3125, %v3121
        %v3174 = vpack.c.b16 %v3126, %v3122
        %v3175 = vpack.c.b16 %v3131, %v3127
        %v3176 = vpack.c.b16 %v3132, %v3128
        %v3177 = vpack.c.b16 %v3133, %v3129
        %v3178 = vpack.c.b16 %v3134, %v3130
        %v3179 = vpack.c.b16 %v3139, %v3135
        %v3180 = vpack.c.b16 %v3140, %v3136
        %v3181 = vpack.c.b16 %v3141, %v3137
        %v3182 = vpack.c.b16 %v3142, %v3138
        %v3183 = vpack.c.b16 %v3147, %v3143
        %v3184 = vpack.c.b16 %v3148, %v3144
        %v3185 = vpack.c.b16 %v3149, %v3145
        %v3186 = vpack.c.b16 %v3150, %v3146
        %v3187 = vpack.c.b16 %v3155, %v3151
        %v3188 = vpack.c.b16 %v3156, %v3152
        %v3189 = vpack.c.b16 %v3157, %v3153
        %v3190 = vpack.c.b16 %v3158, %v3154
        %3223 = vmatprep.subr.bf16.mxu0 %v3188
        %3224 = vmatpush1.bf16.msra.mxu0 %v3187
        %3225 = vmatprep.subr.bf16.mxu0 %v3184
        %3226 = vmatpush1.bf16.msra.mxu0 %v3183
        %3227 = vmatprep.subr.bf16.mxu0 %v3180
        %3228 = vmatpush1.bf16.msra.mxu0 %v3179
        %3229 = vmatprep.subr.bf16.mxu0 %v3176
        %3230 = vmatpush1.bf16.msra.mxu0 %v3175
        %3231 = vmatprep.subr.bf16.mxu0 %v3172
        %3232 = vmatpush1.bf16.msra.mxu0 %v3171
        %3233 = vmatprep.subr.bf16.mxu0 %v3168
        %3234 = vmatpush1.bf16.msra.mxu0 %v3167
        %3235 = vmatprep.subr.bf16.mxu0 %v3164
        %3236 = vmatpush1.bf16.msra.mxu0 %v3163
        %3237 = vmatprep.subr.bf16.mxu0 %v3160
        %3238 = vmatpush1.bf16.msra.mxu0 %v3159
        %3239 = vmatprep.subr.bf16.mxu0 0
        %3240 = vmatpush2.bf16.msra.mxu0 0
        %3241 = vmatprep.subr.bf16.mxu0 0
        %3242 = vmatpush2.bf16.msra.mxu0 0
        %3243 = vmatprep.subr.bf16.mxu0 0
        %3244 = vmatpush2.bf16.msra.mxu0 0
        %3245 = vmatprep.subr.bf16.mxu0 0
        %3246 = vmatpush2.bf16.msra.mxu0 0
        %3247 = vmatprep.subr.bf16.mxu0 0
        %3248 = vmatpush2.bf16.msra.mxu0 0
        %3249 = vmatprep.subr.bf16.mxu0 0
        %3250 = vmatpush2.bf16.msra.mxu0 0
        %3251 = vmatprep.subr.bf16.mxu0 0
        %3252 = vmatpush2.bf16.msra.mxu0 0
        %3253 = vmatprep.subr.bf16.mxu0 0
        %3254 = vmatpush2.bf16.msra.mxu0 0
        %3255 = vmatprep.mubr.bf16.mxu0 0
        %3256 = vmatmul.mubr.bf16.gmra.mxu0 %v3017
        %v3257 = vpop.f32.mrf.mxu0
        %v3258 = vadd.f32 0.0, %v3257
        %v3259 = vpop.f32.mrf.mxu0
        %v3260 = vadd.f32 0.0, %v3259
        %v3261 = vpop.f32.mrf.mxu0
        %v3262 = vadd.f32 0.0, %v3261
        %v3263 = vpop.f32.mrf.mxu0
        %v3264 = vadd.f32 0.0, %v3263
        %3265 = vmatprep.mubr.bf16.mxu0 0
        %3266 = vmatmul.mubr.bf16.gmra.mxu0 %v3018
        %v3267 = vpop.f32.mrf.mxu0
        %v3268 = vadd.f32 0.0, %v3267
        %v3269 = vpop.f32.mrf.mxu0
        %v3270 = vadd.f32 0.0, %v3269
        %v3271 = vpop.f32.mrf.mxu0
        %v3272 = vadd.f32 0.0, %v3271
        %v3273 = vpop.f32.mrf.mxu0
        %v3274 = vadd.f32 0.0, %v3273
        %3275 = vmatprep.mubr.bf16.mxu0 0
        %3276 = vmatmul.mubr.bf16.gmra.mxu0 %v3019
        %v3277 = vpop.f32.mrf.mxu0
        %v3278 = vadd.f32 0.0, %v3277
        %v3279 = vpop.f32.mrf.mxu0
        %v3280 = vadd.f32 0.0, %v3279
        %v3281 = vpop.f32.mrf.mxu0
        %v3282 = vadd.f32 0.0, %v3281
        %v3283 = vpop.f32.mrf.mxu0
        %v3284 = vadd.f32 0.0, %v3283
        %3285 = vmatprep.mubr.bf16.mxu0 0
        %3286 = vmatmul.mubr.bf16.gmra.mxu0 %v3020
        %v3287 = vpop.f32.mrf.mxu0
        %v3288 = vadd.f32 0.0, %v3287
        %v3289 = vpop.f32.mrf.mxu0
        %v3290 = vadd.f32 0.0, %v3289
        %v3291 = vpop.f32.mrf.mxu0
        %v3292 = vadd.f32 0.0, %v3291
        %v3293 = vpop.f32.mrf.mxu0
        %v3294 = vadd.f32 0.0, %v3293
        %3295 = vmatprep.mubr.bf16.mxu0 0
        %3296 = vmatmul.mubr.bf16.gmra.mxu0 %v3021
        %v3297 = vpop.f32.mrf.mxu0
        %v3298 = vadd.f32 0.0, %v3297
        %v3299 = vpop.f32.mrf.mxu0
        %v3300 = vadd.f32 0.0, %v3299
        %v3301 = vpop.f32.mrf.mxu0
        %v3302 = vadd.f32 0.0, %v3301
        %v3303 = vpop.f32.mrf.mxu0
        %v3304 = vadd.f32 0.0, %v3303
        %3305 = vmatprep.mubr.bf16.mxu0 0
        %3306 = vmatmul.mubr.bf16.gmra.mxu0 %v3022
        %v3307 = vpop.f32.mrf.mxu0
        %v3308 = vadd.f32 0.0, %v3307
        %v3309 = vpop.f32.mrf.mxu0
        %v3310 = vadd.f32 0.0, %v3309
        %v3311 = vpop.f32.mrf.mxu0
        %v3312 = vadd.f32 0.0, %v3311
        %v3313 = vpop.f32.mrf.mxu0
        %v3314 = vadd.f32 0.0, %v3313
        %3315 = vmatprep.mubr.bf16.mxu0 0
        %3316 = vmatmul.mubr.bf16.gmra.mxu0 %v3023
        %v3317 = vpop.f32.mrf.mxu0
        %v3318 = vadd.f32 0.0, %v3317
        %v3319 = vpop.f32.mrf.mxu0
        %v3320 = vadd.f32 0.0, %v3319
        %v3321 = vpop.f32.mrf.mxu0
        %v3322 = vadd.f32 0.0, %v3321
        %v3323 = vpop.f32.mrf.mxu0
        %v3324 = vadd.f32 0.0, %v3323
        %3325 = vmatprep.mubr.bf16.mxu0 0
        %3326 = vmatmul.mubr.bf16.gmra.mxu0 %v3024
        %v3327 = vpop.f32.mrf.mxu0
        %v3328 = vadd.f32 0.0, %v3327
        %v3329 = vpop.f32.mrf.mxu0
        %v3330 = vadd.f32 0.0, %v3329
        %v3331 = vpop.f32.mrf.mxu0
        %v3332 = vadd.f32 0.0, %v3331
        %v3333 = vpop.f32.mrf.mxu0
        %v3334 = vadd.f32 0.0, %v3333
        %3335 = vmatprep.mubr.bf16.mxu0 0
        %3336 = vmatmul.mubr.bf16.gmra.mxu0 %v3025
        %v3337 = vpop.f32.mrf.mxu0
        %v3338 = vadd.f32 0.0, %v3337
        %v3339 = vpop.f32.mrf.mxu0
        %v3340 = vadd.f32 0.0, %v3339
        %v3341 = vpop.f32.mrf.mxu0
        %v3342 = vadd.f32 0.0, %v3341
        %v3343 = vpop.f32.mrf.mxu0
        %v3344 = vadd.f32 0.0, %v3343
        %3345 = vmatprep.mubr.bf16.mxu0 0
        %3346 = vmatmul.mubr.bf16.gmra.mxu0 %v3026
        %v3347 = vpop.f32.mrf.mxu0
        %v3348 = vadd.f32 0.0, %v3347
        %v3349 = vpop.f32.mrf.mxu0
        %v3350 = vadd.f32 0.0, %v3349
        %v3351 = vpop.f32.mrf.mxu0
        %v3352 = vadd.f32 0.0, %v3351
        %v3353 = vpop.f32.mrf.mxu0
        %v3354 = vadd.f32 0.0, %v3353
        %3355 = vmatprep.mubr.bf16.mxu0 0
        %3356 = vmatmul.mubr.bf16.gmra.mxu0 %v3027
        %v3357 = vpop.f32.mrf.mxu0
        %v3358 = vadd.f32 0.0, %v3357
        %v3359 = vpop.f32.mrf.mxu0
        %v3360 = vadd.f32 0.0, %v3359
        %v3361 = vpop.f32.mrf.mxu0
        %v3362 = vadd.f32 0.0, %v3361
        %v3363 = vpop.f32.mrf.mxu0
        %v3364 = vadd.f32 0.0, %v3363
        %3365 = vmatprep.mubr.bf16.mxu0 0
        %3366 = vmatmul.mubr.bf16.gmra.mxu0 %v3028
        %v3367 = vpop.f32.mrf.mxu0
        %v3368 = vadd.f32 0.0, %v3367
        %v3369 = vpop.f32.mrf.mxu0
        %v3370 = vadd.f32 0.0, %v3369
        %v3371 = vpop.f32.mrf.mxu0
        %v3372 = vadd.f32 0.0, %v3371
        %v3373 = vpop.f32.mrf.mxu0
        %v3374 = vadd.f32 0.0, %v3373
        %3375 = vmatprep.mubr.bf16.mxu0 0
        %3376 = vmatmul.mubr.bf16.gmra.mxu0 %v3029
        %v3377 = vpop.f32.mrf.mxu0
        %v3378 = vadd.f32 0.0, %v3377
        %v3379 = vpop.f32.mrf.mxu0
        %v3380 = vadd.f32 0.0, %v3379
        %v3381 = vpop.f32.mrf.mxu0
        %v3382 = vpop.f32.mrf.mxu0
        %3383 = vdwg.mxu0
        %3384 = vmatprep.subr.bf16.mxu0 %v3190
        %3385 = vmatpush1.bf16.msra.mxu0 %v3189
        %3386 = vmatprep.subr.bf16.mxu0 %v3186
        %3387 = vmatpush1.bf16.msra.mxu0 %v3185
        %3388 = vmatprep.subr.bf16.mxu0 %v3182
        %3389 = vmatpush1.bf16.msra.mxu0 %v3181
        %3390 = vmatprep.subr.bf16.mxu0 %v3178
        %3391 = vmatpush1.bf16.msra.mxu0 %v3177
        %3392 = vmatprep.subr.bf16.mxu0 %v3174
        %3393 = vmatpush1.bf16.msra.mxu0 %v3173
        %3394 = vmatprep.subr.bf16.mxu0 %v3170
        %3395 = vmatpush1.bf16.msra.mxu0 %v3169
        %3396 = vmatprep.subr.bf16.mxu0 %v3166
        %3397 = vmatpush1.bf16.msra.mxu0 %v3165
        %3398 = vmatprep.subr.bf16.mxu0 %v3162
        %3399 = vmatpush1.bf16.msra.mxu0 %v3161
        %3400 = vmatprep.subr.bf16.mxu0 0
        %3401 = vmatpush2.bf16.msra.mxu0 0
        %3402 = vmatprep.subr.bf16.mxu0 0
        %3403 = vmatpush2.bf16.msra.mxu0 0
        %3404 = vmatprep.subr.bf16.mxu0 0
        %3405 = vmatpush2.bf16.msra.mxu0 0
        %3406 = vmatprep.subr.bf16.mxu0 0
        %3407 = vmatpush2.bf16.msra.mxu0 0
        %3408 = vmatprep.subr.bf16.mxu0 0
        %3409 = vmatpush2.bf16.msra.mxu0 0
        %3410 = vmatprep.subr.bf16.mxu0 0
        %3411 = vmatpush2.bf16.msra.mxu0 0
        %3412 = vmatprep.subr.bf16.mxu0 0
        %3413 = vmatpush2.bf16.msra.mxu0 0
        %3414 = vmatprep.subr.bf16.mxu0 0
        %3415 = vmatpush2.bf16.msra.mxu0 0
        %3416 = vmatprep.mubr.bf16.mxu0 0
        %3417 = vmatmul.mubr.bf16.gmra.mxu0 %v3017
        %v3418 = vpop.f32.mrf.mxu0
        %v3419 = vadd.f32 0.0, %v3418
        %v3420 = vpop.f32.mrf.mxu0
        %v3421 = vadd.f32 0.0, %v3420
        %v3422 = vpop.f32.mrf.mxu0
        %v3423 = vadd.f32 0.0, %v3422
        %v3424 = vpop.f32.mrf.mxu0
        %v3425 = vadd.f32 0.0, %v3424
        %3426 = vmatprep.mubr.bf16.mxu0 0
        %3427 = vmatmul.mubr.bf16.gmra.mxu0 %v3018
        %v3428 = vpop.f32.mrf.mxu0
        %v3429 = vadd.f32 0.0, %v3428
        %v3430 = vpop.f32.mrf.mxu0
        %v3431 = vadd.f32 0.0, %v3430
        %v3432 = vpop.f32.mrf.mxu0
        %v3433 = vadd.f32 0.0, %v3432
        %v3434 = vpop.f32.mrf.mxu0
        %v3435 = vadd.f32 0.0, %v3434
        %3436 = vmatprep.mubr.bf16.mxu0 0
        %3437 = vmatmul.mubr.bf16.gmra.mxu0 %v3019
        %v3438 = vpop.f32.mrf.mxu0
        %v3439 = vadd.f32 0.0, %v3438
        %v3440 = vpop.f32.mrf.mxu0
        %v3441 = vadd.f32 0.0, %v3440
        %v3442 = vpop.f32.mrf.mxu0
        %v3443 = vadd.f32 0.0, %v3442
        %v3444 = vpop.f32.mrf.mxu0
        %v3445 = vadd.f32 0.0, %v3444
        %3446 = vmatprep.mubr.bf16.mxu0 0
        %3447 = vmatmul.mubr.bf16.gmra.mxu0 %v3020
        %v3448 = vpop.f32.mrf.mxu0
        %v3449 = vadd.f32 0.0, %v3448
        %v3450 = vpop.f32.mrf.mxu0
        %v3451 = vadd.f32 0.0, %v3450
        %v3452 = vpop.f32.mrf.mxu0
        %v3453 = vadd.f32 0.0, %v3452
        %v3454 = vpop.f32.mrf.mxu0
        %v3455 = vadd.f32 0.0, %v3454
        %3456 = vmatprep.mubr.bf16.mxu0 0
        %3457 = vmatmul.mubr.bf16.gmra.mxu0 %v3021
        %v3458 = vpop.f32.mrf.mxu0
        %v3459 = vadd.f32 0.0, %v3458
        %v3460 = vpop.f32.mrf.mxu0
        %v3461 = vadd.f32 0.0, %v3460
        %v3462 = vpop.f32.mrf.mxu0
        %v3463 = vadd.f32 0.0, %v3462
        %v3464 = vpop.f32.mrf.mxu0
        %v3465 = vadd.f32 0.0, %v3464
        %3466 = vmatprep.mubr.bf16.mxu0 0
        %3467 = vmatmul.mubr.bf16.gmra.mxu0 %v3022
        %v3468 = vpop.f32.mrf.mxu0
        %v3469 = vadd.f32 0.0, %v3468
        %v3470 = vpop.f32.mrf.mxu0
        %v3471 = vadd.f32 0.0, %v3470
        %v3472 = vpop.f32.mrf.mxu0
        %v3473 = vadd.f32 0.0, %v3472
        %v3474 = vpop.f32.mrf.mxu0
        %v3475 = vadd.f32 0.0, %v3474
        %3476 = vmatprep.mubr.bf16.mxu0 0
        %3477 = vmatmul.mubr.bf16.gmra.mxu0 %v3023
        %v3478 = vpop.f32.mrf.mxu0
        %v3479 = vadd.f32 0.0, %v3478
        %v3480 = vpop.f32.mrf.mxu0
        %v3481 = vadd.f32 0.0, %v3480
        %v3482 = vpop.f32.mrf.mxu0
        %v3483 = vadd.f32 0.0, %v3482
        %v3484 = vpop.f32.mrf.mxu0
        %v3485 = vadd.f32 0.0, %v3484
        %3486 = vmatprep.mubr.bf16.mxu0 0
        %3487 = vmatmul.mubr.bf16.gmra.mxu0 %v3024
        %v3488 = vpop.f32.mrf.mxu0
        %v3489 = vadd.f32 0.0, %v3488
        %v3490 = vpop.f32.mrf.mxu0
        %v3491 = vadd.f32 0.0, %v3490
        %v3492 = vpop.f32.mrf.mxu0
        %v3493 = vadd.f32 0.0, %v3492
        %v3494 = vpop.f32.mrf.mxu0
        %v3495 = vadd.f32 0.0, %v3494
        %3496 = vmatprep.mubr.bf16.mxu0 0
        %3497 = vmatmul.mubr.bf16.gmra.mxu0 %v3025
        %v3498 = vpop.f32.mrf.mxu0
        %v3499 = vadd.f32 0.0, %v3498
        %v3500 = vpop.f32.mrf.mxu0
        %v3501 = vadd.f32 0.0, %v3500
        %v3502 = vpop.f32.mrf.mxu0
        %v3503 = vadd.f32 0.0, %v3502
        %v3504 = vpop.f32.mrf.mxu0
        %v3505 = vadd.f32 0.0, %v3504
        %3506 = vmatprep.mubr.bf16.mxu0 0
        %3507 = vmatmul.mubr.bf16.gmra.mxu0 %v3026
        %v3508 = vpop.f32.mrf.mxu0
        %v3509 = vadd.f32 0.0, %v3508
        %v3510 = vpop.f32.mrf.mxu0
        %v3511 = vadd.f32 0.0, %v3510
        %v3512 = vpop.f32.mrf.mxu0
        %v3513 = vadd.f32 0.0, %v3512
        %v3514 = vpop.f32.mrf.mxu0
        %v3515 = vadd.f32 0.0, %v3514
        %3516 = vmatprep.mubr.bf16.mxu0 0
        %3517 = vmatmul.mubr.bf16.gmra.mxu0 %v3027
        %v3518 = vpop.f32.mrf.mxu0
        %v3519 = vadd.f32 0.0, %v3518
        %v3520 = vpop.f32.mrf.mxu0
        %v3521 = vadd.f32 0.0, %v3520
        %v3522 = vpop.f32.mrf.mxu0
        %v3523 = vadd.f32 0.0, %v3522
        %v3524 = vpop.f32.mrf.mxu0
        %v3525 = vadd.f32 0.0, %v3524
        %3526 = vmatprep.mubr.bf16.mxu0 0
        %3527 = vmatmul.mubr.bf16.gmra.mxu0 %v3028
        %v3528 = vpop.f32.mrf.mxu0
        %v3529 = vadd.f32 0.0, %v3528
        %v3530 = vpop.f32.mrf.mxu0
        %v3531 = vadd.f32 0.0, %v3530
        %v3532 = vpop.f32.mrf.mxu0
        %v3533 = vadd.f32 0.0, %v3532
        %v3534 = vpop.f32.mrf.mxu0
        %v3535 = vadd.f32 0.0, %v3534
        %3536 = vmatprep.mubr.bf16.mxu0 0
        %3537 = vmatmul.mubr.bf16.gmra.mxu0 %v3029
        %v3538 = vpop.f32.mrf.mxu0
        %v3539 = vadd.f32 0.0, %v3538
        %v3540 = vpop.f32.mrf.mxu0
        %v3541 = vadd.f32 0.0, %v3540
        %v3542 = vpop.f32.mrf.mxu0
        %v3543 = vpop.f32.mrf.mxu0
        %3544 = vdwg.mxu0
        %3546 = vset.pattern.permute.xlu0 4
        %3547 = vperm.xlu0 %3546, %v2992
        %v3548 = vpop.permute.xlu0 %3547
        %3551 = vset.pattern.permute.xlu0 4
        %3552 = vperm.xlu0 %3551, %v2993
        %v3553 = vpop.permute.xlu0 %3552
        %3556 = vset.pattern.permute.xlu0 4
        %3557 = vperm.xlu0 %3556, %v2994
        %v3558 = vpop.permute.xlu0 %3557
        %3561 = vset.pattern.permute.xlu0 4
        %3562 = vperm.xlu0 %3561, %v2995
        %v3563 = vpop.permute.xlu0 %3562
        %3566 = vset.pattern.permute.xlu0 4
        %3567 = vperm.xlu0 %3566, %v2996
        %v3568 = vpop.permute.xlu0 %3567
        %3571 = vset.pattern.permute.xlu0 4
        %3572 = vperm.xlu0 %3571, %v2997
        %v3573 = vpop.permute.xlu0 %3572
        %3576 = vset.pattern.permute.xlu0 4
        %3577 = vperm.xlu0 %3576, %v2998
        %v3578 = vpop.permute.xlu0 %3577
        %3581 = vset.pattern.permute.xlu0 4
        %3582 = vperm.xlu0 %3581, %v2999
        %v3583 = vpop.permute.xlu0 %3582
        %3586 = vset.pattern.permute.xlu0 4
        %3587 = vperm.xlu0 %3586, %v3000
        %v3588 = vpop.permute.xlu0 %3587
        %3591 = vset.pattern.permute.xlu0 4
        %3592 = vperm.xlu0 %3591, %v3001
        %v3593 = vpop.permute.xlu0 %3592
        %3596 = vset.pattern.permute.xlu0 4
        %3597 = vperm.xlu0 %3596, %v3002
        %v3598 = vpop.permute.xlu0 %3597
        %3601 = vset.pattern.permute.xlu0 4
        %3602 = vperm.xlu0 %3601, %v3003
        %v3603 = vpop.permute.xlu0 %3602
        %3606 = vset.pattern.permute.xlu0 4
        %3607 = vperm.xlu0 %3606, %v3004
        %v3608 = vpop.permute.xlu0 %3607
        %3611 = vset.pattern.permute.xlu0 4
        %3612 = vperm.xlu0 %3611, %v3005
        %v3613 = vpop.permute.xlu0 %3612
        %3616 = vset.pattern.permute.xlu0 4
        %3617 = vperm.xlu0 %3616, %v3006
        %v3618 = vpop.permute.xlu0 %3617
        %3621 = vset.pattern.permute.xlu0 4
        %3622 = vperm.xlu0 %3621, %v3007
        %v3623 = vpop.permute.xlu0 %3622
        %3626 = vset.pattern.permute.xlu0 4
        %3627 = vperm.xlu0 %3626, %v3008
        %v3628 = vpop.permute.xlu0 %3627
        %3631 = vset.pattern.permute.xlu0 4
        %3632 = vperm.xlu0 %3631, %v3009
        %v3633 = vpop.permute.xlu0 %3632
        %3636 = vset.pattern.permute.xlu0 4
        %3637 = vperm.xlu0 %3636, %v3010
        %v3638 = vpop.permute.xlu0 %3637
        %3641 = vset.pattern.permute.xlu0 4
        %3642 = vperm.xlu0 %3641, %v3011
        %v3643 = vpop.permute.xlu0 %3642
        %3646 = vset.pattern.permute.xlu0 4
        %3647 = vperm.xlu0 %3646, %v3012
        %v3648 = vpop.permute.xlu0 %3647
        %3651 = vset.pattern.permute.xlu0 4
        %3652 = vperm.xlu0 %3651, %v3013
        %v3653 = vpop.permute.xlu0 %3652
        %3656 = vset.pattern.permute.xlu0 4
        %3657 = vperm.xlu0 %3656, %v3014
        %v3658 = vpop.permute.xlu0 %3657
        %3661 = vset.pattern.permute.xlu0 4
        %3662 = vperm.xlu0 %3661, %v3015
        %v3663 = vpop.permute.xlu0 %3662
        %3666 = vset.pattern.permute.xlu0 4
        %3667 = vperm.xlu0 %3666, %v3016
        %v3668 = vpop.permute.xlu0 %3667
        %v3670 = vmul.f32 %v3548, %v3258
        %v3671 = vmul.f32 %v3553, %v3262
        %v3672 = vmul.f32 %v3558, %v3268
        %v3673 = vmul.f32 %v3563, %v3272
        %v3674 = vmul.f32 %v3568, %v3278
        %v3675 = vmul.f32 %v3573, %v3282
        %v3676 = vmul.f32 %v3578, %v3288
        %v3677 = vmul.f32 %v3583, %v3292
        %v3678 = vmul.f32 %v3588, %v3298
        %v3679 = vmul.f32 %v3593, %v3302
        %v3680 = vmul.f32 %v3598, %v3308
        %v3681 = vmul.f32 %v3603, %v3312
        %v3682 = vmul.f32 %v3608, %v3318
        %v3683 = vmul.f32 %v3613, %v3322
        %v3684 = vmul.f32 %v3618, %v3328
        %v3685 = vmul.f32 %v3623, %v3332
        %v3686 = vmul.f32 %v3628, %v3338
        %v3687 = vmul.f32 %v3633, %v3342
        %v3688 = vmul.f32 %v3638, %v3348
        %v3689 = vmul.f32 %v3643, %v3352
        %v3690 = vmul.f32 %v3648, %v3358
        %v3691 = vmul.f32 %v3653, %v3362
        %v3692 = vmul.f32 %v3658, %v3368
        %v3693 = vmul.f32 %v3663, %v3372
        %v3694 = vmul.f32 %v3668, %v3378
        %3695 = vset.pattern.permute.xlu0 5
        %3696 = vperm.xlu0 %3695, %v2992
        %v3697 = vpop.permute.xlu0 %3696
        %3699 = vset.pattern.permute.xlu0 5
        %3700 = vperm.xlu0 %3699, %v2993
        %v3701 = vpop.permute.xlu0 %3700
        %3703 = vset.pattern.permute.xlu0 5
        %3704 = vperm.xlu0 %3703, %v2994
        %v3705 = vpop.permute.xlu0 %3704
        %3707 = vset.pattern.permute.xlu0 5
        %3708 = vperm.xlu0 %3707, %v2995
        %v3709 = vpop.permute.xlu0 %3708
        %3711 = vset.pattern.permute.xlu0 5
        %3712 = vperm.xlu0 %3711, %v2996
        %v3713 = vpop.permute.xlu0 %3712
        %3715 = vset.pattern.permute.xlu0 5
        %3716 = vperm.xlu0 %3715, %v2997
        %v3717 = vpop.permute.xlu0 %3716
        %3719 = vset.pattern.permute.xlu0 5
        %3720 = vperm.xlu0 %3719, %v2998
        %v3721 = vpop.permute.xlu0 %3720
        %3723 = vset.pattern.permute.xlu0 5
        %3724 = vperm.xlu0 %3723, %v2999
        %v3725 = vpop.permute.xlu0 %3724
        %3727 = vset.pattern.permute.xlu0 5
        %3728 = vperm.xlu0 %3727, %v3000
        %v3729 = vpop.permute.xlu0 %3728
        %3731 = vset.pattern.permute.xlu0 5
        %3732 = vperm.xlu0 %3731, %v3001
        %v3733 = vpop.permute.xlu0 %3732
        %3735 = vset.pattern.permute.xlu0 5
        %3736 = vperm.xlu0 %3735, %v3002
        %v3737 = vpop.permute.xlu0 %3736
        %3739 = vset.pattern.permute.xlu0 5
        %3740 = vperm.xlu0 %3739, %v3003
        %v3741 = vpop.permute.xlu0 %3740
        %3743 = vset.pattern.permute.xlu0 5
        %3744 = vperm.xlu0 %3743, %v3004
        %v3745 = vpop.permute.xlu0 %3744
        %3747 = vset.pattern.permute.xlu0 5
        %3748 = vperm.xlu0 %3747, %v3005
        %v3749 = vpop.permute.xlu0 %3748
        %3751 = vset.pattern.permute.xlu0 5
        %3752 = vperm.xlu0 %3751, %v3006
        %v3753 = vpop.permute.xlu0 %3752
        %3755 = vset.pattern.permute.xlu0 5
        %3756 = vperm.xlu0 %3755, %v3007
        %v3757 = vpop.permute.xlu0 %3756
        %3759 = vset.pattern.permute.xlu0 5
        %3760 = vperm.xlu0 %3759, %v3008
        %v3761 = vpop.permute.xlu0 %3760
        %3763 = vset.pattern.permute.xlu0 5
        %3764 = vperm.xlu0 %3763, %v3009
        %v3765 = vpop.permute.xlu0 %3764
        %3767 = vset.pattern.permute.xlu0 5
        %3768 = vperm.xlu0 %3767, %v3010
        %v3769 = vpop.permute.xlu0 %3768
        %3771 = vset.pattern.permute.xlu0 5
        %3772 = vperm.xlu0 %3771, %v3011
        %v3773 = vpop.permute.xlu0 %3772
        %3775 = vset.pattern.permute.xlu0 5
        %3776 = vperm.xlu0 %3775, %v3012
        %v3777 = vpop.permute.xlu0 %3776
        %3779 = vset.pattern.permute.xlu0 5
        %3780 = vperm.xlu0 %3779, %v3013
        %v3781 = vpop.permute.xlu0 %3780
        %3783 = vset.pattern.permute.xlu0 5
        %3784 = vperm.xlu0 %3783, %v3014
        %v3785 = vpop.permute.xlu0 %3784
        %3787 = vset.pattern.permute.xlu0 5
        %3788 = vperm.xlu0 %3787, %v3015
        %v3789 = vpop.permute.xlu0 %3788
        %3791 = vset.pattern.permute.xlu0 5
        %3792 = vperm.xlu0 %3791, %v3016
        %v3793 = vpop.permute.xlu0 %3792
        %v3795 = vmul.f32 %v3697, %v3260
        %v3796 = vmul.f32 %v3701, %v3264
        %v3797 = vmul.f32 %v3705, %v3270
        %v3798 = vmul.f32 %v3709, %v3274
        %v3799 = vmul.f32 %v3713, %v3280
        %v3800 = vmul.f32 %v3717, %v3284
        %v3801 = vmul.f32 %v3721, %v3290
        %v3802 = vmul.f32 %v3725, %v3294
        %v3803 = vmul.f32 %v3729, %v3300
        %v3804 = vmul.f32 %v3733, %v3304
        %v3805 = vmul.f32 %v3737, %v3310
        %v3806 = vmul.f32 %v3741, %v3314
        %v3807 = vmul.f32 %v3745, %v3320
        %v3808 = vmul.f32 %v3749, %v3324
        %v3809 = vmul.f32 %v3753, %v3330
        %v3810 = vmul.f32 %v3757, %v3334
        %v3811 = vmul.f32 %v3761, %v3340
        %v3812 = vmul.f32 %v3765, %v3344
        %v3813 = vmul.f32 %v3769, %v3350
        %v3814 = vmul.f32 %v3773, %v3354
        %v3815 = vmul.f32 %v3777, %v3360
        %v3816 = vmul.f32 %v3781, %v3364
        %v3817 = vmul.f32 %v3785, %v3370
        %v3818 = vmul.f32 %v3789, %v3374
        %v3819 = vmul.f32 %v3793, %v3380
        %v3820 = vadd.f32 %v3670, %v3795
        %v3821 = vadd.f32 %v3671, %v3796
        %v3822 = vadd.f32 %v3672, %v3797
        %v3823 = vadd.f32 %v3673, %v3798
        %v3824 = vadd.f32 %v3674, %v3799
        %v3825 = vadd.f32 %v3675, %v3800
        %v3826 = vadd.f32 %v3676, %v3801
        %v3827 = vadd.f32 %v3677, %v3802
        %v3828 = vadd.f32 %v3678, %v3803
        %v3829 = vadd.f32 %v3679, %v3804
        %v3830 = vadd.f32 %v3680, %v3805
        %v3831 = vadd.f32 %v3681, %v3806
        %v3832 = vadd.f32 %v3682, %v3807
        %v3833 = vadd.f32 %v3683, %v3808
        %v3834 = vadd.f32 %v3684, %v3809
        %v3835 = vadd.f32 %v3685, %v3810
        %v3836 = vadd.f32 %v3686, %v3811
        %v3837 = vadd.f32 %v3687, %v3812
        %v3838 = vadd.f32 %v3688, %v3813
        %v3839 = vadd.f32 %v3689, %v3814
        %v3840 = vadd.f32 %v3690, %v3815
        %v3841 = vadd.f32 %v3691, %v3816
        %v3842 = vadd.f32 %v3692, %v3817
        %v3843 = vadd.f32 %v3693, %v3818
        %v3844 = vadd.f32 %v3694, %v3819
        %3845 = vset.pattern.permute.xlu0 6
        %3846 = vperm.xlu0 %3845, %v2992
        %v3847 = vpop.permute.xlu0 %3846
        %3849 = vset.pattern.permute.xlu0 6
        %3850 = vperm.xlu0 %3849, %v2993
        %v3851 = vpop.permute.xlu0 %3850
        %3853 = vset.pattern.permute.xlu0 6
        %3854 = vperm.xlu0 %3853, %v2994
        %v3855 = vpop.permute.xlu0 %3854
        %3857 = vset.pattern.permute.xlu0 6
        %3858 = vperm.xlu0 %3857, %v2995
        %v3859 = vpop.permute.xlu0 %3858
        %3861 = vset.pattern.permute.xlu0 6
        %3862 = vperm.xlu0 %3861, %v2996
        %v3863 = vpop.permute.xlu0 %3862
        %3865 = vset.pattern.permute.xlu0 6
        %3866 = vperm.xlu0 %3865, %v2997
        %v3867 = vpop.permute.xlu0 %3866
        %3869 = vset.pattern.permute.xlu0 6
        %3870 = vperm.xlu0 %3869, %v2998
        %v3871 = vpop.permute.xlu0 %3870
        %3873 = vset.pattern.permute.xlu0 6
        %3874 = vperm.xlu0 %3873, %v2999
        %v3875 = vpop.permute.xlu0 %3874
        %3877 = vset.pattern.permute.xlu0 6
        %3878 = vperm.xlu0 %3877, %v3000
        %v3879 = vpop.permute.xlu0 %3878
        %3881 = vset.pattern.permute.xlu0 6
        %3882 = vperm.xlu0 %3881, %v3001
        %v3883 = vpop.permute.xlu0 %3882
        %3885 = vset.pattern.permute.xlu0 6
        %3886 = vperm.xlu0 %3885, %v3002
        %v3887 = vpop.permute.xlu0 %3886
        %3889 = vset.pattern.permute.xlu0 6
        %3890 = vperm.xlu0 %3889, %v3003
        %v3891 = vpop.permute.xlu0 %3890
        %3893 = vset.pattern.permute.xlu0 6
        %3894 = vperm.xlu0 %3893, %v3004
        %v3895 = vpop.permute.xlu0 %3894
        %3897 = vset.pattern.permute.xlu0 6
        %3898 = vperm.xlu0 %3897, %v3005
        %v3899 = vpop.permute.xlu0 %3898
        %3901 = vset.pattern.permute.xlu0 6
        %3902 = vperm.xlu0 %3901, %v3006
        %v3903 = vpop.permute.xlu0 %3902
        %3905 = vset.pattern.permute.xlu0 6
        %3906 = vperm.xlu0 %3905, %v3007
        %v3907 = vpop.permute.xlu0 %3906
        %3909 = vset.pattern.permute.xlu0 6
        %3910 = vperm.xlu0 %3909, %v3008
        %v3911 = vpop.permute.xlu0 %3910
        %3913 = vset.pattern.permute.xlu0 6
        %3914 = vperm.xlu0 %3913, %v3009
        %v3915 = vpop.permute.xlu0 %3914
        %3917 = vset.pattern.permute.xlu0 6
        %3918 = vperm.xlu0 %3917, %v3010
        %v3919 = vpop.permute.xlu0 %3918
        %3921 = vset.pattern.permute.xlu0 6
        %3922 = vperm.xlu0 %3921, %v3011
        %v3923 = vpop.permute.xlu0 %3922
        %3925 = vset.pattern.permute.xlu0 6
        %3926 = vperm.xlu0 %3925, %v3012
        %v3927 = vpop.permute.xlu0 %3926
        %3929 = vset.pattern.permute.xlu0 6
        %3930 = vperm.xlu0 %3929, %v3013
        %v3931 = vpop.permute.xlu0 %3930
        %3933 = vset.pattern.permute.xlu0 6
        %3934 = vperm.xlu0 %3933, %v3014
        %v3935 = vpop.permute.xlu0 %3934
        %3937 = vset.pattern.permute.xlu0 6
        %3938 = vperm.xlu0 %3937, %v3015
        %v3939 = vpop.permute.xlu0 %3938
        %3941 = vset.pattern.permute.xlu0 6
        %3942 = vperm.xlu0 %3941, %v3016
        %v3943 = vpop.permute.xlu0 %3942
        %v3945 = vmul.f32 %v3847, %v3419
        %v3946 = vmul.f32 %v3851, %v3423
        %v3947 = vmul.f32 %v3855, %v3429
        %v3948 = vmul.f32 %v3859, %v3433
        %v3949 = vmul.f32 %v3863, %v3439
        %v3950 = vmul.f32 %v3867, %v3443
        %v3951 = vmul.f32 %v3871, %v3449
        %v3952 = vmul.f32 %v3875, %v3453
        %v3953 = vmul.f32 %v3879, %v3459
        %v3954 = vmul.f32 %v3883, %v3463
        %v3955 = vmul.f32 %v3887, %v3469
        %v3956 = vmul.f32 %v3891, %v3473
        %v3957 = vmul.f32 %v3895, %v3479
        %v3958 = vmul.f32 %v3899, %v3483
        %v3959 = vmul.f32 %v3903, %v3489
        %v3960 = vmul.f32 %v3907, %v3493
        %v3961 = vmul.f32 %v3911, %v3499
        %v3962 = vmul.f32 %v3915, %v3503
        %v3963 = vmul.f32 %v3919, %v3509
        %v3964 = vmul.f32 %v3923, %v3513
        %v3965 = vmul.f32 %v3927, %v3519
        %v3966 = vmul.f32 %v3931, %v3523
        %v3967 = vmul.f32 %v3935, %v3529
        %v3968 = vmul.f32 %v3939, %v3533
        %v3969 = vmul.f32 %v3943, %v3539
        %v3970 = vadd.f32 %v3820, %v3945
        %v3971 = vadd.f32 %v3821, %v3946
        %v3972 = vadd.f32 %v3822, %v3947
        %v3973 = vadd.f32 %v3823, %v3948
        %v3974 = vadd.f32 %v3824, %v3949
        %v3975 = vadd.f32 %v3825, %v3950
        %v3976 = vadd.f32 %v3826, %v3951
        %v3977 = vadd.f32 %v3827, %v3952
        %v3978 = vadd.f32 %v3828, %v3953
        %v3979 = vadd.f32 %v3829, %v3954
        %v3980 = vadd.f32 %v3830, %v3955
        %v3981 = vadd.f32 %v3831, %v3956
        %v3982 = vadd.f32 %v3832, %v3957
        %v3983 = vadd.f32 %v3833, %v3958
        %v3984 = vadd.f32 %v3834, %v3959
        %v3985 = vadd.f32 %v3835, %v3960
        %v3986 = vadd.f32 %v3836, %v3961
        %v3987 = vadd.f32 %v3837, %v3962
        %v3988 = vadd.f32 %v3838, %v3963
        %v3989 = vadd.f32 %v3839, %v3964
        %v3990 = vadd.f32 %v3840, %v3965
        %v3991 = vadd.f32 %v3841, %v3966
        %v3992 = vadd.f32 %v3842, %v3967
        %v3993 = vadd.f32 %v3843, %v3968
        %v3994 = vadd.f32 %v3844, %v3969
        %3995 = vset.pattern.permute.xlu0 7
        %3996 = vperm.xlu0 %3995, %v2992
        %v3997 = vpop.permute.xlu0 %3996
        %3999 = vset.pattern.permute.xlu0 7
        %4000 = vperm.xlu0 %3999, %v2993
        %v4001 = vpop.permute.xlu0 %4000
        %4003 = vset.pattern.permute.xlu0 7
        %4004 = vperm.xlu0 %4003, %v2994
        %v4005 = vpop.permute.xlu0 %4004
        %4007 = vset.pattern.permute.xlu0 7
        %4008 = vperm.xlu0 %4007, %v2995
        %v4009 = vpop.permute.xlu0 %4008
        %4011 = vset.pattern.permute.xlu0 7
        %4012 = vperm.xlu0 %4011, %v2996
        %v4013 = vpop.permute.xlu0 %4012
        %4015 = vset.pattern.permute.xlu0 7
        %4016 = vperm.xlu0 %4015, %v2997
        %v4017 = vpop.permute.xlu0 %4016
        %4019 = vset.pattern.permute.xlu0 7
        %4020 = vperm.xlu0 %4019, %v2998
        %v4021 = vpop.permute.xlu0 %4020
        %4023 = vset.pattern.permute.xlu0 7
        %4024 = vperm.xlu0 %4023, %v2999
        %v4025 = vpop.permute.xlu0 %4024
        %4027 = vset.pattern.permute.xlu0 7
        %4028 = vperm.xlu0 %4027, %v3000
        %v4029 = vpop.permute.xlu0 %4028
        %4031 = vset.pattern.permute.xlu0 7
        %4032 = vperm.xlu0 %4031, %v3001
        %v4033 = vpop.permute.xlu0 %4032
        %4035 = vset.pattern.permute.xlu0 7
        %4036 = vperm.xlu0 %4035, %v3002
        %v4037 = vpop.permute.xlu0 %4036
        %4039 = vset.pattern.permute.xlu0 7
        %4040 = vperm.xlu0 %4039, %v3003
        %v4041 = vpop.permute.xlu0 %4040
        %4043 = vset.pattern.permute.xlu0 7
        %4044 = vperm.xlu0 %4043, %v3004
        %v4045 = vpop.permute.xlu0 %4044
        %4047 = vset.pattern.permute.xlu0 7
        %4048 = vperm.xlu0 %4047, %v3005
        %v4049 = vpop.permute.xlu0 %4048
        %4051 = vset.pattern.permute.xlu0 7
        %4052 = vperm.xlu0 %4051, %v3006
        %v4053 = vpop.permute.xlu0 %4052
        %4055 = vset.pattern.permute.xlu0 7
        %4056 = vperm.xlu0 %4055, %v3007
        %v4057 = vpop.permute.xlu0 %4056
        %4059 = vset.pattern.permute.xlu0 7
        %4060 = vperm.xlu0 %4059, %v3008
        %v4061 = vpop.permute.xlu0 %4060
        %4063 = vset.pattern.permute.xlu0 7
        %4064 = vperm.xlu0 %4063, %v3009
        %v4065 = vpop.permute.xlu0 %4064
        %4067 = vset.pattern.permute.xlu0 7
        %4068 = vperm.xlu0 %4067, %v3010
        %v4069 = vpop.permute.xlu0 %4068
        %4071 = vset.pattern.permute.xlu0 7
        %4072 = vperm.xlu0 %4071, %v3011
        %v4073 = vpop.permute.xlu0 %4072
        %4075 = vset.pattern.permute.xlu0 7
        %4076 = vperm.xlu0 %4075, %v3012
        %v4077 = vpop.permute.xlu0 %4076
        %4079 = vset.pattern.permute.xlu0 7
        %4080 = vperm.xlu0 %4079, %v3013
        %v4081 = vpop.permute.xlu0 %4080
        %4083 = vset.pattern.permute.xlu0 7
        %4084 = vperm.xlu0 %4083, %v3014
        %v4085 = vpop.permute.xlu0 %4084
        %4087 = vset.pattern.permute.xlu0 7
        %4088 = vperm.xlu0 %4087, %v3015
        %v4089 = vpop.permute.xlu0 %4088
        %4091 = vset.pattern.permute.xlu0 7
        %4092 = vperm.xlu0 %4091, %v3016
        %v4093 = vpop.permute.xlu0 %4092
        %v4095 = vmul.f32 %v3997, %v3421
        %v4096 = vmul.f32 %v4001, %v3425
        %v4097 = vmul.f32 %v4005, %v3431
        %v4098 = vmul.f32 %v4009, %v3435
        %v4099 = vmul.f32 %v4013, %v3441
        %v4100 = vmul.f32 %v4017, %v3445
        %v4101 = vmul.f32 %v4021, %v3451
        %v4102 = vmul.f32 %v4025, %v3455
        %v4103 = vmul.f32 %v4029, %v3461
        %v4104 = vmul.f32 %v4033, %v3465
        %v4105 = vmul.f32 %v4037, %v3471
        %v4106 = vmul.f32 %v4041, %v3475
        %v4107 = vmul.f32 %v4045, %v3481
        %v4108 = vmul.f32 %v4049, %v3485
        %v4109 = vmul.f32 %v4053, %v3491
        %v4110 = vmul.f32 %v4057, %v3495
        %v4111 = vmul.f32 %v4061, %v3501
        %v4112 = vmul.f32 %v4065, %v3505
        %v4113 = vmul.f32 %v4069, %v3511
        %v4114 = vmul.f32 %v4073, %v3515
        %v4115 = vmul.f32 %v4077, %v3521
        %v4116 = vmul.f32 %v4081, %v3525
        %v4117 = vmul.f32 %v4085, %v3531
        %v4118 = vmul.f32 %v4089, %v3535
        %v4119 = vmul.f32 %v4093, %v3541
        %v4120 = vadd.f32 %v3970, %v4095
        %v4121 = vadd.f32 %v3971, %v4096
        %v4122 = vadd.f32 %v3972, %v4097
        %v4123 = vadd.f32 %v3973, %v4098
        %v4124 = vadd.f32 %v3974, %v4099
        %v4125 = vadd.f32 %v3975, %v4100
        %v4126 = vadd.f32 %v3976, %v4101
        %v4127 = vadd.f32 %v3977, %v4102
        %v4128 = vadd.f32 %v3978, %v4103
        %v4129 = vadd.f32 %v3979, %v4104
        %v4130 = vadd.f32 %v3980, %v4105
        %v4131 = vadd.f32 %v3981, %v4106
        %v4132 = vadd.f32 %v3982, %v4107
        %v4133 = vadd.f32 %v3983, %v4108
        %v4134 = vadd.f32 %v3984, %v4109
        %v4135 = vadd.f32 %v3985, %v4110
        %v4136 = vadd.f32 %v3986, %v4111
        %v4137 = vadd.f32 %v3987, %v4112
        %v4138 = vadd.f32 %v3988, %v4113
        %v4139 = vadd.f32 %v3989, %v4114
        %v4140 = vadd.f32 %v3990, %v4115
        %v4141 = vadd.f32 %v3991, %v4116
        %v4142 = vadd.f32 %v3992, %v4117
        %v4143 = vadd.f32 %v3993, %v4118
        %v4144 = vadd.f32 %v3994, %v4119
        %v4145 = vld [vmem:[%s2 + $0x1] sm:$0x1]
        %v4146 = vunpack.c.l.bf16 %v4145
        %v4147 = vlaneseq
        %v4148 = vshrl.u32 %v4147, 7
        %v4149 = vsub.s32 0, %v4148
        %v4150 = vrot.slane %v4146, %v4149
        %v4151 = vadd.f32 %v611, %v4150
        %v4152 = vadd.f32 %v615, %v4150
        %v4153 = vadd.f32 %v621, %v4150
        %v4154 = vadd.f32 %v625, %v4150
        %v4155 = vadd.f32 %v631, %v4150
        %v4156 = vadd.f32 %v635, %v4150
        %v4157 = vadd.f32 %v641, %v4150
        %v4158 = vadd.f32 %v645, %v4150
        %v4159 = vadd.f32 %v651, %v4150
        %v4160 = vadd.f32 %v655, %v4150
        %v4161 = vadd.f32 %v661, %v4150
        %v4162 = vadd.f32 %v665, %v4150
        %v4163 = vadd.f32 %v671, %v4150
        %v4164 = vadd.f32 %v675, %v4150
        %v4165 = vadd.f32 %v681, %v4150
        %v4166 = vadd.f32 %v685, %v4150
        %v4167 = vadd.f32 %v691, %v4150
        %v4168 = vadd.f32 %v695, %v4150
        %v4169 = vadd.f32 %v701, %v4150
        %v4170 = vadd.f32 %v705, %v4150
        %v4171 = vadd.f32 %v711, %v4150
        %v4172 = vadd.f32 %v715, %v4150
        %v4173 = vadd.f32 %v721, %v4150
        %v4174 = vadd.f32 %v725, %v4150
        %v4175 = vadd.f32 %v731, %v4150
        %v4176 = vadd.f32 %v4151, %v4120
        %v4177 = vadd.f32 %v4152, %v4121
        %v4178 = vadd.f32 %v4153, %v4122
        %v4179 = vadd.f32 %v4154, %v4123
        %v4180 = vadd.f32 %v4155, %v4124
        %v4181 = vadd.f32 %v4156, %v4125
        %v4182 = vadd.f32 %v4157, %v4126
        %v4183 = vadd.f32 %v4158, %v4127
        %v4184 = vadd.f32 %v4159, %v4128
        %v4185 = vadd.f32 %v4160, %v4129
        %v4186 = vadd.f32 %v4161, %v4130
        %v4187 = vadd.f32 %v4162, %v4131
        %v4188 = vadd.f32 %v4163, %v4132
        %v4189 = vadd.f32 %v4164, %v4133
        %v4190 = vadd.f32 %v4165, %v4134
        %v4191 = vadd.f32 %v4166, %v4135
        %v4192 = vadd.f32 %v4167, %v4136
        %v4193 = vadd.f32 %v4168, %v4137
        %v4194 = vadd.f32 %v4169, %v4138
        %v4195 = vadd.f32 %v4170, %v4139
        %v4196 = vadd.f32 %v4171, %v4140
        %v4197 = vadd.f32 %v4172, %v4141
        %v4198 = vadd.f32 %v4173, %v4142
        %v4199 = vadd.f32 %v4174, %v4143
        %v4200 = vadd.f32 %v4175, %v4144
        %4201 = vst [vmem:[%s244 + $0x8] sm:$0xff] %v4176
        %4202 = vst [vmem:[%s244 + $0x20] sm:$0xff] %v4177
        %4203 = vst [vmem:[%s244 + $0x38] sm:$0xff] %v4178
        %4204 = vst [vmem:[%s244 + $0x50] sm:$0xff] %v4179
        %4205 = vst [vmem:[%s244 + $0x68] sm:$0xff] %v4180
        %4206 = vst [vmem:[%s244 + $0x80] sm:$0xff] %v4181
        %4207 = vst [vmem:[%s244 + $0x98] sm:$0xff] %v4182
        %4208 = vst [vmem:[%s244 + $0xb0] sm:$0xff] %v4183
        %4209 = vst [vmem:[%s244 + $0xc8] sm:$0xff] %v4184
        %4210 = vst [vmem:[%s244 + $0xe0] sm:$0xff] %v4185
        %4211 = vst [vmem:[%s244 + $0xf8] sm:$0xff] %v4186
        %4212 = vst [vmem:[%s244 + $0x110] sm:$0xff] %v4187
        %4213 = vst [vmem:[%s244 + $0x128] sm:$0xff] %v4188
        %4214 = vst [vmem:[%s244 + $0x140] sm:$0xff] %v4189
        %4215 = vst [vmem:[%s244 + $0x158] sm:$0xff] %v4190
        %4216 = vst [vmem:[%s244 + $0x170] sm:$0xff] %v4191
        %4217 = vst [vmem:[%s244 + $0x188] sm:$0xff] %v4192
        %4218 = vst [vmem:[%s244 + $0x1a0] sm:$0xff] %v4193
        %4219 = vst [vmem:[%s244 + $0x1b8] sm:$0xff] %v4194
        %4220 = vst [vmem:[%s244 + $0x1d0] sm:$0xff] %v4195
        %4221 = vst [vmem:[%s244 + $0x1e8] sm:$0xff] %v4196
        %4222 = vst [vmem:[%s244 + $0x200] sm:$0xff] %v4197
        %4223 = vst [vmem:[%s244 + $0x218] sm:$0xff] %v4198
        %4224 = vst [vmem:[%s244 + $0x230] sm:$0xff] %v4199
        %4225 = vst [vmem:[%s244 + $0x248] sm:$0xff] %v4200
        %v4226 = vsel %vm1057, %v933, -inf
        %4227 = vmax.xlane.f32.xlu0 %v4226
        %v4228 = vpop.xlane.xlu0 %4227
        %v4229 = vsel %vm1057, %v937, -inf
        %4230 = vmax.xlane.f32.xlu0 %v4229
        %v4231 = vpop.xlane.xlu0 %4230
        %v4232 = vsel %vm1057, %v943, -inf
        %4233 = vmax.xlane.f32.xlu0 %v4232
        %v4234 = vpop.xlane.xlu0 %4233
        %v4235 = vsel %vm1057, %v947, -inf
        %4236 = vmax.xlane.f32.xlu0 %v4235
        %v4237 = vpop.xlane.xlu0 %4236
        %v4238 = vsel %vm1057, %v953, -inf
        %4239 = vmax.xlane.f32.xlu0 %v4238
        %v4240 = vpop.xlane.xlu0 %4239
        %v4241 = vsel %vm1057, %v957, -inf
        %4242 = vmax.xlane.f32.xlu0 %v4241
        %v4243 = vpop.xlane.xlu0 %4242
        %v4244 = vsel %vm1057, %v963, -inf
        %4245 = vmax.xlane.f32.xlu0 %v4244
        %v4246 = vpop.xlane.xlu0 %4245
        %v4247 = vsel %vm1057, %v967, -inf
        %4248 = vmax.xlane.f32.xlu0 %v4247
        %v4249 = vpop.xlane.xlu0 %4248
        %v4250 = vsel %vm1057, %v973, -inf
        %4251 = vmax.xlane.f32.xlu0 %v4250
        %v4252 = vpop.xlane.xlu0 %4251
        %v4253 = vsel %vm1057, %v977, -inf
        %4254 = vmax.xlane.f32.xlu0 %v4253
        %v4255 = vpop.xlane.xlu0 %4254
        %v4256 = vsel %vm1057, %v983, -inf
        %4257 = vmax.xlane.f32.xlu0 %v4256
        %v4258 = vpop.xlane.xlu0 %4257
        %v4259 = vsel %vm1057, %v987, -inf
        %4260 = vmax.xlane.f32.xlu0 %v4259
        %v4261 = vpop.xlane.xlu0 %4260
        %v4262 = vsel %vm1057, %v993, -inf
        %4263 = vmax.xlane.f32.xlu0 %v4262
        %v4264 = vpop.xlane.xlu0 %4263
        %v4265 = vsel %vm1057, %v997, -inf
        %4266 = vmax.xlane.f32.xlu0 %v4265
        %v4267 = vpop.xlane.xlu0 %4266
        %v4268 = vsel %vm1057, %v1003, -inf
        %4269 = vmax.xlane.f32.xlu0 %v4268
        %v4270 = vpop.xlane.xlu0 %4269
        %v4271 = vsel %vm1057, %v1007, -inf
        %4272 = vmax.xlane.f32.xlu0 %v4271
        %v4273 = vpop.xlane.xlu0 %4272
        %v4274 = vsel %vm1057, %v1013, -inf
        %4275 = vmax.xlane.f32.xlu0 %v4274
        %v4276 = vpop.xlane.xlu0 %4275
        %v4277 = vsel %vm1057, %v1017, -inf
        %4278 = vmax.xlane.f32.xlu0 %v4277
        %v4279 = vpop.xlane.xlu0 %4278
        %v4280 = vsel %vm1057, %v1023, -inf
        %4281 = vmax.xlane.f32.xlu0 %v4280
        %v4282 = vpop.xlane.xlu0 %4281
        %v4283 = vsel %vm1057, %v1027, -inf
        %4284 = vmax.xlane.f32.xlu0 %v4283
        %v4285 = vpop.xlane.xlu0 %4284
        %v4286 = vsel %vm1057, %v1033, -inf
        %4287 = vmax.xlane.f32.xlu0 %v4286
        %v4288 = vpop.xlane.xlu0 %4287
        %v4289 = vsel %vm1057, %v1037, -inf
        %4290 = vmax.xlane.f32.xlu0 %v4289
        %v4291 = vpop.xlane.xlu0 %4290
        %v4292 = vsel %vm1057, %v1043, -inf
        %4293 = vmax.xlane.f32.xlu0 %v4292
        %v4294 = vpop.xlane.xlu0 %4293
        %v4295 = vsel %vm1057, %v1047, -inf
        %4296 = vmax.xlane.f32.xlu0 %v4295
        %v4297 = vpop.xlane.xlu0 %4296
        %v4298 = vsel %vm1057, %v1053, -inf
        %4299 = vmax.xlane.f32.xlu0 %v4298
        %v4300 = vpop.xlane.xlu0 %4299
        %v4301 = vsub.f32 %v933, %v4228
        %v4302 = vsub.f32 %v937, %v4231
        %v4303 = vsub.f32 %v943, %v4234
        %v4304 = vsub.f32 %v947, %v4237
        %v4305 = vsub.f32 %v953, %v4240
        %v4306 = vsub.f32 %v957, %v4243
        %v4307 = vsub.f32 %v963, %v4246
        %v4308 = vsub.f32 %v967, %v4249
        %v4309 = vsub.f32 %v973, %v4252
        %v4310 = vsub.f32 %v977, %v4255
        %v4311 = vsub.f32 %v983, %v4258
        %v4312 = vsub.f32 %v987, %v4261
        %v4313 = vsub.f32 %v993, %v4264
        %v4314 = vsub.f32 %v997, %v4267
        %v4315 = vsub.f32 %v1003, %v4270
        %v4316 = vsub.f32 %v1007, %v4273
        %v4317 = vsub.f32 %v1013, %v4276
        %v4318 = vsub.f32 %v1017, %v4279
        %v4319 = vsub.f32 %v1023, %v4282
        %v4320 = vsub.f32 %v1027, %v4285
        %v4321 = vsub.f32 %v1033, %v4288
        %v4322 = vsub.f32 %v1037, %v4291
        %v4323 = vsub.f32 %v1043, %v4294
        %v4324 = vsub.f32 %v1047, %v4297
        %v4325 = vsub.f32 %v1053, %v4300
        %v4326 = vmul.f32 %v4301, 1.442695
        %v4327 = vpow.pop %v4326
        %v4328 = vmul.f32 %v4302, 1.442695
        %v4329 = vpow.pop %v4328
        %v4330 = vmul.f32 %v4303, 1.442695
        %v4331 = vpow.pop %v4330
        %v4332 = vmul.f32 %v4304, 1.442695
        %v4333 = vpow.pop %v4332
        %v4334 = vmul.f32 %v4305, 1.442695
        %v4335 = vpow.pop %v4334
        %v4336 = vmul.f32 %v4306, 1.442695
        %v4337 = vpow.pop %v4336
        %v4338 = vmul.f32 %v4307, 1.442695
        %v4339 = vpow.pop %v4338
        %v4340 = vmul.f32 %v4308, 1.442695
        %v4341 = vpow.pop %v4340
        %v4342 = vmul.f32 %v4309, 1.442695
        %v4343 = vpow.pop %v4342
        %v4344 = vmul.f32 %v4310, 1.442695
        %v4345 = vpow.pop %v4344
        %v4346 = vmul.f32 %v4311, 1.442695
        %v4347 = vpow.pop %v4346
        %v4348 = vmul.f32 %v4312, 1.442695
        %v4349 = vpow.pop %v4348
        %v4350 = vmul.f32 %v4313, 1.442695
        %v4351 = vpow.pop %v4350
        %v4352 = vmul.f32 %v4314, 1.442695
        %v4353 = vpow.pop %v4352
        %v4354 = vmul.f32 %v4315, 1.442695
        %v4355 = vpow.pop %v4354
        %v4356 = vmul.f32 %v4316, 1.442695
        %v4357 = vpow.pop %v4356
        %v4358 = vmul.f32 %v4317, 1.442695
        %v4359 = vpow.pop %v4358
        %v4360 = vmul.f32 %v4318, 1.442695
        %v4361 = vpow.pop %v4360
        %v4362 = vmul.f32 %v4319, 1.442695
        %v4363 = vpow.pop %v4362
        %v4364 = vmul.f32 %v4320, 1.442695
        %v4365 = vpow.pop %v4364
        %v4366 = vmul.f32 %v4321, 1.442695
        %v4367 = vpow.pop %v4366
        %v4368 = vmul.f32 %v4322, 1.442695
        %v4369 = vpow.pop %v4368
        %v4370 = vmul.f32 %v4323, 1.442695
        %v4371 = vpow.pop %v4370
        %v4372 = vmul.f32 %v4324, 1.442695
        %v4373 = vpow.pop %v4372
        %v4374 = vmul.f32 %v4325, 1.442695
        %v4375 = vpow.pop %v4374
        %4401 = vrot.lane.b32.xlu0 %v4327, 124
        %v4402 = vpop.permute.xlu0 %4401
        %4403 = vrot.lane.b32.xlu0 %v4329, 124
        %v4404 = vpop.permute.xlu0 %4403
        %4405 = vrot.lane.b32.xlu0 %v4331, 124
        %v4406 = vpop.permute.xlu0 %4405
        %4407 = vrot.lane.b32.xlu0 %v4333, 124
        %v4408 = vpop.permute.xlu0 %4407
        %4409 = vrot.lane.b32.xlu0 %v4335, 124
        %v4410 = vpop.permute.xlu0 %4409
        %4411 = vrot.lane.b32.xlu0 %v4337, 124
        %v4412 = vpop.permute.xlu0 %4411
        %4413 = vrot.lane.b32.xlu0 %v4339, 124
        %v4414 = vpop.permute.xlu0 %4413
        %4415 = vrot.lane.b32.xlu0 %v4341, 124
        %v4416 = vpop.permute.xlu0 %4415
        %4417 = vrot.lane.b32.xlu0 %v4343, 124
        %v4418 = vpop.permute.xlu0 %4417
        %4419 = vrot.lane.b32.xlu0 %v4345, 124
        %v4420 = vpop.permute.xlu0 %4419
        %4421 = vrot.lane.b32.xlu0 %v4347, 124
        %v4422 = vpop.permute.xlu0 %4421
        %4423 = vrot.lane.b32.xlu0 %v4349, 124
        %v4424 = vpop.permute.xlu0 %4423
        %4425 = vrot.lane.b32.xlu0 %v4351, 124
        %v4426 = vpop.permute.xlu0 %4425
        %4427 = vrot.lane.b32.xlu0 %v4353, 124
        %v4428 = vpop.permute.xlu0 %4427
        %4429 = vrot.lane.b32.xlu0 %v4355, 124
        %v4430 = vpop.permute.xlu0 %4429
        %4431 = vrot.lane.b32.xlu0 %v4357, 124
        %v4432 = vpop.permute.xlu0 %4431
        %4433 = vrot.lane.b32.xlu0 %v4359, 124
        %v4434 = vpop.permute.xlu0 %4433
        %4435 = vrot.lane.b32.xlu0 %v4361, 124
        %v4436 = vpop.permute.xlu0 %4435
        %4437 = vrot.lane.b32.xlu0 %v4363, 124
        %v4438 = vpop.permute.xlu0 %4437
        %4439 = vrot.lane.b32.xlu0 %v4365, 124
        %v4440 = vpop.permute.xlu0 %4439
        %4441 = vrot.lane.b32.xlu0 %v4367, 124
        %v4442 = vpop.permute.xlu0 %4441
        %4443 = vrot.lane.b32.xlu0 %v4369, 124
        %v4444 = vpop.permute.xlu0 %4443
        %4445 = vrot.lane.b32.xlu0 %v4371, 124
        %v4446 = vpop.permute.xlu0 %4445
        %4447 = vrot.lane.b32.xlu0 %v4373, 124
        %v4448 = vpop.permute.xlu0 %4447
        %4449 = vrot.lane.b32.xlu0 %v4375, 124
        %v4450 = vpop.permute.xlu0 %4449
        %v4476 = vsel %vm1308, %v4402, 0.0
        %4477 = vadd.xlane.f32.xlu0 %v4476
        %v4478 = vpop.xlane.xlu0 %4477
        %v4479 = vsel %vm1308, %v4404, 0.0
        %4480 = vadd.xlane.f32.xlu0 %v4479
        %v4481 = vpop.xlane.xlu0 %4480
        %v4482 = vsel %vm1308, %v4406, 0.0
        %4483 = vadd.xlane.f32.xlu0 %v4482
        %v4484 = vpop.xlane.xlu0 %4483
        %v4485 = vsel %vm1308, %v4408, 0.0
        %4486 = vadd.xlane.f32.xlu0 %v4485
        %v4487 = vpop.xlane.xlu0 %4486
        %v4488 = vsel %vm1308, %v4410, 0.0
        %4489 = vadd.xlane.f32.xlu0 %v4488
        %v4490 = vpop.xlane.xlu0 %4489
        %v4491 = vsel %vm1308, %v4412, 0.0
        %4492 = vadd.xlane.f32.xlu0 %v4491
        %v4493 = vpop.xlane.xlu0 %4492
        %v4494 = vsel %vm1308, %v4414, 0.0
        %4495 = vadd.xlane.f32.xlu0 %v4494
        %v4496 = vpop.xlane.xlu0 %4495
        %v4497 = vsel %vm1308, %v4416, 0.0
        %4498 = vadd.xlane.f32.xlu0 %v4497
        %v4499 = vpop.xlane.xlu0 %4498
        %v4500 = vsel %vm1308, %v4418, 0.0
        %4501 = vadd.xlane.f32.xlu0 %v4500
        %v4502 = vpop.xlane.xlu0 %4501
        %v4503 = vsel %vm1308, %v4420, 0.0
        %4504 = vadd.xlane.f32.xlu0 %v4503
        %v4505 = vpop.xlane.xlu0 %4504
        %v4506 = vsel %vm1308, %v4422, 0.0
        %4507 = vadd.xlane.f32.xlu0 %v4506
        %v4508 = vpop.xlane.xlu0 %4507
        %v4509 = vsel %vm1308, %v4424, 0.0
        %4510 = vadd.xlane.f32.xlu0 %v4509
        %v4511 = vpop.xlane.xlu0 %4510
        %v4512 = vsel %vm1308, %v4426, 0.0
        %4513 = vadd.xlane.f32.xlu0 %v4512
        %v4514 = vpop.xlane.xlu0 %4513
        %v4515 = vsel %vm1308, %v4428, 0.0
        %4516 = vadd.xlane.f32.xlu0 %v4515
        %v4517 = vpop.xlane.xlu0 %4516
        %v4518 = vsel %vm1308, %v4430, 0.0
        %4519 = vadd.xlane.f32.xlu0 %v4518
        %v4520 = vpop.xlane.xlu0 %4519
        %v4521 = vsel %vm1308, %v4432, 0.0
        %4522 = vadd.xlane.f32.xlu0 %v4521
        %v4523 = vpop.xlane.xlu0 %4522
        %v4524 = vsel %vm1308, %v4434, 0.0
        %4525 = vadd.xlane.f32.xlu0 %v4524
        %v4526 = vpop.xlane.xlu0 %4525
        %v4527 = vsel %vm1308, %v4436, 0.0
        %4528 = vadd.xlane.f32.xlu0 %v4527
        %v4529 = vpop.xlane.xlu0 %4528
        %v4530 = vsel %vm1308, %v4438, 0.0
        %4531 = vadd.xlane.f32.xlu0 %v4530
        %v4532 = vpop.xlane.xlu0 %4531
        %v4533 = vsel %vm1308, %v4440, 0.0
        %4534 = vadd.xlane.f32.xlu0 %v4533
        %v4535 = vpop.xlane.xlu0 %4534
        %v4536 = vsel %vm1308, %v4442, 0.0
        %4537 = vadd.xlane.f32.xlu0 %v4536
        %v4538 = vpop.xlane.xlu0 %4537
        %v4539 = vsel %vm1308, %v4444, 0.0
        %4540 = vadd.xlane.f32.xlu0 %v4539
        %v4541 = vpop.xlane.xlu0 %4540
        %v4542 = vsel %vm1308, %v4446, 0.0
        %4543 = vadd.xlane.f32.xlu0 %v4542
        %v4544 = vpop.xlane.xlu0 %4543
        %v4545 = vsel %vm1308, %v4448, 0.0
        %4546 = vadd.xlane.f32.xlu0 %v4545
        %v4547 = vpop.xlane.xlu0 %4546
        %v4548 = vsel %vm1308, %v4450, 0.0
        %4549 = vadd.xlane.f32.xlu0 %v4548
        %v4550 = vpop.xlane.xlu0 %4549
        %v4551 = vrcp.pop %v4478
        %v4552 = vrcp.pop %v4481
        %v4553 = vrcp.pop %v4484
        %v4554 = vrcp.pop %v4487
        %v4555 = vrcp.pop %v4490
        %v4556 = vrcp.pop %v4493
        %v4557 = vrcp.pop %v4496
        %v4558 = vrcp.pop %v4499
        %v4559 = vrcp.pop %v4502
        %v4560 = vrcp.pop %v4505
        %v4561 = vrcp.pop %v4508
        %v4562 = vrcp.pop %v4511
        %v4563 = vrcp.pop %v4514
        %v4564 = vrcp.pop %v4517
        %v4565 = vrcp.pop %v4520
        %v4566 = vrcp.pop %v4523
        %v4567 = vrcp.pop %v4526
        %v4568 = vrcp.pop %v4529
        %v4569 = vrcp.pop %v4532
        %v4570 = vrcp.pop %v4535
        %v4571 = vrcp.pop %v4538
        %v4572 = vrcp.pop %v4541
        %v4573 = vrcp.pop %v4544
        %v4574 = vrcp.pop %v4547
        %v4575 = vrcp.pop %v4550
        %v4576 = vmul.f32 %v4327, %v4551
        %v4577 = vmul.f32 %v4329, %v4552
        %v4578 = vmul.f32 %v4331, %v4553
        %v4579 = vmul.f32 %v4333, %v4554
        %v4580 = vmul.f32 %v4335, %v4555
        %v4581 = vmul.f32 %v4337, %v4556
        %v4582 = vmul.f32 %v4339, %v4557
        %v4583 = vmul.f32 %v4341, %v4558
        %v4584 = vmul.f32 %v4343, %v4559
        %v4585 = vmul.f32 %v4345, %v4560
        %v4586 = vmul.f32 %v4347, %v4561
        %v4587 = vmul.f32 %v4349, %v4562
        %v4588 = vmul.f32 %v4351, %v4563
        %v4589 = vmul.f32 %v4353, %v4564
        %v4590 = vmul.f32 %v4355, %v4565
        %v4591 = vmul.f32 %v4357, %v4566
        %v4592 = vmul.f32 %v4359, %v4567
        %v4593 = vmul.f32 %v4361, %v4568
        %v4594 = vmul.f32 %v4363, %v4569
        %v4595 = vmul.f32 %v4365, %v4570
        %v4596 = vmul.f32 %v4367, %v4571
        %v4597 = vmul.f32 %v4369, %v4572
        %v4598 = vmul.f32 %v4371, %v4573
        %v4599 = vmul.f32 %v4373, %v4574
        %v4600 = vmul.f32 %v4375, %v4575
        %v4601 = vpack.c.bf16 %v937, %v933
        %v4602 = vpack.c.bf16 %v947, %v943
        %v4603 = vpack.c.bf16 %v957, %v953
        %v4604 = vpack.c.bf16 %v967, %v963
        %v4605 = vpack.c.bf16 %v977, %v973
        %v4606 = vpack.c.bf16 %v987, %v983
        %v4607 = vpack.c.bf16 %v997, %v993
        %v4608 = vpack.c.bf16 %v1007, %v1003
        %v4609 = vpack.c.bf16 %v1017, %v1013
        %v4610 = vpack.c.bf16 %v1027, %v1023
        %v4611 = vpack.c.bf16 %v1037, %v1033
        %v4612 = vpack.c.bf16 %v1047, %v1043
        %v4613 = vpack.c.bf16 %v1053, %v1053
        %s4614 = scalar_lea.vmem [#allocation7], 512
        %v4615 = vld [vmem:[%s4614] sm:$0xff]
        %v4616 = vld [vmem:[%s4614 + $0x8] sm:$0xff]
        %v4617 = vld [vmem:[%s4614 + $0x10] sm:$0xff]
        %v4618 = vld [vmem:[%s4614 + $0x18] sm:$0xff]
        %v4619 = vld [vmem:[%s4614 + $0x20] sm:$0xff]
        %v4620 = vld [vmem:[%s4614 + $0x28] sm:$0xff]
        %v4621 = vld [vmem:[%s4614 + $0x30] sm:$0xff]
        %v4622 = vld [vmem:[%s4614 + $0x38] sm:$0xff]
        %v4623 = vld [vmem:[%s4614 + $0x40] sm:$0xff]
        %v4624 = vld [vmem:[%s4614 + $0x48] sm:$0xff]
        %v4625 = vld [vmem:[%s4614 + $0x50] sm:$0xff]
        %v4626 = vld [vmem:[%s4614 + $0x58] sm:$0xff]
        %v4627 = vld [vmem:[%s4614 + $0x60] sm:$0xff]
        %v4628 = vld [vmem:[%s4614 + $0x68] sm:$0xff]
        %v4629 = vld [vmem:[%s4614 + $0x70] sm:$0xff]
        %v4630 = vld [vmem:[%s4614 + $0x78] sm:$0xff]
        %v4631 = vld [vmem:[%s4614 + $0x80] sm:$0xff]
        %v4632 = vld [vmem:[%s4614 + $0x88] sm:$0xff]
        %v4633 = vld [vmem:[%s4614 + $0x90] sm:$0xff]
        %v4634 = vld [vmem:[%s4614 + $0x98] sm:$0xff]
        %v4635 = vld [vmem:[%s4614 + $0xa0] sm:$0xff]
        %v4636 = vld [vmem:[%s4614 + $0xa8] sm:$0xff]
        %v4637 = vld [vmem:[%s4614 + $0xb0] sm:$0xff]
        %v4638 = vld [vmem:[%s4614 + $0xb8] sm:$0xff]
        %v4639 = vld [vmem:[%s4614 + $0xc0] sm:$0xff]
        %v4640 = vld [vmem:[%s4614 + $0xc8] sm:$0xff]
        %v4641 = vld [vmem:[%s4614 + $0xd0] sm:$0xff]
        %v4642 = vld [vmem:[%s4614 + $0xd8] sm:$0xff]
        %v4643 = vld [vmem:[%s4614 + $0xe0] sm:$0xff]
        %v4644 = vld [vmem:[%s4614 + $0xe8] sm:$0xff]
        %v4645 = vld [vmem:[%s4614 + $0xf0] sm:$0xff]
        %v4646 = vld [vmem:[%s4614 + $0xf8] sm:$0xff]
        %v4679 = vunpack.c.l.b16 %v4615
        %v4680 = vunpack.c.h.b16 %v4615
        %v4681 = vunpack.c.l.b16 %v4616
        %v4682 = vunpack.c.h.b16 %v4616
        %v4683 = vunpack.c.l.b16 %v4617
        %v4684 = vunpack.c.h.b16 %v4617
        %v4685 = vunpack.c.l.b16 %v4618
        %v4686 = vunpack.c.h.b16 %v4618
        %v4687 = vunpack.c.l.b16 %v4619
        %v4688 = vunpack.c.h.b16 %v4619
        %v4689 = vunpack.c.l.b16 %v4620
        %v4690 = vunpack.c.h.b16 %v4620
        %v4691 = vunpack.c.l.b16 %v4621
        %v4692 = vunpack.c.h.b16 %v4621
        %v4693 = vunpack.c.l.b16 %v4622
        %v4694 = vunpack.c.h.b16 %v4622
        %v4695 = vunpack.c.l.b16 %v4623
        %v4696 = vunpack.c.h.b16 %v4623
        %v4697 = vunpack.c.l.b16 %v4624
        %v4698 = vunpack.c.h.b16 %v4624
        %v4699 = vunpack.c.l.b16 %v4625
        %v4700 = vunpack.c.h.b16 %v4625
        %v4701 = vunpack.c.l.b16 %v4626
        %v4702 = vunpack.c.h.b16 %v4626
        %v4703 = vunpack.c.l.b16 %v4627
        %v4704 = vunpack.c.h.b16 %v4627
        %v4705 = vunpack.c.l.b16 %v4628
        %v4706 = vunpack.c.h.b16 %v4628
        %v4707 = vunpack.c.l.b16 %v4629
        %v4708 = vunpack.c.h.b16 %v4629
        %v4709 = vunpack.c.l.b16 %v4630
        %v4710 = vunpack.c.h.b16 %v4630
        %v4711 = vunpack.c.l.b16 %v4631
        %v4712 = vunpack.c.h.b16 %v4631
        %v4713 = vunpack.c.l.b16 %v4632
        %v4714 = vunpack.c.h.b16 %v4632
        %v4715 = vunpack.c.l.b16 %v4633
        %v4716 = vunpack.c.h.b16 %v4633
        %v4717 = vunpack.c.l.b16 %v4634
        %v4718 = vunpack.c.h.b16 %v4634
        %v4719 = vunpack.c.l.b16 %v4635
        %v4720 = vunpack.c.h.b16 %v4635
        %v4721 = vunpack.c.l.b16 %v4636
        %v4722 = vunpack.c.h.b16 %v4636
        %v4723 = vunpack.c.l.b16 %v4637
        %v4724 = vunpack.c.h.b16 %v4637
        %v4725 = vunpack.c.l.b16 %v4638
        %v4726 = vunpack.c.h.b16 %v4638
        %v4727 = vunpack.c.l.b16 %v4639
        %v4728 = vunpack.c.h.b16 %v4639
        %v4729 = vunpack.c.l.b16 %v4640
        %v4730 = vunpack.c.h.b16 %v4640
        %v4731 = vunpack.c.l.b16 %v4641
        %v4732 = vunpack.c.h.b16 %v4641
        %v4733 = vunpack.c.l.b16 %v4642
        %v4734 = vunpack.c.h.b16 %v4642
        %v4735 = vunpack.c.l.b16 %v4643
        %v4736 = vunpack.c.h.b16 %v4643
        %v4737 = vunpack.c.l.b16 %v4644
        %v4738 = vunpack.c.h.b16 %v4644
        %v4739 = vunpack.c.l.b16 %v4645
        %v4740 = vunpack.c.h.b16 %v4645
        %v4741 = vunpack.c.l.b16 %v4646
        %v4742 = vunpack.c.h.b16 %v4646
        %v4743 = vpack.c.b16 %v4683, %v4679
        %v4744 = vpack.c.b16 %v4684, %v4680
        %v4745 = vpack.c.b16 %v4685, %v4681
        %v4746 = vpack.c.b16 %v4686, %v4682
        %v4747 = vpack.c.b16 %v4691, %v4687
        %v4748 = vpack.c.b16 %v4692, %v4688
        %v4749 = vpack.c.b16 %v4693, %v4689
        %v4750 = vpack.c.b16 %v4694, %v4690
        %v4751 = vpack.c.b16 %v4699, %v4695
        %v4752 = vpack.c.b16 %v4700, %v4696
        %v4753 = vpack.c.b16 %v4701, %v4697
        %v4754 = vpack.c.b16 %v4702, %v4698
        %v4755 = vpack.c.b16 %v4707, %v4703
        %v4756 = vpack.c.b16 %v4708, %v4704
        %v4757 = vpack.c.b16 %v4709, %v4705
        %v4758 = vpack.c.b16 %v4710, %v4706
        %v4759 = vpack.c.b16 %v4715, %v4711
        %v4760 = vpack.c.b16 %v4716, %v4712
        %v4761 = vpack.c.b16 %v4717, %v4713
        %v4762 = vpack.c.b16 %v4718, %v4714
        %v4763 = vpack.c.b16 %v4723, %v4719
        %v4764 = vpack.c.b16 %v4724, %v4720
        %v4765 = vpack.c.b16 %v4725, %v4721
        %v4766 = vpack.c.b16 %v4726, %v4722
        %v4767 = vpack.c.b16 %v4731, %v4727
        %v4768 = vpack.c.b16 %v4732, %v4728
        %v4769 = vpack.c.b16 %v4733, %v4729
        %v4770 = vpack.c.b16 %v4734, %v4730
        %v4771 = vpack.c.b16 %v4739, %v4735
        %v4772 = vpack.c.b16 %v4740, %v4736
        %v4773 = vpack.c.b16 %v4741, %v4737
        %v4774 = vpack.c.b16 %v4742, %v4738
        %4807 = vmatprep.subr.bf16.mxu0 %v4772
        %4808 = vmatpush1.bf16.msra.mxu0 %v4771
        %4809 = vmatprep.subr.bf16.mxu0 %v4768
        %4810 = vmatpush1.bf16.msra.mxu0 %v4767
        %4811 = vmatprep.subr.bf16.mxu0 %v4764
        %4812 = vmatpush1.bf16.msra.mxu0 %v4763
        %4813 = vmatprep.subr.bf16.mxu0 %v4760
        %4814 = vmatpush1.bf16.msra.mxu0 %v4759
        %4815 = vmatprep.subr.bf16.mxu0 %v4756
        %4816 = vmatpush1.bf16.msra.mxu0 %v4755
        %4817 = vmatprep.subr.bf16.mxu0 %v4752
        %4818 = vmatpush1.bf16.msra.mxu0 %v4751
        %4819 = vmatprep.subr.bf16.mxu0 %v4748
        %4820 = vmatpush1.bf16.msra.mxu0 %v4747
        %4821 = vmatprep.subr.bf16.mxu0 %v4744
        %4822 = vmatpush1.bf16.msra.mxu0 %v4743
        %4823 = vmatprep.subr.bf16.mxu0 0
        %4824 = vmatpush2.bf16.msra.mxu0 0
        %4825 = vmatprep.subr.bf16.mxu0 0
        %4826 = vmatpush2.bf16.msra.mxu0 0
        %4827 = vmatprep.subr.bf16.mxu0 0
        %4828 = vmatpush2.bf16.msra.mxu0 0
        %4829 = vmatprep.subr.bf16.mxu0 0
        %4830 = vmatpush2.bf16.msra.mxu0 0
        %4831 = vmatprep.subr.bf16.mxu0 0
        %4832 = vmatpush2.bf16.msra.mxu0 0
        %4833 = vmatprep.subr.bf16.mxu0 0
        %4834 = vmatpush2.bf16.msra.mxu0 0
        %4835 = vmatprep.subr.bf16.mxu0 0
        %4836 = vmatpush2.bf16.msra.mxu0 0
        %4837 = vmatprep.subr.bf16.mxu0 0
        %4838 = vmatpush2.bf16.msra.mxu0 0
        %4839 = vmatprep.mubr.bf16.mxu0 0
        %4840 = vmatmul.mubr.bf16.gmra.mxu0 %v4601
        %v4841 = vpop.f32.mrf.mxu0
        %v4842 = vadd.f32 0.0, %v4841
        %v4843 = vpop.f32.mrf.mxu0
        %v4844 = vadd.f32 0.0, %v4843
        %v4845 = vpop.f32.mrf.mxu0
        %v4846 = vadd.f32 0.0, %v4845
        %v4847 = vpop.f32.mrf.mxu0
        %v4848 = vadd.f32 0.0, %v4847
        %4849 = vmatprep.mubr.bf16.mxu0 0
        %4850 = vmatmul.mubr.bf16.gmra.mxu0 %v4602
        %v4851 = vpop.f32.mrf.mxu0
        %v4852 = vadd.f32 0.0, %v4851
        %v4853 = vpop.f32.mrf.mxu0
        %v4854 = vadd.f32 0.0, %v4853
        %v4855 = vpop.f32.mrf.mxu0
        %v4856 = vadd.f32 0.0, %v4855
        %v4857 = vpop.f32.mrf.mxu0
        %v4858 = vadd.f32 0.0, %v4857
        %4859 = vmatprep.mubr.bf16.mxu0 0
        %4860 = vmatmul.mubr.bf16.gmra.mxu0 %v4603
        %v4861 = vpop.f32.mrf.mxu0
        %v4862 = vadd.f32 0.0, %v4861
        %v4863 = vpop.f32.mrf.mxu0
        %v4864 = vadd.f32 0.0, %v4863
        %v4865 = vpop.f32.mrf.mxu0
        %v4866 = vadd.f32 0.0, %v4865
        %v4867 = vpop.f32.mrf.mxu0
        %v4868 = vadd.f32 0.0, %v4867
        %4869 = vmatprep.mubr.bf16.mxu0 0
        %4870 = vmatmul.mubr.bf16.gmra.mxu0 %v4604
        %v4871 = vpop.f32.mrf.mxu0
        %v4872 = vadd.f32 0.0, %v4871
        %v4873 = vpop.f32.mrf.mxu0
        %v4874 = vadd.f32 0.0, %v4873
        %v4875 = vpop.f32.mrf.mxu0
        %v4876 = vadd.f32 0.0, %v4875
        %v4877 = vpop.f32.mrf.mxu0
        %v4878 = vadd.f32 0.0, %v4877
        %4879 = vmatprep.mubr.bf16.mxu0 0
        %4880 = vmatmul.mubr.bf16.gmra.mxu0 %v4605
        %v4881 = vpop.f32.mrf.mxu0
        %v4882 = vadd.f32 0.0, %v4881
        %v4883 = vpop.f32.mrf.mxu0
        %v4884 = vadd.f32 0.0, %v4883
        %v4885 = vpop.f32.mrf.mxu0
        %v4886 = vadd.f32 0.0, %v4885
        %v4887 = vpop.f32.mrf.mxu0
        %v4888 = vadd.f32 0.0, %v4887
        %4889 = vmatprep.mubr.bf16.mxu0 0
        %4890 = vmatmul.mubr.bf16.gmra.mxu0 %v4606
        %v4891 = vpop.f32.mrf.mxu0
        %v4892 = vadd.f32 0.0, %v4891
        %v4893 = vpop.f32.mrf.mxu0
        %v4894 = vadd.f32 0.0, %v4893
        %v4895 = vpop.f32.mrf.mxu0
        %v4896 = vadd.f32 0.0, %v4895
        %v4897 = vpop.f32.mrf.mxu0
        %v4898 = vadd.f32 0.0, %v4897
        %4899 = vmatprep.mubr.bf16.mxu0 0
        %4900 = vmatmul.mubr.bf16.gmra.mxu0 %v4607
        %v4901 = vpop.f32.mrf.mxu0
        %v4902 = vadd.f32 0.0, %v4901
        %v4903 = vpop.f32.mrf.mxu0
        %v4904 = vadd.f32 0.0, %v4903
        %v4905 = vpop.f32.mrf.mxu0
        %v4906 = vadd.f32 0.0, %v4905
        %v4907 = vpop.f32.mrf.mxu0
        %v4908 = vadd.f32 0.0, %v4907
        %4909 = vmatprep.mubr.bf16.mxu0 0
        %4910 = vmatmul.mubr.bf16.gmra.mxu0 %v4608
        %v4911 = vpop.f32.mrf.mxu0
        %v4912 = vadd.f32 0.0, %v4911
        %v4913 = vpop.f32.mrf.mxu0
        %v4914 = vadd.f32 0.0, %v4913
        %v4915 = vpop.f32.mrf.mxu0
        %v4916 = vadd.f32 0.0, %v4915
        %v4917 = vpop.f32.mrf.mxu0
        %v4918 = vadd.f32 0.0, %v4917
        %4919 = vmatprep.mubr.bf16.mxu0 0
        %4920 = vmatmul.mubr.bf16.gmra.mxu0 %v4609
        %v4921 = vpop.f32.mrf.mxu0
        %v4922 = vadd.f32 0.0, %v4921
        %v4923 = vpop.f32.mrf.mxu0
        %v4924 = vadd.f32 0.0, %v4923
        %v4925 = vpop.f32.mrf.mxu0
        %v4926 = vadd.f32 0.0, %v4925
        %v4927 = vpop.f32.mrf.mxu0
        %v4928 = vadd.f32 0.0, %v4927
        %4929 = vmatprep.mubr.bf16.mxu0 0
        %4930 = vmatmul.mubr.bf16.gmra.mxu0 %v4610
        %v4931 = vpop.f32.mrf.mxu0
        %v4932 = vadd.f32 0.0, %v4931
        %v4933 = vpop.f32.mrf.mxu0
        %v4934 = vadd.f32 0.0, %v4933
        %v4935 = vpop.f32.mrf.mxu0
        %v4936 = vadd.f32 0.0, %v4935
        %v4937 = vpop.f32.mrf.mxu0
        %v4938 = vadd.f32 0.0, %v4937
        %4939 = vmatprep.mubr.bf16.mxu0 0
        %4940 = vmatmul.mubr.bf16.gmra.mxu0 %v4611
        %v4941 = vpop.f32.mrf.mxu0
        %v4942 = vadd.f32 0.0, %v4941
        %v4943 = vpop.f32.mrf.mxu0
        %v4944 = vadd.f32 0.0, %v4943
        %v4945 = vpop.f32.mrf.mxu0
        %v4946 = vadd.f32 0.0, %v4945
        %v4947 = vpop.f32.mrf.mxu0
        %v4948 = vadd.f32 0.0, %v4947
        %4949 = vmatprep.mubr.bf16.mxu0 0
        %4950 = vmatmul.mubr.bf16.gmra.mxu0 %v4612
        %v4951 = vpop.f32.mrf.mxu0
        %v4952 = vadd.f32 0.0, %v4951
        %v4953 = vpop.f32.mrf.mxu0
        %v4954 = vadd.f32 0.0, %v4953
        %v4955 = vpop.f32.mrf.mxu0
        %v4956 = vadd.f32 0.0, %v4955
        %v4957 = vpop.f32.mrf.mxu0
        %v4958 = vadd.f32 0.0, %v4957
        %4959 = vmatprep.mubr.bf16.mxu0 0
        %4960 = vmatmul.mubr.bf16.gmra.mxu0 %v4613
        %v4961 = vpop.f32.mrf.mxu0
        %v4962 = vadd.f32 0.0, %v4961
        %v4963 = vpop.f32.mrf.mxu0
        %v4964 = vadd.f32 0.0, %v4963
        %v4965 = vpop.f32.mrf.mxu0
        %v4966 = vpop.f32.mrf.mxu0
        %4967 = vdwg.mxu0
        %4968 = vmatprep.subr.bf16.mxu0 %v4774
        %4969 = vmatpush1.bf16.msra.mxu0 %v4773
        %4970 = vmatprep.subr.bf16.mxu0 %v4770
        %4971 = vmatpush1.bf16.msra.mxu0 %v4769
        %4972 = vmatprep.subr.bf16.mxu0 %v4766
        %4973 = vmatpush1.bf16.msra.mxu0 %v4765
        %4974 = vmatprep.subr.bf16.mxu0 %v4762
        %4975 = vmatpush1.bf16.msra.mxu0 %v4761
        %4976 = vmatprep.subr.bf16.mxu0 %v4758
        %4977 = vmatpush1.bf16.msra.mxu0 %v4757
        %4978 = vmatprep.subr.bf16.mxu0 %v4754
        %4979 = vmatpush1.bf16.msra.mxu0 %v4753
        %4980 = vmatprep.subr.bf16.mxu0 %v4750
        %4981 = vmatpush1.bf16.msra.mxu0 %v4749
        %4982 = vmatprep.subr.bf16.mxu0 %v4746
        %4983 = vmatpush1.bf16.msra.mxu0 %v4745
        %4984 = vmatprep.subr.bf16.mxu0 0
        %4985 = vmatpush2.bf16.msra.mxu0 0
        %4986 = vmatprep.subr.bf16.mxu0 0
        %4987 = vmatpush2.bf16.msra.mxu0 0
        %4988 = vmatprep.subr.bf16.mxu0 0
        %4989 = vmatpush2.bf16.msra.mxu0 0
        %4990 = vmatprep.subr.bf16.mxu0 0
        %4991 = vmatpush2.bf16.msra.mxu0 0
        %4992 = vmatprep.subr.bf16.mxu0 0
        %4993 = vmatpush2.bf16.msra.mxu0 0
        %4994 = vmatprep.subr.bf16.mxu0 0
        %4995 = vmatpush2.bf16.msra.mxu0 0
        %4996 = vmatprep.subr.bf16.mxu0 0
        %4997 = vmatpush2.bf16.msra.mxu0 0
        %4998 = vmatprep.subr.bf16.mxu0 0
        %4999 = vmatpush2.bf16.msra.mxu0 0
        %5000 = vmatprep.mubr.bf16.mxu0 0
        %5001 = vmatmul.mubr.bf16.gmra.mxu0 %v4601
        %v5002 = vpop.f32.mrf.mxu0
        %v5003 = vadd.f32 0.0, %v5002
        %v5004 = vpop.f32.mrf.mxu0
        %v5005 = vadd.f32 0.0, %v5004
        %v5006 = vpop.f32.mrf.mxu0
        %v5007 = vadd.f32 0.0, %v5006
        %v5008 = vpop.f32.mrf.mxu0
        %v5009 = vadd.f32 0.0, %v5008
        %5010 = vmatprep.mubr.bf16.mxu0 0
        %5011 = vmatmul.mubr.bf16.gmra.mxu0 %v4602
        %v5012 = vpop.f32.mrf.mxu0
        %v5013 = vadd.f32 0.0, %v5012
        %v5014 = vpop.f32.mrf.mxu0
        %v5015 = vadd.f32 0.0, %v5014
        %v5016 = vpop.f32.mrf.mxu0
        %v5017 = vadd.f32 0.0, %v5016
        %v5018 = vpop.f32.mrf.mxu0
        %v5019 = vadd.f32 0.0, %v5018
        %5020 = vmatprep.mubr.bf16.mxu0 0
        %5021 = vmatmul.mubr.bf16.gmra.mxu0 %v4603
        %v5022 = vpop.f32.mrf.mxu0
        %v5023 = vadd.f32 0.0, %v5022
        %v5024 = vpop.f32.mrf.mxu0
        %v5025 = vadd.f32 0.0, %v5024
        %v5026 = vpop.f32.mrf.mxu0
        %v5027 = vadd.f32 0.0, %v5026
        %v5028 = vpop.f32.mrf.mxu0
        %v5029 = vadd.f32 0.0, %v5028
        %5030 = vmatprep.mubr.bf16.mxu0 0
        %5031 = vmatmul.mubr.bf16.gmra.mxu0 %v4604
        %v5032 = vpop.f32.mrf.mxu0
        %v5033 = vadd.f32 0.0, %v5032
        %v5034 = vpop.f32.mrf.mxu0
        %v5035 = vadd.f32 0.0, %v5034
        %v5036 = vpop.f32.mrf.mxu0
        %v5037 = vadd.f32 0.0, %v5036
        %v5038 = vpop.f32.mrf.mxu0
        %v5039 = vadd.f32 0.0, %v5038
        %5040 = vmatprep.mubr.bf16.mxu0 0
        %5041 = vmatmul.mubr.bf16.gmra.mxu0 %v4605
        %v5042 = vpop.f32.mrf.mxu0
        %v5043 = vadd.f32 0.0, %v5042
        %v5044 = vpop.f32.mrf.mxu0
        %v5045 = vadd.f32 0.0, %v5044
        %v5046 = vpop.f32.mrf.mxu0
        %v5047 = vadd.f32 0.0, %v5046
        %v5048 = vpop.f32.mrf.mxu0
        %v5049 = vadd.f32 0.0, %v5048
        %5050 = vmatprep.mubr.bf16.mxu0 0
        %5051 = vmatmul.mubr.bf16.gmra.mxu0 %v4606
        %v5052 = vpop.f32.mrf.mxu0
        %v5053 = vadd.f32 0.0, %v5052
        %v5054 = vpop.f32.mrf.mxu0
        %v5055 = vadd.f32 0.0, %v5054
        %v5056 = vpop.f32.mrf.mxu0
        %v5057 = vadd.f32 0.0, %v5056
        %v5058 = vpop.f32.mrf.mxu0
        %v5059 = vadd.f32 0.0, %v5058
        %5060 = vmatprep.mubr.bf16.mxu0 0
        %5061 = vmatmul.mubr.bf16.gmra.mxu0 %v4607
        %v5062 = vpop.f32.mrf.mxu0
        %v5063 = vadd.f32 0.0, %v5062
        %v5064 = vpop.f32.mrf.mxu0
        %v5065 = vadd.f32 0.0, %v5064
        %v5066 = vpop.f32.mrf.mxu0
        %v5067 = vadd.f32 0.0, %v5066
        %v5068 = vpop.f32.mrf.mxu0
        %v5069 = vadd.f32 0.0, %v5068
        %5070 = vmatprep.mubr.bf16.mxu0 0
        %5071 = vmatmul.mubr.bf16.gmra.mxu0 %v4608
        %v5072 = vpop.f32.mrf.mxu0
        %v5073 = vadd.f32 0.0, %v5072
        %v5074 = vpop.f32.mrf.mxu0
        %v5075 = vadd.f32 0.0, %v5074
        %v5076 = vpop.f32.mrf.mxu0
        %v5077 = vadd.f32 0.0, %v5076
        %v5078 = vpop.f32.mrf.mxu0
        %v5079 = vadd.f32 0.0, %v5078
        %5080 = vmatprep.mubr.bf16.mxu0 0
        %5081 = vmatmul.mubr.bf16.gmra.mxu0 %v4609
        %v5082 = vpop.f32.mrf.mxu0
        %v5083 = vadd.f32 0.0, %v5082
        %v5084 = vpop.f32.mrf.mxu0
        %v5085 = vadd.f32 0.0, %v5084
        %v5086 = vpop.f32.mrf.mxu0
        %v5087 = vadd.f32 0.0, %v5086
        %v5088 = vpop.f32.mrf.mxu0
        %v5089 = vadd.f32 0.0, %v5088
        %5090 = vmatprep.mubr.bf16.mxu0 0
        %5091 = vmatmul.mubr.bf16.gmra.mxu0 %v4610
        %v5092 = vpop.f32.mrf.mxu0
        %v5093 = vadd.f32 0.0, %v5092
        %v5094 = vpop.f32.mrf.mxu0
        %v5095 = vadd.f32 0.0, %v5094
        %v5096 = vpop.f32.mrf.mxu0
        %v5097 = vadd.f32 0.0, %v5096
        %v5098 = vpop.f32.mrf.mxu0
        %v5099 = vadd.f32 0.0, %v5098
        %5100 = vmatprep.mubr.bf16.mxu0 0
        %5101 = vmatmul.mubr.bf16.gmra.mxu0 %v4611
        %v5102 = vpop.f32.mrf.mxu0
        %v5103 = vadd.f32 0.0, %v5102
        %v5104 = vpop.f32.mrf.mxu0
        %v5105 = vadd.f32 0.0, %v5104
        %v5106 = vpop.f32.mrf.mxu0
        %v5107 = vadd.f32 0.0, %v5106
        %v5108 = vpop.f32.mrf.mxu0
        %v5109 = vadd.f32 0.0, %v5108
        %5110 = vmatprep.mubr.bf16.mxu0 0
        %5111 = vmatmul.mubr.bf16.gmra.mxu0 %v4612
        %v5112 = vpop.f32.mrf.mxu0
        %v5113 = vadd.f32 0.0, %v5112
        %v5114 = vpop.f32.mrf.mxu0
        %v5115 = vadd.f32 0.0, %v5114
        %v5116 = vpop.f32.mrf.mxu0
        %v5117 = vadd.f32 0.0, %v5116
        %v5118 = vpop.f32.mrf.mxu0
        %v5119 = vadd.f32 0.0, %v5118
        %5120 = vmatprep.mubr.bf16.mxu0 0
        %5121 = vmatmul.mubr.bf16.gmra.mxu0 %v4613
        %v5122 = vpop.f32.mrf.mxu0
        %v5123 = vadd.f32 0.0, %v5122
        %v5124 = vpop.f32.mrf.mxu0
        %v5125 = vadd.f32 0.0, %v5124
        %v5126 = vpop.f32.mrf.mxu0
        %v5127 = vpop.f32.mrf.mxu0
        %5128 = vdwg.mxu0
        %5130 = vset.pattern.permute.xlu0 4
        %5131 = vperm.xlu0 %5130, %v4576
        %v5132 = vpop.permute.xlu0 %5131
        %5135 = vset.pattern.permute.xlu0 4
        %5136 = vperm.xlu0 %5135, %v4577
        %v5137 = vpop.permute.xlu0 %5136
        %5140 = vset.pattern.permute.xlu0 4
        %5141 = vperm.xlu0 %5140, %v4578
        %v5142 = vpop.permute.xlu0 %5141
        %5145 = vset.pattern.permute.xlu0 4
        %5146 = vperm.xlu0 %5145, %v4579
        %v5147 = vpop.permute.xlu0 %5146
        %5150 = vset.pattern.permute.xlu0 4
        %5151 = vperm.xlu0 %5150, %v4580
        %v5152 = vpop.permute.xlu0 %5151
        %5155 = vset.pattern.permute.xlu0 4
        %5156 = vperm.xlu0 %5155, %v4581
        %v5157 = vpop.permute.xlu0 %5156
        %5160 = vset.pattern.permute.xlu0 4
        %5161 = vperm.xlu0 %5160, %v4582
        %v5162 = vpop.permute.xlu0 %5161
        %5165 = vset.pattern.permute.xlu0 4
        %5166 = vperm.xlu0 %5165, %v4583
        %v5167 = vpop.permute.xlu0 %5166
        %5170 = vset.pattern.permute.xlu0 4
        %5171 = vperm.xlu0 %5170, %v4584
        %v5172 = vpop.permute.xlu0 %5171
        %5175 = vset.pattern.permute.xlu0 4
        %5176 = vperm.xlu0 %5175, %v4585
        %v5177 = vpop.permute.xlu0 %5176
        %5180 = vset.pattern.permute.xlu0 4
        %5181 = vperm.xlu0 %5180, %v4586
        %v5182 = vpop.permute.xlu0 %5181
        %5185 = vset.pattern.permute.xlu0 4
        %5186 = vperm.xlu0 %5185, %v4587
        %v5187 = vpop.permute.xlu0 %5186
        %5190 = vset.pattern.permute.xlu0 4
        %5191 = vperm.xlu0 %5190, %v4588
        %v5192 = vpop.permute.xlu0 %5191
        %5195 = vset.pattern.permute.xlu0 4
        %5196 = vperm.xlu0 %5195, %v4589
        %v5197 = vpop.permute.xlu0 %5196
        %5200 = vset.pattern.permute.xlu0 4
        %5201 = vperm.xlu0 %5200, %v4590
        %v5202 = vpop.permute.xlu0 %5201
        %5205 = vset.pattern.permute.xlu0 4
        %5206 = vperm.xlu0 %5205, %v4591
        %v5207 = vpop.permute.xlu0 %5206
        %5210 = vset.pattern.permute.xlu0 4
        %5211 = vperm.xlu0 %5210, %v4592
        %v5212 = vpop.permute.xlu0 %5211
        %5215 = vset.pattern.permute.xlu0 4
        %5216 = vperm.xlu0 %5215, %v4593
        %v5217 = vpop.permute.xlu0 %5216
        %5220 = vset.pattern.permute.xlu0 4
        %5221 = vperm.xlu0 %5220, %v4594
        %v5222 = vpop.permute.xlu0 %5221
        %5225 = vset.pattern.permute.xlu0 4
        %5226 = vperm.xlu0 %5225, %v4595
        %v5227 = vpop.permute.xlu0 %5226
        %5230 = vset.pattern.permute.xlu0 4
        %5231 = vperm.xlu0 %5230, %v4596
        %v5232 = vpop.permute.xlu0 %5231
        %5235 = vset.pattern.permute.xlu0 4
        %5236 = vperm.xlu0 %5235, %v4597
        %v5237 = vpop.permute.xlu0 %5236
        %5240 = vset.pattern.permute.xlu0 4
        %5241 = vperm.xlu0 %5240, %v4598
        %v5242 = vpop.permute.xlu0 %5241
        %5245 = vset.pattern.permute.xlu0 4
        %5246 = vperm.xlu0 %5245, %v4599
        %v5247 = vpop.permute.xlu0 %5246
        %5250 = vset.pattern.permute.xlu0 4
        %5251 = vperm.xlu0 %5250, %v4600
        %v5252 = vpop.permute.xlu0 %5251
        %v5254 = vmul.f32 %v5132, %v4842
        %v5255 = vmul.f32 %v5137, %v4846
        %v5256 = vmul.f32 %v5142, %v4852
        %v5257 = vmul.f32 %v5147, %v4856
        %v5258 = vmul.f32 %v5152, %v4862
        %v5259 = vmul.f32 %v5157, %v4866
        %v5260 = vmul.f32 %v5162, %v4872
        %v5261 = vmul.f32 %v5167, %v4876
        %v5262 = vmul.f32 %v5172, %v4882
        %v5263 = vmul.f32 %v5177, %v4886
        %v5264 = vmul.f32 %v5182, %v4892
        %v5265 = vmul.f32 %v5187, %v4896
        %v5266 = vmul.f32 %v5192, %v4902
        %v5267 = vmul.f32 %v5197, %v4906
        %v5268 = vmul.f32 %v5202, %v4912
        %v5269 = vmul.f32 %v5207, %v4916
        %v5270 = vmul.f32 %v5212, %v4922
        %v5271 = vmul.f32 %v5217, %v4926
        %v5272 = vmul.f32 %v5222, %v4932
        %v5273 = vmul.f32 %v5227, %v4936
        %v5274 = vmul.f32 %v5232, %v4942
        %v5275 = vmul.f32 %v5237, %v4946
        %v5276 = vmul.f32 %v5242, %v4952
        %v5277 = vmul.f32 %v5247, %v4956
        %v5278 = vmul.f32 %v5252, %v4962
        %5279 = vset.pattern.permute.xlu0 5
        %5280 = vperm.xlu0 %5279, %v4576
        %v5281 = vpop.permute.xlu0 %5280
        %5283 = vset.pattern.permute.xlu0 5
        %5284 = vperm.xlu0 %5283, %v4577
        %v5285 = vpop.permute.xlu0 %5284
        %5287 = vset.pattern.permute.xlu0 5
        %5288 = vperm.xlu0 %5287, %v4578
        %v5289 = vpop.permute.xlu0 %5288
        %5291 = vset.pattern.permute.xlu0 5
        %5292 = vperm.xlu0 %5291, %v4579
        %v5293 = vpop.permute.xlu0 %5292
        %5295 = vset.pattern.permute.xlu0 5
        %5296 = vperm.xlu0 %5295, %v4580
        %v5297 = vpop.permute.xlu0 %5296
        %5299 = vset.pattern.permute.xlu0 5
        %5300 = vperm.xlu0 %5299, %v4581
        %v5301 = vpop.permute.xlu0 %5300
        %5303 = vset.pattern.permute.xlu0 5
        %5304 = vperm.xlu0 %5303, %v4582
        %v5305 = vpop.permute.xlu0 %5304
        %5307 = vset.pattern.permute.xlu0 5
        %5308 = vperm.xlu0 %5307, %v4583
        %v5309 = vpop.permute.xlu0 %5308
        %5311 = vset.pattern.permute.xlu0 5
        %5312 = vperm.xlu0 %5311, %v4584
        %v5313 = vpop.permute.xlu0 %5312
        %5315 = vset.pattern.permute.xlu0 5
        %5316 = vperm.xlu0 %5315, %v4585
        %v5317 = vpop.permute.xlu0 %5316
        %5319 = vset.pattern.permute.xlu0 5
        %5320 = vperm.xlu0 %5319, %v4586
        %v5321 = vpop.permute.xlu0 %5320
        %5323 = vset.pattern.permute.xlu0 5
        %5324 = vperm.xlu0 %5323, %v4587
        %v5325 = vpop.permute.xlu0 %5324
        %5327 = vset.pattern.permute.xlu0 5
        %5328 = vperm.xlu0 %5327, %v4588
        %v5329 = vpop.permute.xlu0 %5328
        %5331 = vset.pattern.permute.xlu0 5
        %5332 = vperm.xlu0 %5331, %v4589
        %v5333 = vpop.permute.xlu0 %5332
        %5335 = vset.pattern.permute.xlu0 5
        %5336 = vperm.xlu0 %5335, %v4590
        %v5337 = vpop.permute.xlu0 %5336
        %5339 = vset.pattern.permute.xlu0 5
        %5340 = vperm.xlu0 %5339, %v4591
        %v5341 = vpop.permute.xlu0 %5340
        %5343 = vset.pattern.permute.xlu0 5
        %5344 = vperm.xlu0 %5343, %v4592
        %v5345 = vpop.permute.xlu0 %5344
        %5347 = vset.pattern.permute.xlu0 5
        %5348 = vperm.xlu0 %5347, %v4593
        %v5349 = vpop.permute.xlu0 %5348
        %5351 = vset.pattern.permute.xlu0 5
        %5352 = vperm.xlu0 %5351, %v4594
        %v5353 = vpop.permute.xlu0 %5352
        %5355 = vset.pattern.permute.xlu0 5
        %5356 = vperm.xlu0 %5355, %v4595
        %v5357 = vpop.permute.xlu0 %5356
        %5359 = vset.pattern.permute.xlu0 5
        %5360 = vperm.xlu0 %5359, %v4596
        %v5361 = vpop.permute.xlu0 %5360
        %5363 = vset.pattern.permute.xlu0 5
        %5364 = vperm.xlu0 %5363, %v4597
        %v5365 = vpop.permute.xlu0 %5364
        %5367 = vset.pattern.permute.xlu0 5
        %5368 = vperm.xlu0 %5367, %v4598
        %v5369 = vpop.permute.xlu0 %5368
        %5371 = vset.pattern.permute.xlu0 5
        %5372 = vperm.xlu0 %5371, %v4599
        %v5373 = vpop.permute.xlu0 %5372
        %5375 = vset.pattern.permute.xlu0 5
        %5376 = vperm.xlu0 %5375, %v4600
        %v5377 = vpop.permute.xlu0 %5376
        %v5379 = vmul.f32 %v5281, %v4844
        %v5380 = vmul.f32 %v5285, %v4848
        %v5381 = vmul.f32 %v5289, %v4854
        %v5382 = vmul.f32 %v5293, %v4858
        %v5383 = vmul.f32 %v5297, %v4864
        %v5384 = vmul.f32 %v5301, %v4868
        %v5385 = vmul.f32 %v5305, %v4874
        %v5386 = vmul.f32 %v5309, %v4878
        %v5387 = vmul.f32 %v5313, %v4884
        %v5388 = vmul.f32 %v5317, %v4888
        %v5389 = vmul.f32 %v5321, %v4894
        %v5390 = vmul.f32 %v5325, %v4898
        %v5391 = vmul.f32 %v5329, %v4904
        %v5392 = vmul.f32 %v5333, %v4908
        %v5393 = vmul.f32 %v5337, %v4914
        %v5394 = vmul.f32 %v5341, %v4918
        %v5395 = vmul.f32 %v5345, %v4924
        %v5396 = vmul.f32 %v5349, %v4928
        %v5397 = vmul.f32 %v5353, %v4934
        %v5398 = vmul.f32 %v5357, %v4938
        %v5399 = vmul.f32 %v5361, %v4944
        %v5400 = vmul.f32 %v5365, %v4948
        %v5401 = vmul.f32 %v5369, %v4954
        %v5402 = vmul.f32 %v5373, %v4958
        %v5403 = vmul.f32 %v5377, %v4964
        %v5404 = vadd.f32 %v5254, %v5379
        %v5405 = vadd.f32 %v5255, %v5380
        %v5406 = vadd.f32 %v5256, %v5381
        %v5407 = vadd.f32 %v5257, %v5382
        %v5408 = vadd.f32 %v5258, %v5383
        %v5409 = vadd.f32 %v5259, %v5384
        %v5410 = vadd.f32 %v5260, %v5385
        %v5411 = vadd.f32 %v5261, %v5386
        %v5412 = vadd.f32 %v5262, %v5387
        %v5413 = vadd.f32 %v5263, %v5388
        %v5414 = vadd.f32 %v5264, %v5389
        %v5415 = vadd.f32 %v5265, %v5390
        %v5416 = vadd.f32 %v5266, %v5391
        %v5417 = vadd.f32 %v5267, %v5392
        %v5418 = vadd.f32 %v5268, %v5393
        %v5419 = vadd.f32 %v5269, %v5394
        %v5420 = vadd.f32 %v5270, %v5395
        %v5421 = vadd.f32 %v5271, %v5396
        %v5422 = vadd.f32 %v5272, %v5397
        %v5423 = vadd.f32 %v5273, %v5398
        %v5424 = vadd.f32 %v5274, %v5399
        %v5425 = vadd.f32 %v5275, %v5400
        %v5426 = vadd.f32 %v5276, %v5401
        %v5427 = vadd.f32 %v5277, %v5402
        %v5428 = vadd.f32 %v5278, %v5403
        %5429 = vset.pattern.permute.xlu0 6
        %5430 = vperm.xlu0 %5429, %v4576
        %v5431 = vpop.permute.xlu0 %5430
        %5433 = vset.pattern.permute.xlu0 6
        %5434 = vperm.xlu0 %5433, %v4577
        %v5435 = vpop.permute.xlu0 %5434
        %5437 = vset.pattern.permute.xlu0 6
        %5438 = vperm.xlu0 %5437, %v4578
        %v5439 = vpop.permute.xlu0 %5438
        %5441 = vset.pattern.permute.xlu0 6
        %5442 = vperm.xlu0 %5441, %v4579
        %v5443 = vpop.permute.xlu0 %5442
        %5445 = vset.pattern.permute.xlu0 6
        %5446 = vperm.xlu0 %5445, %v4580
        %v5447 = vpop.permute.xlu0 %5446
        %5449 = vset.pattern.permute.xlu0 6
        %5450 = vperm.xlu0 %5449, %v4581
        %v5451 = vpop.permute.xlu0 %5450
        %5453 = vset.pattern.permute.xlu0 6
        %5454 = vperm.xlu0 %5453, %v4582
        %v5455 = vpop.permute.xlu0 %5454
        %5457 = vset.pattern.permute.xlu0 6
        %5458 = vperm.xlu0 %5457, %v4583
        %v5459 = vpop.permute.xlu0 %5458
        %5461 = vset.pattern.permute.xlu0 6
        %5462 = vperm.xlu0 %5461, %v4584
        %v5463 = vpop.permute.xlu0 %5462
        %5465 = vset.pattern.permute.xlu0 6
        %5466 = vperm.xlu0 %5465, %v4585
        %v5467 = vpop.permute.xlu0 %5466
        %5469 = vset.pattern.permute.xlu0 6
        %5470 = vperm.xlu0 %5469, %v4586
        %v5471 = vpop.permute.xlu0 %5470
        %5473 = vset.pattern.permute.xlu0 6
        %5474 = vperm.xlu0 %5473, %v4587
        %v5475 = vpop.permute.xlu0 %5474
        %5477 = vset.pattern.permute.xlu0 6
        %5478 = vperm.xlu0 %5477, %v4588
        %v5479 = vpop.permute.xlu0 %5478
        %5481 = vset.pattern.permute.xlu0 6
        %5482 = vperm.xlu0 %5481, %v4589
        %v5483 = vpop.permute.xlu0 %5482
        %5485 = vset.pattern.permute.xlu0 6
        %5486 = vperm.xlu0 %5485, %v4590
        %v5487 = vpop.permute.xlu0 %5486
        %5489 = vset.pattern.permute.xlu0 6
        %5490 = vperm.xlu0 %5489, %v4591
        %v5491 = vpop.permute.xlu0 %5490
        %5493 = vset.pattern.permute.xlu0 6
        %5494 = vperm.xlu0 %5493, %v4592
        %v5495 = vpop.permute.xlu0 %5494
        %5497 = vset.pattern.permute.xlu0 6
        %5498 = vperm.xlu0 %5497, %v4593
        %v5499 = vpop.permute.xlu0 %5498
        %5501 = vset.pattern.permute.xlu0 6
        %5502 = vperm.xlu0 %5501, %v4594
        %v5503 = vpop.permute.xlu0 %5502
        %5505 = vset.pattern.permute.xlu0 6
        %5506 = vperm.xlu0 %5505, %v4595
        %v5507 = vpop.permute.xlu0 %5506
        %5509 = vset.pattern.permute.xlu0 6
        %5510 = vperm.xlu0 %5509, %v4596
        %v5511 = vpop.permute.xlu0 %5510
        %5513 = vset.pattern.permute.xlu0 6
        %5514 = vperm.xlu0 %5513, %v4597
        %v5515 = vpop.permute.xlu0 %5514
        %5517 = vset.pattern.permute.xlu0 6
        %5518 = vperm.xlu0 %5517, %v4598
        %v5519 = vpop.permute.xlu0 %5518
        %5521 = vset.pattern.permute.xlu0 6
        %5522 = vperm.xlu0 %5521, %v4599
        %v5523 = vpop.permute.xlu0 %5522
        %5525 = vset.pattern.permute.xlu0 6
        %5526 = vperm.xlu0 %5525, %v4600
        %v5527 = vpop.permute.xlu0 %5526
        %v5529 = vmul.f32 %v5431, %v5003
        %v5530 = vmul.f32 %v5435, %v5007
        %v5531 = vmul.f32 %v5439, %v5013
        %v5532 = vmul.f32 %v5443, %v5017
        %v5533 = vmul.f32 %v5447, %v5023
        %v5534 = vmul.f32 %v5451, %v5027
        %v5535 = vmul.f32 %v5455, %v5033
        %v5536 = vmul.f32 %v5459, %v5037
        %v5537 = vmul.f32 %v5463, %v5043
        %v5538 = vmul.f32 %v5467, %v5047
        %v5539 = vmul.f32 %v5471, %v5053
        %v5540 = vmul.f32 %v5475, %v5057
        %v5541 = vmul.f32 %v5479, %v5063
        %v5542 = vmul.f32 %v5483, %v5067
        %v5543 = vmul.f32 %v5487, %v5073
        %v5544 = vmul.f32 %v5491, %v5077
        %v5545 = vmul.f32 %v5495, %v5083
        %v5546 = vmul.f32 %v5499, %v5087
        %v5547 = vmul.f32 %v5503, %v5093
        %v5548 = vmul.f32 %v5507, %v5097
        %v5549 = vmul.f32 %v5511, %v5103
        %v5550 = vmul.f32 %v5515, %v5107
        %v5551 = vmul.f32 %v5519, %v5113
        %v5552 = vmul.f32 %v5523, %v5117
        %v5553 = vmul.f32 %v5527, %v5123
        %v5554 = vadd.f32 %v5404, %v5529
        %v5555 = vadd.f32 %v5405, %v5530
        %v5556 = vadd.f32 %v5406, %v5531
        %v5557 = vadd.f32 %v5407, %v5532
        %v5558 = vadd.f32 %v5408, %v5533
        %v5559 = vadd.f32 %v5409, %v5534
        %v5560 = vadd.f32 %v5410, %v5535
        %v5561 = vadd.f32 %v5411, %v5536
        %v5562 = vadd.f32 %v5412, %v5537
        %v5563 = vadd.f32 %v5413, %v5538
        %v5564 = vadd.f32 %v5414, %v5539
        %v5565 = vadd.f32 %v5415, %v5540
        %v5566 = vadd.f32 %v5416, %v5541
        %v5567 = vadd.f32 %v5417, %v5542
        %v5568 = vadd.f32 %v5418, %v5543
        %v5569 = vadd.f32 %v5419, %v5544
        %v5570 = vadd.f32 %v5420, %v5545
        %v5571 = vadd.f32 %v5421, %v5546
        %v5572 = vadd.f32 %v5422, %v5547
        %v5573 = vadd.f32 %v5423, %v5548
        %v5574 = vadd.f32 %v5424, %v5549
        %v5575 = vadd.f32 %v5425, %v5550
        %v5576 = vadd.f32 %v5426, %v5551
        %v5577 = vadd.f32 %v5427, %v5552
        %v5578 = vadd.f32 %v5428, %v5553
        %5579 = vset.pattern.permute.xlu0 7
        %5580 = vperm.xlu0 %5579, %v4576
        %v5581 = vpop.permute.xlu0 %5580
        %5583 = vset.pattern.permute.xlu0 7
        %5584 = vperm.xlu0 %5583, %v4577
        %v5585 = vpop.permute.xlu0 %5584
        %5587 = vset.pattern.permute.xlu0 7
        %5588 = vperm.xlu0 %5587, %v4578
        %v5589 = vpop.permute.xlu0 %5588
        %5591 = vset.pattern.permute.xlu0 7
        %5592 = vperm.xlu0 %5591, %v4579
        %v5593 = vpop.permute.xlu0 %5592
        %5595 = vset.pattern.permute.xlu0 7
        %5596 = vperm.xlu0 %5595, %v4580
        %v5597 = vpop.permute.xlu0 %5596
        %5599 = vset.pattern.permute.xlu0 7
        %5600 = vperm.xlu0 %5599, %v4581
        %v5601 = vpop.permute.xlu0 %5600
        %5603 = vset.pattern.permute.xlu0 7
        %5604 = vperm.xlu0 %5603, %v4582
        %v5605 = vpop.permute.xlu0 %5604
        %5607 = vset.pattern.permute.xlu0 7
        %5608 = vperm.xlu0 %5607, %v4583
        %v5609 = vpop.permute.xlu0 %5608
        %5611 = vset.pattern.permute.xlu0 7
        %5612 = vperm.xlu0 %5611, %v4584
        %v5613 = vpop.permute.xlu0 %5612
        %5615 = vset.pattern.permute.xlu0 7
        %5616 = vperm.xlu0 %5615, %v4585
        %v5617 = vpop.permute.xlu0 %5616
        %5619 = vset.pattern.permute.xlu0 7
        %5620 = vperm.xlu0 %5619, %v4586
        %v5621 = vpop.permute.xlu0 %5620
        %5623 = vset.pattern.permute.xlu0 7
        %5624 = vperm.xlu0 %5623, %v4587
        %v5625 = vpop.permute.xlu0 %5624
        %5627 = vset.pattern.permute.xlu0 7
        %5628 = vperm.xlu0 %5627, %v4588
        %v5629 = vpop.permute.xlu0 %5628
        %5631 = vset.pattern.permute.xlu0 7
        %5632 = vperm.xlu0 %5631, %v4589
        %v5633 = vpop.permute.xlu0 %5632
        %5635 = vset.pattern.permute.xlu0 7
        %5636 = vperm.xlu0 %5635, %v4590
        %v5637 = vpop.permute.xlu0 %5636
        %5639 = vset.pattern.permute.xlu0 7
        %5640 = vperm.xlu0 %5639, %v4591
        %v5641 = vpop.permute.xlu0 %5640
        %5643 = vset.pattern.permute.xlu0 7
        %5644 = vperm.xlu0 %5643, %v4592
        %v5645 = vpop.permute.xlu0 %5644
        %5647 = vset.pattern.permute.xlu0 7
        %5648 = vperm.xlu0 %5647, %v4593
        %v5649 = vpop.permute.xlu0 %5648
        %5651 = vset.pattern.permute.xlu0 7
        %5652 = vperm.xlu0 %5651, %v4594
        %v5653 = vpop.permute.xlu0 %5652
        %5655 = vset.pattern.permute.xlu0 7
        %5656 = vperm.xlu0 %5655, %v4595
        %v5657 = vpop.permute.xlu0 %5656
        %5659 = vset.pattern.permute.xlu0 7
        %5660 = vperm.xlu0 %5659, %v4596
        %v5661 = vpop.permute.xlu0 %5660
        %5663 = vset.pattern.permute.xlu0 7
        %5664 = vperm.xlu0 %5663, %v4597
        %v5665 = vpop.permute.xlu0 %5664
        %5667 = vset.pattern.permute.xlu0 7
        %5668 = vperm.xlu0 %5667, %v4598
        %v5669 = vpop.permute.xlu0 %5668
        %5671 = vset.pattern.permute.xlu0 7
        %5672 = vperm.xlu0 %5671, %v4599
        %v5673 = vpop.permute.xlu0 %5672
        %5675 = vset.pattern.permute.xlu0 7
        %5676 = vperm.xlu0 %5675, %v4600
        %v5677 = vpop.permute.xlu0 %5676
        %v5679 = vmul.f32 %v5581, %v5005
        %v5680 = vmul.f32 %v5585, %v5009
        %v5681 = vmul.f32 %v5589, %v5015
        %v5682 = vmul.f32 %v5593, %v5019
        %v5683 = vmul.f32 %v5597, %v5025
        %v5684 = vmul.f32 %v5601, %v5029
        %v5685 = vmul.f32 %v5605, %v5035
        %v5686 = vmul.f32 %v5609, %v5039
        %v5687 = vmul.f32 %v5613, %v5045
        %v5688 = vmul.f32 %v5617, %v5049
        %v5689 = vmul.f32 %v5621, %v5055
        %v5690 = vmul.f32 %v5625, %v5059
        %v5691 = vmul.f32 %v5629, %v5065
        %v5692 = vmul.f32 %v5633, %v5069
        %v5693 = vmul.f32 %v5637, %v5075
        %v5694 = vmul.f32 %v5641, %v5079
        %v5695 = vmul.f32 %v5645, %v5085
        %v5696 = vmul.f32 %v5649, %v5089
        %v5697 = vmul.f32 %v5653, %v5095
        %v5698 = vmul.f32 %v5657, %v5099
        %v5699 = vmul.f32 %v5661, %v5105
        %v5700 = vmul.f32 %v5665, %v5109
        %v5701 = vmul.f32 %v5669, %v5115
        %v5702 = vmul.f32 %v5673, %v5119
        %v5703 = vmul.f32 %v5677, %v5125
        %v5704 = vadd.f32 %v5554, %v5679
        %v5705 = vadd.f32 %v5555, %v5680
        %v5706 = vadd.f32 %v5556, %v5681
        %v5707 = vadd.f32 %v5557, %v5682
        %v5708 = vadd.f32 %v5558, %v5683
        %v5709 = vadd.f32 %v5559, %v5684
        %v5710 = vadd.f32 %v5560, %v5685
        %v5711 = vadd.f32 %v5561, %v5686
        %v5712 = vadd.f32 %v5562, %v5687
        %v5713 = vadd.f32 %v5563, %v5688
        %v5714 = vadd.f32 %v5564, %v5689
        %v5715 = vadd.f32 %v5565, %v5690
        %v5716 = vadd.f32 %v5566, %v5691
        %v5717 = vadd.f32 %v5567, %v5692
        %v5718 = vadd.f32 %v5568, %v5693
        %v5719 = vadd.f32 %v5569, %v5694
        %v5720 = vadd.f32 %v5570, %v5695
        %v5721 = vadd.f32 %v5571, %v5696
        %v5722 = vadd.f32 %v5572, %v5697
        %v5723 = vadd.f32 %v5573, %v5698
        %v5724 = vadd.f32 %v5574, %v5699
        %v5725 = vadd.f32 %v5575, %v5700
        %v5726 = vadd.f32 %v5576, %v5701
        %v5727 = vadd.f32 %v5577, %v5702
        %v5728 = vadd.f32 %v5578, %v5703
        %v5729 = vld [vmem:[%s2 + $0x2] sm:$0x1]
        %v5730 = vunpack.c.l.bf16 %v5729
        %v5731 = vlaneseq
        %v5732 = vshrl.u32 %v5731, 7
        %v5733 = vsub.s32 0, %v5732
        %v5734 = vrot.slane %v5730, %v5733
        %v5735 = vadd.f32 %v770, %v5734
        %v5736 = vadd.f32 %v774, %v5734
        %v5737 = vadd.f32 %v780, %v5734
        %v5738 = vadd.f32 %v784, %v5734
        %v5739 = vadd.f32 %v790, %v5734
        %v5740 = vadd.f32 %v794, %v5734
        %v5741 = vadd.f32 %v800, %v5734
        %v5742 = vadd.f32 %v804, %v5734
        %v5743 = vadd.f32 %v810, %v5734
        %v5744 = vadd.f32 %v814, %v5734
        %v5745 = vadd.f32 %v820, %v5734
        %v5746 = vadd.f32 %v824, %v5734
        %v5747 = vadd.f32 %v830, %v5734
        %v5748 = vadd.f32 %v834, %v5734
        %v5749 = vadd.f32 %v840, %v5734
        %v5750 = vadd.f32 %v844, %v5734
        %v5751 = vadd.f32 %v850, %v5734
        %v5752 = vadd.f32 %v854, %v5734
        %v5753 = vadd.f32 %v860, %v5734
        %v5754 = vadd.f32 %v864, %v5734
        %v5755 = vadd.f32 %v870, %v5734
        %v5756 = vadd.f32 %v874, %v5734
        %v5757 = vadd.f32 %v880, %v5734
        %v5758 = vadd.f32 %v884, %v5734
        %v5759 = vadd.f32 %v890, %v5734
        %v5760 = vadd.f32 %v5735, %v5704
        %v5761 = vadd.f32 %v5736, %v5705
        %v5762 = vadd.f32 %v5737, %v5706
        %v5763 = vadd.f32 %v5738, %v5707
        %v5764 = vadd.f32 %v5739, %v5708
        %v5765 = vadd.f32 %v5740, %v5709
        %v5766 = vadd.f32 %v5741, %v5710
        %v5767 = vadd.f32 %v5742, %v5711
        %v5768 = vadd.f32 %v5743, %v5712
        %v5769 = vadd.f32 %v5744, %v5713
        %v5770 = vadd.f32 %v5745, %v5714
        %v5771 = vadd.f32 %v5746, %v5715
        %v5772 = vadd.f32 %v5747, %v5716
        %v5773 = vadd.f32 %v5748, %v5717
        %v5774 = vadd.f32 %v5749, %v5718
        %v5775 = vadd.f32 %v5750, %v5719
        %v5776 = vadd.f32 %v5751, %v5720
        %v5777 = vadd.f32 %v5752, %v5721
        %v5778 = vadd.f32 %v5753, %v5722
        %v5779 = vadd.f32 %v5754, %v5723
        %v5780 = vadd.f32 %v5755, %v5724
        %v5781 = vadd.f32 %v5756, %v5725
        %v5782 = vadd.f32 %v5757, %v5726
        %v5783 = vadd.f32 %v5758, %v5727
        %v5784 = vadd.f32 %v5759, %v5728
        %5785 = vst [vmem:[%s244 + $0x10] sm:$0xff] %v5760
        %5786 = vst [vmem:[%s244 + $0x28] sm:$0xff] %v5761
        %5787 = vst [vmem:[%s244 + $0x40] sm:$0xff] %v5762
        %5788 = vst [vmem:[%s244 + $0x58] sm:$0xff] %v5763
        %5789 = vst [vmem:[%s244 + $0x70] sm:$0xff] %v5764
        %5790 = vst [vmem:[%s244 + $0x88] sm:$0xff] %v5765
        %5791 = vst [vmem:[%s244 + $0xa0] sm:$0xff] %v5766
        %5792 = vst [vmem:[%s244 + $0xb8] sm:$0xff] %v5767
        %5793 = vst [vmem:[%s244 + $0xd0] sm:$0xff] %v5768
        %5794 = vst [vmem:[%s244 + $0xe8] sm:$0xff] %v5769
        %5795 = vst [vmem:[%s244 + $0x100] sm:$0xff] %v5770
        %5796 = vst [vmem:[%s244 + $0x118] sm:$0xff] %v5771
        %5797 = vst [vmem:[%s244 + $0x130] sm:$0xff] %v5772
        %5798 = vst [vmem:[%s244 + $0x148] sm:$0xff] %v5773
        %5799 = vst [vmem:[%s244 + $0x160] sm:$0xff] %v5774
        %5800 = vst [vmem:[%s244 + $0x178] sm:$0xff] %v5775
        %5801 = vst [vmem:[%s244 + $0x190] sm:$0xff] %v5776
        %5802 = vst [vmem:[%s244 + $0x1a8] sm:$0xff] %v5777
        %5803 = vst [vmem:[%s244 + $0x1c0] sm:$0xff] %v5778
        %5804 = vst [vmem:[%s244 + $0x1d8] sm:$0xff] %v5779
        %5805 = vst [vmem:[%s244 + $0x1f0] sm:$0xff] %v5780
        %5806 = vst [vmem:[%s244 + $0x208] sm:$0xff] %v5781
        %5807 = vst [vmem:[%s244 + $0x220] sm:$0xff] %v5782
        %5808 = vst [vmem:[%s244 + $0x238] sm:$0xff] %v5783
        %5809 = vst [vmem:[%s244 + $0x250] sm:$0xff] %v5784
        %s5810 = sand.u32 %s119, 1
        %s5811 = scalar_lea.sflag [#allocation4], %s5810
        %s5812 = sand.u32 %s119, 1
        %s5813 = smul.addr %s5812, 600
        %s5814 = scalar_lea.vmem [#allocation8], %s5813
        // Predicated region
        $region49: #{tpu_custom_call.1} parent=35 // pred_check
          %p5815 = pneg %p129
        $region50: #{tpu_custom_call.1} parent=35 // pred_check_branch
          %5817 = sbr.rel (%p5815) target = $region52
        $region51: #{tpu_custom_call.1} parent=35 // pred_region
          %s5818 = smul.u32 25, %s22
          %s5820 = ssub.s32 9600, 9600
          %5821 = vsyncadd %s5811, %s5820
          %s5822 = smul.addr %s5818, 3
          %s5823 = smul.addr %s5822, 128
          %s5824 = scalar_lea.hbm %s4, %s5823
          %s5825 = sshll.u32 %s5814, 4
          %s5826 = int_to_ptr.vmem [resolvable:$true] %s5825
          %5831 = dma.vmem_to_hbm [thread:$0]  %s5826, 9600, %s5824, %s5811, 384, 384, 24
        $region52: #{tpu_custom_call.1} parent=35 // pred_fallthru
          _
      $region36: #{tpu_custom_call.1} parent=5 // pred_fallthru
        _
      %p5832 = scmp.le.s32.totalorder 2, %s17
      // Predicated region
      $region53: #{tpu_custom_call.1} parent=5 // pred_check
        %p5833 = pneg %p5832
      $region54: #{tpu_custom_call.1} parent=5 // pred_check_branch
        %5835 = sbr.rel (%p5833) target = $region56
      $region55: #{tpu_custom_call.1} parent=5 // pred_region
        %s5836 = ssub.s32 %s17, 2
        // Predicated region
        $region57: #{tpu_custom_call.1} parent=55 // pred_check
          %p5837 = pneg %p135
        $region58: #{tpu_custom_call.1} parent=55 // pred_check_branch
          %5839 = sbr.rel (%p5837) target = $region60
        $region59: #{tpu_custom_call.1} parent=55 // pred_region
          %s5840 = sand.u32 %s120, 1
          %s5841 = scalar_lea.sflag [#allocation4], %s5840
          %s5842 = sand.u32 %s120, 1
          %s5843 = smul.addr %s5842, 600
          %s5844 = scalar_lea.vmem [#allocation8], %s5843
          %5845 = dma.done %s5841, 9600
        $region60: #{tpu_custom_call.1} parent=55 // pred_fallthru
          _
      $region56: #{tpu_custom_call.1} parent=5 // pred_fallthru
        _
    $region6: #{tpu_custom_call.1} parent=1 // loop_footer
      %s21 = sadd.s32 1, %s17
    $region7: #{tpu_custom_call.1} parent=1 // loop_footer_branch
      %16 = sbr.rel target = $region3
    $region8: #{tpu_custom_call.1} parent=1 // loop_exit
      _
    %5846 = vsyncpa [#allocation3], 1
    %s5847 = scalar_lea.sflag [#allocation3], 1
    %5848 = vsyncpa %s5847, 1
    %5849 = vsyncpa [#allocation6], 1
    %5850 = vsyncpa [#allocation4], 1
    %s5851 = scalar_lea.sflag [#allocation4], 1
    %5852 = vsyncpa %s5851, 1

</llo_original>
